<compile_context>
chip_gen: v7x
topology: tpu7x:2x2x1
jax: 0.10.0
libtpu: 0.0.40
codegen_flags: <defaults>
</compile_context>

<pallas_src>
import numpy as np
import jax
import jax.numpy as jnp
from jax.experimental import pallas as pl
from jax.experimental.pallas import tpu as pltpu


# ----------------------------------------------------------------------------
# Wrapper-side constant / weight preprocessing (numpy + one einsum per conv).
# ----------------------------------------------------------------------------
def _nearest_exact_index(out_size, in_size):
    """torch 'nearest-exact' source index: floor((i + 0.5) * in / out)."""
    src = np.floor((np.arange(out_size) + 0.5) * (in_size / out_size)).astype(np.int64)
    return np.clip(src, 0, in_size - 1)


def _band_matrices(w_hwio, out_width, in_width=None):
    """Banded conv matrices stacked over the kh tap.

    Returns M (3, Win*Cin, out_width*Cout) such that for the row-matrix layout
    Z[b*H+h, w*Cin+ci] the 'same' 3x3 conv is
        out_rows = sum_dh shift_dh(Z) @ M[dh] (+ bias).
    When `in_width` is given, the nearest-exact column upsample from in_width
    to out_width is folded into the band (operand columns are source columns).
    """
    kh, kw, cin, cout = w_hwio.shape
    assert kh == 3 and kw == 3
    wi = np.arange(out_width)[:, None, None]
    wo = np.arange(out_width)[None, :, None]
    dw = np.arange(3)[None, None, :]
    T = (wi - wo + 1 == dw).astype(np.float32)            # (Wout, Wout, 3)
    if in_width is not None and in_width != out_width:
        src = _nearest_exact_index(out_width, in_width)    # (Wout,)
        U = (np.arange(in_width)[:, None] == src[None, :]).astype(np.float32)
        T = np.einsum('pu,uok->pok', U, T)                 # (Win, Wout, 3)
    win = T.shape[0]
    m = jnp.einsum('iok,dkab->diaob', jnp.asarray(T), w_hwio)
    return m.reshape(3, win * cin, out_width * cout)


def _row_shift_mats(batch, height):
    """P[dh] (B*H, B*H): 0/1 matrix; row h reads in-image row h+dh-1 (else 0)."""
    r = batch * height
    p = np.zeros((3, r, r), np.float32)
    for dh in range(3):
        for b in range(batch):
            for h in range(height):
                hs = h + dh - 1
                if 0 <= hs < height:
                    p[dh, b * height + h, b * height + hs] = 1.0
    return jnp.asarray(p)


def _up_row_gather_mats(batch, out_height, in_height):
    """D[dh] (B*Hout, B*Hin): row h reads the nearest-exact SOURCE row of
    upsampled row h+dh-1 (zero outside the image) -- folds row-upsample+shift."""
    src = _nearest_exact_index(out_height, in_height)
    d = np.zeros((3, batch * out_height, batch * in_height), np.float32)
    for dh in range(3):
        for b in range(batch):
            for h in range(out_height):
                hu = h + dh - 1
                if 0 <= hu < out_height:
                    d[dh, b * out_height + h, b * in_height + src[hu]] = 1.0
    return jnp.asarray(d)


# ----------------------------------------------------------------------------
# Fused MultiScaleDecoder forward: one pallas_call, single grid step.
# ----------------------------------------------------------------------------
def multiscale_decoder_forward(params, x, old):
    """params: list over decoder stages (construction order); each stage a list
               of (w, b) with w HWIO (3, 3, Cin, Cout) and b (Cout,).
       x     : (B, H, W, C) bottleneck features, NHWC float32.
       old   : skip tensors ordered like the PyTorch `old` list (consumed from
               the end: old[-1] feeds the first executed decoder stage)."""
    B, cur_h, cur_w, cur_c = x.shape
    n_stages = len(params)
    assert len(old) == n_stages
    skips = list(old)[::-1]                         # consumption order

    # ---- static plan: row-matrix activations + banded weights --------------
    act_ops = [x.reshape(B * cur_h, cur_w * cur_c)]
    param_ops = []
    n_extra_by_stage = []
    for convs, skip in zip(params, skips):
        bs, hs, ws, cs = skip.shape
        assert bs == B
        act_ops.append(skip.reshape(B * hs, ws * cs))

        w0, b0 = convs[0]
        assert w0.shape[:2] == (3, 3) and w0.shape[2] == cs + cur_c
        co = w0.shape[3]
        param_ops += [
            _row_shift_mats(B, hs),                       # P  (3, R, R)
            _band_matrices(w0[:, :, :cs, :], ws),         # Ms (3, ws*cs,  ws*co)
            _up_row_gather_mats(B, hs, cur_h),            # D  (3, R, Rprev)
            _band_matrices(w0[:, :, cs:, :], ws, cur_w),  # Mu (3, cw*cc,  ws*co)
            jnp.tile(b0, ws).reshape(1, ws * co),         # bias row
        ]
        for (w, b) in convs[1:]:
            assert w.shape[:2] == (3, 3)
            co = w.shape[3]
            param_ops += [_band_matrices(w, ws),
                          jnp.tile(b, ws).reshape(1, ws * co)]
        n_extra_by_stage.append(len(convs) - 1)
        cur_h, cur_w, cur_c = hs, ws, co

    out_rows_shape = (B * cur_h, cur_w * cur_c)
    n_act = len(act_ops)

    def mm(a, b):
        return jnp.dot(a, b, preferred_element_type=jnp.float32)

    def kernel(*refs):
        in_refs, o_ref = refs[:-1], refs[-1]
        p = n_act
        xr = in_refs[0][...].astype(jnp.float32)           # (B*Hprev, Wprev*Cprev)
        for st, n_extra in enumerate(n_extra_by_stage):
            skip_rows = in_refs[1 + st][...].astype(jnp.float32)
            p_ref, ms_ref, d_ref, mu_ref, b0_ref = in_refs[p:p + 5]
            p += 5
            rows, n_out = p_ref.shape[-1], ms_ref.shape[-1]

            # conv 0: concat([skip, upsample(x)]) via weight split; upsample is
            # folded into D (rows) and Mu (columns).
            acc = jnp.zeros((rows, n_out), jnp.float32)
            for dh in range(3):                            # static 3-tap unroll
                acc = acc + mm(mm(p_ref[dh], skip_rows), ms_ref[dh])
                acc = acc + mm(mm(d_ref[dh], xr), mu_ref[dh])
            y = acc + b0_ref[...]

            # remaining convs of this stage (activation = identity)
            for _ in range(n_extra):
                m_ref, b_ref = in_refs[p], in_refs[p + 1]
                p += 2
                acc = jnp.zeros((rows, m_ref.shape[-1]), jnp.float32)
                for dh in range(3):
                    acc = acc + mm(mm(p_ref[dh], y), m_ref[dh])
                y = acc + b_ref[...]
            xr = y

        o_ref[...] = xr.astype(o_ref.dtype)                # single lane-dense store

    def _whole(a):
        nd = a.ndim
        return pl.BlockSpec(tuple(a.shape), lambda i: (0,) * nd)

    all_ops = act_ops + param_ops
    out2d = pl.pallas_call(
        kernel,
        out_shape=jax.ShapeDtypeStruct(out_rows_shape, x.dtype),
        grid=(1,),
        in_specs=[_whole(a) for a in all_ops],
        out_specs=pl.BlockSpec(out_rows_shape, lambda i: (0, 0)),
        compiler_params=pltpu.CompilerParams(
            dimension_semantics=("arbitrary",)),
    )(*all_ops)
    return out2d.reshape(B, cur_h, cur_w, cur_c)


# ----------------------------------------------------------------------------
# Pure-JAX reference of the same forward pass (for correctness check).
# ----------------------------------------------------------------------------
def interpolate_nearest_exact(x, out_hw):
    B, H, W, C = x.shape
    OH, OW = out_hw
    hi = jnp.clip(jnp.floor((jnp.arange(OH) + 0.5) * (H / OH)).astype(jnp.int32),
                  0, H - 1)
    wi = jnp.clip(jnp.floor((jnp.arange(OW) + 0.5) * (W / OW)).astype(jnp.int32),
                  0, W - 1)
    return x[:, hi][:, :, wi]


def _conv_ref(x, w, b):
    y = jax.lax.conv_general_dilated(
        x, w, window_strides=(1, 1), padding="SAME",
        dimension_numbers=("NHWC", "HWIO", "NHWC"))
    return y + b[None, None, None, :]


def multiscale_decoder_reference(params, x, old):
    old = list(old)
    for conv_params in params:
        x_old = old.pop()
        x = interpolate_nearest_exact(x, x_old.shape[1:3])
        x = jnp.concatenate([x_old, x], axis=-1)        # torch cat([x_old, x], 1)
        for (w, b) in conv_params:
            x = _conv_ref(x, w, b)                      # activation = identity
    return x


# ----------------------------------------------------------------------------
# Deterministic parameter init (shapes follow MultiScaleDecoder.__init__).
# ----------------------------------------------------------------------------
def init_params(key, in_channels, nscales, nconvs_by_scale=2, kernel_size=3):
    params = []
    c_in = in_channels
    for scale in range(nscales - 1):
        c_out = in_channels // 2 ** (scale + 1)
        convs = []
        for step in range(nconvs_by_scale):
            ci = (c_in + c_out) if step == 0 else c_out
            key, kw_, kb_ = jax.random.split(key, 3)
            bound = 1.0 / float((ci * kernel_size * kernel_size) ** 0.5)
            w = jax.random.uniform(kw_, (kernel_size, kernel_size, ci, c_out),
                                   jnp.float32, -bound, bound)
            b = jax.random.uniform(kb_, (c_out,), jnp.float32, -bound, bound)
            convs.append((w, b))
        params.append(convs)
        c_in = c_out
    return params


if __name__ == "__main__":
    # ndim=2, in_channels=16, nscales=3, nconvs_by_scale=2, kernel_size=3,
    # activation=None, norm=False.
    B, in_channels, nscales = 2, 16, 3
    root = jax.random.PRNGKey(0)
    kp, kx, k1, k2 = jax.random.split(root, 4)
    params = init_params(kp, in_channels, nscales)

    # bottleneck features (NHWC): 16 channels at 4x4
    x = jax.random.normal(kx, (B, 4, 4, in_channels), jnp.float32)
    # skips, ordered like the PyTorch `old` list (popped from the end):
    skip_fine = jax.random.normal(k1, (B, 16, 16, in_channels // 4), jnp.float32)
    skip_coarse = jax.random.normal(k2, (B, 8, 8, in_channels // 2), jnp.float32)
    old = [skip_fine, skip_coarse]

    fused = jax.jit(multiscale_decoder_forward)
    out = jax.block_until_ready(fused(params, x, old))
    assert out.shape == (B, 16, 16, in_channels // 4), out.shape

    ref = multiscale_decoder_reference(params, x, old)
    err = float(jnp.max(jnp.abs(out - ref)))
    assert jnp.allclose(out, ref, atol=2e-4, rtol=2e-4), err

    print("KERNEL_OK")
</pallas_src>

<mosaic_0001>
module attributes {stable_mosaic.version = 11 : i64} {
  func.func @kernel(%arg0: i32, %arg1: memref<8x64xf32, #tpu.memory_space<vmem>>, %arg2: memref<16x64xf32, #tpu.memory_space<vmem>>, %arg3: memref<32x64xf32, #tpu.memory_space<vmem>>, %arg4: memref<3x16x16xf32, #tpu.memory_space<vmem>>, %arg5: memref<3x64x64xf32, #tpu.memory_space<vmem>>, %arg6: memref<3x16x8xf32, #tpu.memory_space<vmem>>, %arg7: memref<3x64x64xf32, #tpu.memory_space<vmem>>, %arg8: memref<1x64xf32, #tpu.memory_space<vmem>>, %arg9: memref<3x64x64xf32, #tpu.memory_space<vmem>>, %arg10: memref<1x64xf32, #tpu.memory_space<vmem>>, %arg11: memref<3x32x32xf32, #tpu.memory_space<vmem>>, %arg12: memref<3x64x64xf32, #tpu.memory_space<vmem>>, %arg13: memref<3x32x16xf32, #tpu.memory_space<vmem>>, %arg14: memref<3x64x64xf32, #tpu.memory_space<vmem>>, %arg15: memref<1x64xf32, #tpu.memory_space<vmem>>, %arg16: memref<3x64x64xf32, #tpu.memory_space<vmem>>, %arg17: memref<1x64xf32, #tpu.memory_space<vmem>>, %arg18: memref<32x64xf32, #tpu.memory_space<vmem>>) attributes {dimension_semantics = [#tpu.dimension_semantics<arbitrary>], iteration_bounds = array<i64: 1>, scalar_prefetch = 0 : i64, scratch_operands = 0 : i64, tpu.core_type = #tpu.core_type<tc>, window_params = [{pipeline_mode = #tpu.pipeline_mode<synchronous>, transform_indices = @transform_0, window_bounds = array<i64: 8, 64>}, {pipeline_mode = #tpu.pipeline_mode<synchronous>, transform_indices = @transform_1, window_bounds = array<i64: 16, 64>}, {pipeline_mode = #tpu.pipeline_mode<synchronous>, transform_indices = @transform_2, window_bounds = array<i64: 32, 64>}, {pipeline_mode = #tpu.pipeline_mode<synchronous>, transform_indices = @transform_3, window_bounds = array<i64: 3, 16, 16>}, {pipeline_mode = #tpu.pipeline_mode<synchronous>, transform_indices = @transform_4, window_bounds = array<i64: 3, 64, 64>}, {pipeline_mode = #tpu.pipeline_mode<synchronous>, transform_indices = @transform_5, window_bounds = array<i64: 3, 16, 8>}, {pipeline_mode = #tpu.pipeline_mode<synchronous>, transform_indices = @transform_6, window_bounds = array<i64: 3, 64, 64>}, {pipeline_mode = #tpu.pipeline_mode<synchronous>, transform_indices = @transform_7, window_bounds = array<i64: 1, 64>}, {pipeline_mode = #tpu.pipeline_mode<synchronous>, transform_indices = @transform_8, window_bounds = array<i64: 3, 64, 64>}, {pipeline_mode = #tpu.pipeline_mode<synchronous>, transform_indices = @transform_9, window_bounds = array<i64: 1, 64>}, {pipeline_mode = #tpu.pipeline_mode<synchronous>, transform_indices = @transform_10, window_bounds = array<i64: 3, 32, 32>}, {pipeline_mode = #tpu.pipeline_mode<synchronous>, transform_indices = @transform_11, window_bounds = array<i64: 3, 64, 64>}, {pipeline_mode = #tpu.pipeline_mode<synchronous>, transform_indices = @transform_12, window_bounds = array<i64: 3, 32, 16>}, {pipeline_mode = #tpu.pipeline_mode<synchronous>, transform_indices = @transform_13, window_bounds = array<i64: 3, 64, 64>}, {pipeline_mode = #tpu.pipeline_mode<synchronous>, transform_indices = @transform_14, window_bounds = array<i64: 1, 64>}, {pipeline_mode = #tpu.pipeline_mode<synchronous>, transform_indices = @transform_15, window_bounds = array<i64: 3, 64, 64>}, {pipeline_mode = #tpu.pipeline_mode<synchronous>, transform_indices = @transform_16, window_bounds = array<i64: 1, 64>}, {pipeline_mode = #tpu.pipeline_mode<synchronous>, transform_indices = @transform_17, window_bounds = array<i64: 32, 64>}]} {
    %c0 = arith.constant 0 : index
    %c0_0 = arith.constant 0 : index
    %0 = vector.load %arg1[%c0, %c0_0] : memref<8x64xf32, #tpu.memory_space<vmem>>, vector<8x64xf32>
    %c0_1 = arith.constant 0 : index
    %c0_2 = arith.constant 0 : index
    %1 = vector.load %arg2[%c0_1, %c0_2] : memref<16x64xf32, #tpu.memory_space<vmem>>, vector<16x64xf32>
    %cst = arith.constant 0.000000e+00 : f32
    %2 = vector.broadcast %cst : f32 to vector<16x64xf32>
    %c0_3 = arith.constant 0 : index
    %c0_4 = arith.constant 0 : index
    %c0_5 = arith.constant 0 : index
    %3 = vector.load %arg4[%c0_3, %c0_4, %c0_5] : memref<3x16x16xf32, #tpu.memory_space<vmem>>, vector<1x16x16xf32>
    %4 = vector.shape_cast %3 : vector<1x16x16xf32> to vector<16x16xf32>
    %cst_6 = arith.constant dense<0.000000e+00> : vector<16x64xf32>
    %5 = tpu.matmul %4, %1, %cst_6 {dimension_numbers = #tpu.dot_dimension_numbers<[1], [0], [0], [1], [0, 0, 1, 1], [], []>} : vector<16x16xf32>, vector<16x64xf32>, vector<16x64xf32> -> vector<16x64xf32>
    %c0_7 = arith.constant 0 : index
    %c0_8 = arith.constant 0 : index
    %c0_9 = arith.constant 0 : index
    %6 = vector.load %arg5[%c0_7, %c0_8, %c0_9] : memref<3x64x64xf32, #tpu.memory_space<vmem>>, vector<1x64x64xf32>
    %7 = vector.shape_cast %6 : vector<1x64x64xf32> to vector<64x64xf32>
    %cst_10 = arith.constant dense<0.000000e+00> : vector<16x64xf32>
    %8 = tpu.matmul %5, %7, %cst_10 {dimension_numbers = #tpu.dot_dimension_numbers<[1], [0], [0], [1], [0, 0, 1, 1], [], []>} : vector<16x64xf32>, vector<64x64xf32>, vector<16x64xf32> -> vector<16x64xf32>
    %9 = arith.addf %2, %8 : vector<16x64xf32>
    %c0_11 = arith.constant 0 : index
    %c0_12 = arith.constant 0 : index
    %c0_13 = arith.constant 0 : index
    %10 = vector.load %arg6[%c0_11, %c0_12, %c0_13] : memref<3x16x8xf32, #tpu.memory_space<vmem>>, vector<1x16x8xf32>
    %11 = vector.shape_cast %10 : vector<1x16x8xf32> to vector<16x8xf32>
    %cst_14 = arith.constant dense<0.000000e+00> : vector<16x64xf32>
    %12 = tpu.matmul %11, %0, %cst_14 {dimension_numbers = #tpu.dot_dimension_numbers<[1], [0], [0], [1], [0, 0, 1, 1], [], []>} : vector<16x8xf32>, vector<8x64xf32>, vector<16x64xf32> -> vector<16x64xf32>
    %c0_15 = arith.constant 0 : index
    %c0_16 = arith.constant 0 : index
    %c0_17 = arith.constant 0 : index
    %13 = vector.load %arg7[%c0_15, %c0_16, %c0_17] : memref<3x64x64xf32, #tpu.memory_space<vmem>>, vector<1x64x64xf32>
    %14 = vector.shape_cast %13 : vector<1x64x64xf32> to vector<64x64xf32>
    %cst_18 = arith.constant dense<0.000000e+00> : vector<16x64xf32>
    %15 = tpu.matmul %12, %14, %cst_18 {dimension_numbers = #tpu.dot_dimension_numbers<[1], [0], [0], [1], [0, 0, 1, 1], [], []>} : vector<16x64xf32>, vector<64x64xf32>, vector<16x64xf32> -> vector<16x64xf32>
    %16 = arith.addf %9, %15 : vector<16x64xf32>
    %c1 = arith.constant 1 : index
    %c0_19 = arith.constant 0 : index
    %c0_20 = arith.constant 0 : index
    %17 = vector.load %arg4[%c1, %c0_19, %c0_20] : memref<3x16x16xf32, #tpu.memory_space<vmem>>, vector<1x16x16xf32>
    %18 = vector.shape_cast %17 : vector<1x16x16xf32> to vector<16x16xf32>
    %cst_21 = arith.constant dense<0.000000e+00> : vector<16x64xf32>
    %19 = tpu.matmul %18, %1, %cst_21 {dimension_numbers = #tpu.dot_dimension_numbers<[1], [0], [0], [1], [0, 0, 1, 1], [], []>} : vector<16x16xf32>, vector<16x64xf32>, vector<16x64xf32> -> vector<16x64xf32>
    %c1_22 = arith.constant 1 : index
    %c0_23 = arith.constant 0 : index
    %c0_24 = arith.constant 0 : index
    %20 = vector.load %arg5[%c1_22, %c0_23, %c0_24] : memref<3x64x64xf32, #tpu.memory_space<vmem>>, vector<1x64x64xf32>
    %21 = vector.shape_cast %20 : vector<1x64x64xf32> to vector<64x64xf32>
    %cst_25 = arith.constant dense<0.000000e+00> : vector<16x64xf32>
    %22 = tpu.matmul %19, %21, %cst_25 {dimension_numbers = #tpu.dot_dimension_numbers<[1], [0], [0], [1], [0, 0, 1, 1], [], []>} : vector<16x64xf32>, vector<64x64xf32>, vector<16x64xf32> -> vector<16x64xf32>
    %23 = arith.addf %16, %22 : vector<16x64xf32>
    %c1_26 = arith.constant 1 : index
    %c0_27 = arith.constant 0 : index
    %c0_28 = arith.constant 0 : index
    %24 = vector.load %arg6[%c1_26, %c0_27, %c0_28] : memref<3x16x8xf32, #tpu.memory_space<vmem>>, vector<1x16x8xf32>
    %25 = vector.shape_cast %24 : vector<1x16x8xf32> to vector<16x8xf32>
    %cst_29 = arith.constant dense<0.000000e+00> : vector<16x64xf32>
    %26 = tpu.matmul %25, %0, %cst_29 {dimension_numbers = #tpu.dot_dimension_numbers<[1], [0], [0], [1], [0, 0, 1, 1], [], []>} : vector<16x8xf32>, vector<8x64xf32>, vector<16x64xf32> -> vector<16x64xf32>
    %c1_30 = arith.constant 1 : index
    %c0_31 = arith.constant 0 : index
    %c0_32 = arith.constant 0 : index
    %27 = vector.load %arg7[%c1_30, %c0_31, %c0_32] : memref<3x64x64xf32, #tpu.memory_space<vmem>>, vector<1x64x64xf32>
    %28 = vector.shape_cast %27 : vector<1x64x64xf32> to vector<64x64xf32>
    %cst_33 = arith.constant dense<0.000000e+00> : vector<16x64xf32>
    %29 = tpu.matmul %26, %28, %cst_33 {dimension_numbers = #tpu.dot_dimension_numbers<[1], [0], [0], [1], [0, 0, 1, 1], [], []>} : vector<16x64xf32>, vector<64x64xf32>, vector<16x64xf32> -> vector<16x64xf32>
    %30 = arith.addf %23, %29 : vector<16x64xf32>
    %c2 = arith.constant 2 : index
    %c0_34 = arith.constant 0 : index
    %c0_35 = arith.constant 0 : index
    %31 = vector.load %arg4[%c2, %c0_34, %c0_35] : memref<3x16x16xf32, #tpu.memory_space<vmem>>, vector<1x16x16xf32>
    %32 = vector.shape_cast %31 : vector<1x16x16xf32> to vector<16x16xf32>
    %cst_36 = arith.constant dense<0.000000e+00> : vector<16x64xf32>
    %33 = tpu.matmul %32, %1, %cst_36 {dimension_numbers = #tpu.dot_dimension_numbers<[1], [0], [0], [1], [0, 0, 1, 1], [], []>} : vector<16x16xf32>, vector<16x64xf32>, vector<16x64xf32> -> vector<16x64xf32>
    %c2_37 = arith.constant 2 : index
    %c0_38 = arith.constant 0 : index
    %c0_39 = arith.constant 0 : index
    %34 = vector.load %arg5[%c2_37, %c0_38, %c0_39] : memref<3x64x64xf32, #tpu.memory_space<vmem>>, vector<1x64x64xf32>
    %35 = vector.shape_cast %34 : vector<1x64x64xf32> to vector<64x64xf32>
    %cst_40 = arith.constant dense<0.000000e+00> : vector<16x64xf32>
    %36 = tpu.matmul %33, %35, %cst_40 {dimension_numbers = #tpu.dot_dimension_numbers<[1], [0], [0], [1], [0, 0, 1, 1], [], []>} : vector<16x64xf32>, vector<64x64xf32>, vector<16x64xf32> -> vector<16x64xf32>
    %37 = arith.addf %30, %36 : vector<16x64xf32>
    %c2_41 = arith.constant 2 : index
    %c0_42 = arith.constant 0 : index
    %c0_43 = arith.constant 0 : index
    %38 = vector.load %arg6[%c2_41, %c0_42, %c0_43] : memref<3x16x8xf32, #tpu.memory_space<vmem>>, vector<1x16x8xf32>
    %39 = vector.shape_cast %38 : vector<1x16x8xf32> to vector<16x8xf32>
    %cst_44 = arith.constant dense<0.000000e+00> : vector<16x64xf32>
    %40 = tpu.matmul %39, %0, %cst_44 {dimension_numbers = #tpu.dot_dimension_numbers<[1], [0], [0], [1], [0, 0, 1, 1], [], []>} : vector<16x8xf32>, vector<8x64xf32>, vector<16x64xf32> -> vector<16x64xf32>
    %c2_45 = arith.constant 2 : index
    %c0_46 = arith.constant 0 : index
    %c0_47 = arith.constant 0 : index
    %41 = vector.load %arg7[%c2_45, %c0_46, %c0_47] : memref<3x64x64xf32, #tpu.memory_space<vmem>>, vector<1x64x64xf32>
    %42 = vector.shape_cast %41 : vector<1x64x64xf32> to vector<64x64xf32>
    %cst_48 = arith.constant dense<0.000000e+00> : vector<16x64xf32>
    %43 = tpu.matmul %40, %42, %cst_48 {dimension_numbers = #tpu.dot_dimension_numbers<[1], [0], [0], [1], [0, 0, 1, 1], [], []>} : vector<16x64xf32>, vector<64x64xf32>, vector<16x64xf32> -> vector<16x64xf32>
    %44 = arith.addf %37, %43 : vector<16x64xf32>
    %c0_49 = arith.constant 0 : index
    %c0_50 = arith.constant 0 : index
    %45 = vector.load %arg8[%c0_49, %c0_50] : memref<1x64xf32, #tpu.memory_space<vmem>>, vector<1x64xf32>
    %46 = vector.broadcast %45 : vector<1x64xf32> to vector<16x64xf32>
    %47 = arith.addf %44, %46 : vector<16x64xf32>
    %cst_51 = arith.constant 0.000000e+00 : f32
    %48 = vector.broadcast %cst_51 : f32 to vector<16x64xf32>
    %c0_52 = arith.constant 0 : index
    %c0_53 = arith.constant 0 : index
    %c0_54 = arith.constant 0 : index
    %49 = vector.load %arg4[%c0_52, %c0_53, %c0_54] : memref<3x16x16xf32, #tpu.memory_space<vmem>>, vector<1x16x16xf32>
    %50 = vector.shape_cast %49 : vector<1x16x16xf32> to vector<16x16xf32>
    %cst_55 = arith.constant dense<0.000000e+00> : vector<16x64xf32>
    %51 = tpu.matmul %50, %47, %cst_55 {dimension_numbers = #tpu.dot_dimension_numbers<[1], [0], [0], [1], [0, 0, 1, 1], [], []>} : vector<16x16xf32>, vector<16x64xf32>, vector<16x64xf32> -> vector<16x64xf32>
    %c0_56 = arith.constant 0 : index
    %c0_57 = arith.constant 0 : index
    %c0_58 = arith.constant 0 : index
    %52 = vector.load %arg9[%c0_56, %c0_57, %c0_58] : memref<3x64x64xf32, #tpu.memory_space<vmem>>, vector<1x64x64xf32>
    %53 = vector.shape_cast %52 : vector<1x64x64xf32> to vector<64x64xf32>
    %cst_59 = arith.constant dense<0.000000e+00> : vector<16x64xf32>
    %54 = tpu.matmul %51, %53, %cst_59 {dimension_numbers = #tpu.dot_dimension_numbers<[1], [0], [0], [1], [0, 0, 1, 1], [], []>} : vector<16x64xf32>, vector<64x64xf32>, vector<16x64xf32> -> vector<16x64xf32>
    %55 = arith.addf %48, %54 : vector<16x64xf32>
    %c1_60 = arith.constant 1 : index
    %c0_61 = arith.constant 0 : index
    %c0_62 = arith.constant 0 : index
    %56 = vector.load %arg4[%c1_60, %c0_61, %c0_62] : memref<3x16x16xf32, #tpu.memory_space<vmem>>, vector<1x16x16xf32>
    %57 = vector.shape_cast %56 : vector<1x16x16xf32> to vector<16x16xf32>
    %cst_63 = arith.constant dense<0.000000e+00> : vector<16x64xf32>
    %58 = tpu.matmul %57, %47, %cst_63 {dimension_numbers = #tpu.dot_dimension_numbers<[1], [0], [0], [1], [0, 0, 1, 1], [], []>} : vector<16x16xf32>, vector<16x64xf32>, vector<16x64xf32> -> vector<16x64xf32>
    %c1_64 = arith.constant 1 : index
    %c0_65 = arith.constant 0 : index
    %c0_66 = arith.constant 0 : index
    %59 = vector.load %arg9[%c1_64, %c0_65, %c0_66] : memref<3x64x64xf32, #tpu.memory_space<vmem>>, vector<1x64x64xf32>
    %60 = vector.shape_cast %59 : vector<1x64x64xf32> to vector<64x64xf32>
    %cst_67 = arith.constant dense<0.000000e+00> : vector<16x64xf32>
    %61 = tpu.matmul %58, %60, %cst_67 {dimension_numbers = #tpu.dot_dimension_numbers<[1], [0], [0], [1], [0, 0, 1, 1], [], []>} : vector<16x64xf32>, vector<64x64xf32>, vector<16x64xf32> -> vector<16x64xf32>
    %62 = arith.addf %55, %61 : vector<16x64xf32>
    %c2_68 = arith.constant 2 : index
    %c0_69 = arith.constant 0 : index
    %c0_70 = arith.constant 0 : index
    %63 = vector.load %arg4[%c2_68, %c0_69, %c0_70] : memref<3x16x16xf32, #tpu.memory_space<vmem>>, vector<1x16x16xf32>
    %64 = vector.shape_cast %63 : vector<1x16x16xf32> to vector<16x16xf32>
    %cst_71 = arith.constant dense<0.000000e+00> : vector<16x64xf32>
    %65 = tpu.matmul %64, %47, %cst_71 {dimension_numbers = #tpu.dot_dimension_numbers<[1], [0], [0], [1], [0, 0, 1, 1], [], []>} : vector<16x16xf32>, vector<16x64xf32>, vector<16x64xf32> -> vector<16x64xf32>
    %c2_72 = arith.constant 2 : index
    %c0_73 = arith.constant 0 : index
    %c0_74 = arith.constant 0 : index
    %66 = vector.load %arg9[%c2_72, %c0_73, %c0_74] : memref<3x64x64xf32, #tpu.memory_space<vmem>>, vector<1x64x64xf32>
    %67 = vector.shape_cast %66 : vector<1x64x64xf32> to vector<64x64xf32>
    %cst_75 = arith.constant dense<0.000000e+00> : vector<16x64xf32>
    %68 = tpu.matmul %65, %67, %cst_75 {dimension_numbers = #tpu.dot_dimension_numbers<[1], [0], [0], [1], [0, 0, 1, 1], [], []>} : vector<16x64xf32>, vector<64x64xf32>, vector<16x64xf32> -> vector<16x64xf32>
    %69 = arith.addf %62, %68 : vector<16x64xf32>
    %c0_76 = arith.constant 0 : index
    %c0_77 = arith.constant 0 : index
    %70 = vector.load %arg10[%c0_76, %c0_77] : memref<1x64xf32, #tpu.memory_space<vmem>>, vector<1x64xf32>
    %71 = vector.broadcast %70 : vector<1x64xf32> to vector<16x64xf32>
    %72 = arith.addf %69, %71 : vector<16x64xf32>
    %c0_78 = arith.constant 0 : index
    %c0_79 = arith.constant 0 : index
    %73 = vector.load %arg3[%c0_78, %c0_79] : memref<32x64xf32, #tpu.memory_space<vmem>>, vector<32x64xf32>
    %cst_80 = arith.constant 0.000000e+00 : f32
    %74 = vector.broadcast %cst_80 : f32 to vector<32x64xf32>
    %c0_81 = arith.constant 0 : index
    %c0_82 = arith.constant 0 : index
    %c0_83 = arith.constant 0 : index
    %75 = vector.load %arg11[%c0_81, %c0_82, %c0_83] : memref<3x32x32xf32, #tpu.memory_space<vmem>>, vector<1x32x32xf32>
    %76 = vector.shape_cast %75 : vector<1x32x32xf32> to vector<32x32xf32>
    %cst_84 = arith.constant dense<0.000000e+00> : vector<32x64xf32>
    %77 = tpu.matmul %76, %73, %cst_84 {dimension_numbers = #tpu.dot_dimension_numbers<[1], [0], [0], [1], [0, 0, 1, 1], [], []>} : vector<32x32xf32>, vector<32x64xf32>, vector<32x64xf32> -> vector<32x64xf32>
    %c0_85 = arith.constant 0 : index
    %c0_86 = arith.constant 0 : index
    %c0_87 = arith.constant 0 : index
    %78 = vector.load %arg12[%c0_85, %c0_86, %c0_87] : memref<3x64x64xf32, #tpu.memory_space<vmem>>, vector<1x64x64xf32>
    %79 = vector.shape_cast %78 : vector<1x64x64xf32> to vector<64x64xf32>
    %cst_88 = arith.constant dense<0.000000e+00> : vector<32x64xf32>
    %80 = tpu.matmul %77, %79, %cst_88 {dimension_numbers = #tpu.dot_dimension_numbers<[1], [0], [0], [1], [0, 0, 1, 1], [], []>} : vector<32x64xf32>, vector<64x64xf32>, vector<32x64xf32> -> vector<32x64xf32>
    %81 = arith.addf %74, %80 : vector<32x64xf32>
    %c0_89 = arith.constant 0 : index
    %c0_90 = arith.constant 0 : index
    %c0_91 = arith.constant 0 : index
    %82 = vector.load %arg13[%c0_89, %c0_90, %c0_91] : memref<3x32x16xf32, #tpu.memory_space<vmem>>, vector<1x32x16xf32>
    %83 = vector.shape_cast %82 : vector<1x32x16xf32> to vector<32x16xf32>
    %cst_92 = arith.constant dense<0.000000e+00> : vector<32x64xf32>
    %84 = tpu.matmul %83, %72, %cst_92 {dimension_numbers = #tpu.dot_dimension_numbers<[1], [0], [0], [1], [0, 0, 1, 1], [], []>} : vector<32x16xf32>, vector<16x64xf32>, vector<32x64xf32> -> vector<32x64xf32>
    %c0_93 = arith.constant 0 : index
    %c0_94 = arith.constant 0 : index
    %c0_95 = arith.constant 0 : index
    %85 = vector.load %arg14[%c0_93, %c0_94, %c0_95] : memref<3x64x64xf32, #tpu.memory_space<vmem>>, vector<1x64x64xf32>
    %86 = vector.shape_cast %85 : vector<1x64x64xf32> to vector<64x64xf32>
    %cst_96 = arith.constant dense<0.000000e+00> : vector<32x64xf32>
    %87 = tpu.matmul %84, %86, %cst_96 {dimension_numbers = #tpu.dot_dimension_numbers<[1], [0], [0], [1], [0, 0, 1, 1], [], []>} : vector<32x64xf32>, vector<64x64xf32>, vector<32x64xf32> -> vector<32x64xf32>
    %88 = arith.addf %81, %87 : vector<32x64xf32>
    %c1_97 = arith.constant 1 : index
    %c0_98 = arith.constant 0 : index
    %c0_99 = arith.constant 0 : index
    %89 = vector.load %arg11[%c1_97, %c0_98, %c0_99] : memref<3x32x32xf32, #tpu.memory_space<vmem>>, vector<1x32x32xf32>
    %90 = vector.shape_cast %89 : vector<1x32x32xf32> to vector<32x32xf32>
    %cst_100 = arith.constant dense<0.000000e+00> : vector<32x64xf32>
    %91 = tpu.matmul %90, %73, %cst_100 {dimension_numbers = #tpu.dot_dimension_numbers<[1], [0], [0], [1], [0, 0, 1, 1], [], []>} : vector<32x32xf32>, vector<32x64xf32>, vector<32x64xf32> -> vector<32x64xf32>
    %c1_101 = arith.constant 1 : index
    %c0_102 = arith.constant 0 : index
    %c0_103 = arith.constant 0 : index
    %92 = vector.load %arg12[%c1_101, %c0_102, %c0_103] : memref<3x64x64xf32, #tpu.memory_space<vmem>>, vector<1x64x64xf32>
    %93 = vector.shape_cast %92 : vector<1x64x64xf32> to vector<64x64xf32>
    %cst_104 = arith.constant dense<0.000000e+00> : vector<32x64xf32>
    %94 = tpu.matmul %91, %93, %cst_104 {dimension_numbers = #tpu.dot_dimension_numbers<[1], [0], [0], [1], [0, 0, 1, 1], [], []>} : vector<32x64xf32>, vector<64x64xf32>, vector<32x64xf32> -> vector<32x64xf32>
    %95 = arith.addf %88, %94 : vector<32x64xf32>
    %c1_105 = arith.constant 1 : index
    %c0_106 = arith.constant 0 : index
    %c0_107 = arith.constant 0 : index
    %96 = vector.load %arg13[%c1_105, %c0_106, %c0_107] : memref<3x32x16xf32, #tpu.memory_space<vmem>>, vector<1x32x16xf32>
    %97 = vector.shape_cast %96 : vector<1x32x16xf32> to vector<32x16xf32>
    %cst_108 = arith.constant dense<0.000000e+00> : vector<32x64xf32>
    %98 = tpu.matmul %97, %72, %cst_108 {dimension_numbers = #tpu.dot_dimension_numbers<[1], [0], [0], [1], [0, 0, 1, 1], [], []>} : vector<32x16xf32>, vector<16x64xf32>, vector<32x64xf32> -> vector<32x64xf32>
    %c1_109 = arith.constant 1 : index
    %c0_110 = arith.constant 0 : index
    %c0_111 = arith.constant 0 : index
    %99 = vector.load %arg14[%c1_109, %c0_110, %c0_111] : memref<3x64x64xf32, #tpu.memory_space<vmem>>, vector<1x64x64xf32>
    %100 = vector.shape_cast %99 : vector<1x64x64xf32> to vector<64x64xf32>
    %cst_112 = arith.constant dense<0.000000e+00> : vector<32x64xf32>
    %101 = tpu.matmul %98, %100, %cst_112 {dimension_numbers = #tpu.dot_dimension_numbers<[1], [0], [0], [1], [0, 0, 1, 1], [], []>} : vector<32x64xf32>, vector<64x64xf32>, vector<32x64xf32> -> vector<32x64xf32>
    %102 = arith.addf %95, %101 : vector<32x64xf32>
    %c2_113 = arith.constant 2 : index
    %c0_114 = arith.constant 0 : index
    %c0_115 = arith.constant 0 : index
    %103 = vector.load %arg11[%c2_113, %c0_114, %c0_115] : memref<3x32x32xf32, #tpu.memory_space<vmem>>, vector<1x32x32xf32>
    %104 = vector.shape_cast %103 : vector<1x32x32xf32> to vector<32x32xf32>
    %cst_116 = arith.constant dense<0.000000e+00> : vector<32x64xf32>
    %105 = tpu.matmul %104, %73, %cst_116 {dimension_numbers = #tpu.dot_dimension_numbers<[1], [0], [0], [1], [0, 0, 1, 1], [], []>} : vector<32x32xf32>, vector<32x64xf32>, vector<32x64xf32> -> vector<32x64xf32>
    %c2_117 = arith.constant 2 : index
    %c0_118 = arith.constant 0 : index
    %c0_119 = arith.constant 0 : index
    %106 = vector.load %arg12[%c2_117, %c0_118, %c0_119] : memref<3x64x64xf32, #tpu.memory_space<vmem>>, vector<1x64x64xf32>
    %107 = vector.shape_cast %106 : vector<1x64x64xf32> to vector<64x64xf32>
    %cst_120 = arith.constant dense<0.000000e+00> : vector<32x64xf32>
    %108 = tpu.matmul %105, %107, %cst_120 {dimension_numbers = #tpu.dot_dimension_numbers<[1], [0], [0], [1], [0, 0, 1, 1], [], []>} : vector<32x64xf32>, vector<64x64xf32>, vector<32x64xf32> -> vector<32x64xf32>
    %109 = arith.addf %102, %108 : vector<32x64xf32>
    %c2_121 = arith.constant 2 : index
    %c0_122 = arith.constant 0 : index
    %c0_123 = arith.constant 0 : index
    %110 = vector.load %arg13[%c2_121, %c0_122, %c0_123] : memref<3x32x16xf32, #tpu.memory_space<vmem>>, vector<1x32x16xf32>
    %111 = vector.shape_cast %110 : vector<1x32x16xf32> to vector<32x16xf32>
    %cst_124 = arith.constant dense<0.000000e+00> : vector<32x64xf32>
    %112 = tpu.matmul %111, %72, %cst_124 {dimension_numbers = #tpu.dot_dimension_numbers<[1], [0], [0], [1], [0, 0, 1, 1], [], []>} : vector<32x16xf32>, vector<16x64xf32>, vector<32x64xf32> -> vector<32x64xf32>
    %c2_125 = arith.constant 2 : index
    %c0_126 = arith.constant 0 : index
    %c0_127 = arith.constant 0 : index
    %113 = vector.load %arg14[%c2_125, %c0_126, %c0_127] : memref<3x64x64xf32, #tpu.memory_space<vmem>>, vector<1x64x64xf32>
    %114 = vector.shape_cast %113 : vector<1x64x64xf32> to vector<64x64xf32>
    %cst_128 = arith.constant dense<0.000000e+00> : vector<32x64xf32>
    %115 = tpu.matmul %112, %114, %cst_128 {dimension_numbers = #tpu.dot_dimension_numbers<[1], [0], [0], [1], [0, 0, 1, 1], [], []>} : vector<32x64xf32>, vector<64x64xf32>, vector<32x64xf32> -> vector<32x64xf32>
    %116 = arith.addf %109, %115 : vector<32x64xf32>
    %c0_129 = arith.constant 0 : index
    %c0_130 = arith.constant 0 : index
    %117 = vector.load %arg15[%c0_129, %c0_130] : memref<1x64xf32, #tpu.memory_space<vmem>>, vector<1x64xf32>
    %118 = vector.broadcast %117 : vector<1x64xf32> to vector<32x64xf32>
    %119 = arith.addf %116, %118 : vector<32x64xf32>
    %cst_131 = arith.constant 0.000000e+00 : f32
    %120 = vector.broadcast %cst_131 : f32 to vector<32x64xf32>
    %c0_132 = arith.constant 0 : index
    %c0_133 = arith.constant 0 : index
    %c0_134 = arith.constant 0 : index
    %121 = vector.load %arg11[%c0_132, %c0_133, %c0_134] : memref<3x32x32xf32, #tpu.memory_space<vmem>>, vector<1x32x32xf32>
    %122 = vector.shape_cast %121 : vector<1x32x32xf32> to vector<32x32xf32>
    %cst_135 = arith.constant dense<0.000000e+00> : vector<32x64xf32>
    %123 = tpu.matmul %122, %119, %cst_135 {dimension_numbers = #tpu.dot_dimension_numbers<[1], [0], [0], [1], [0, 0, 1, 1], [], []>} : vector<32x32xf32>, vector<32x64xf32>, vector<32x64xf32> -> vector<32x64xf32>
    %c0_136 = arith.constant 0 : index
    %c0_137 = arith.constant 0 : index
    %c0_138 = arith.constant 0 : index
    %124 = vector.load %arg16[%c0_136, %c0_137, %c0_138] : memref<3x64x64xf32, #tpu.memory_space<vmem>>, vector<1x64x64xf32>
    %125 = vector.shape_cast %124 : vector<1x64x64xf32> to vector<64x64xf32>
    %cst_139 = arith.constant dense<0.000000e+00> : vector<32x64xf32>
    %126 = tpu.matmul %123, %125, %cst_139 {dimension_numbers = #tpu.dot_dimension_numbers<[1], [0], [0], [1], [0, 0, 1, 1], [], []>} : vector<32x64xf32>, vector<64x64xf32>, vector<32x64xf32> -> vector<32x64xf32>
    %127 = arith.addf %120, %126 : vector<32x64xf32>
    %c1_140 = arith.constant 1 : index
    %c0_141 = arith.constant 0 : index
    %c0_142 = arith.constant 0 : index
    %128 = vector.load %arg11[%c1_140, %c0_141, %c0_142] : memref<3x32x32xf32, #tpu.memory_space<vmem>>, vector<1x32x32xf32>
    %129 = vector.shape_cast %128 : vector<1x32x32xf32> to vector<32x32xf32>
    %cst_143 = arith.constant dense<0.000000e+00> : vector<32x64xf32>
    %130 = tpu.matmul %129, %119, %cst_143 {dimension_numbers = #tpu.dot_dimension_numbers<[1], [0], [0], [1], [0, 0, 1, 1], [], []>} : vector<32x32xf32>, vector<32x64xf32>, vector<32x64xf32> -> vector<32x64xf32>
    %c1_144 = arith.constant 1 : index
    %c0_145 = arith.constant 0 : index
    %c0_146 = arith.constant 0 : index
    %131 = vector.load %arg16[%c1_144, %c0_145, %c0_146] : memref<3x64x64xf32, #tpu.memory_space<vmem>>, vector<1x64x64xf32>
    %132 = vector.shape_cast %131 : vector<1x64x64xf32> to vector<64x64xf32>
    %cst_147 = arith.constant dense<0.000000e+00> : vector<32x64xf32>
    %133 = tpu.matmul %130, %132, %cst_147 {dimension_numbers = #tpu.dot_dimension_numbers<[1], [0], [0], [1], [0, 0, 1, 1], [], []>} : vector<32x64xf32>, vector<64x64xf32>, vector<32x64xf32> -> vector<32x64xf32>
    %134 = arith.addf %127, %133 : vector<32x64xf32>
    %c2_148 = arith.constant 2 : index
    %c0_149 = arith.constant 0 : index
    %c0_150 = arith.constant 0 : index
    %135 = vector.load %arg11[%c2_148, %c0_149, %c0_150] : memref<3x32x32xf32, #tpu.memory_space<vmem>>, vector<1x32x32xf32>
    %136 = vector.shape_cast %135 : vector<1x32x32xf32> to vector<32x32xf32>
    %cst_151 = arith.constant dense<0.000000e+00> : vector<32x64xf32>
    %137 = tpu.matmul %136, %119, %cst_151 {dimension_numbers = #tpu.dot_dimension_numbers<[1], [0], [0], [1], [0, 0, 1, 1], [], []>} : vector<32x32xf32>, vector<32x64xf32>, vector<32x64xf32> -> vector<32x64xf32>
    %c2_152 = arith.constant 2 : index
    %c0_153 = arith.constant 0 : index
    %c0_154 = arith.constant 0 : index
    %138 = vector.load %arg16[%c2_152, %c0_153, %c0_154] : memref<3x64x64xf32, #tpu.memory_space<vmem>>, vector<1x64x64xf32>
    %139 = vector.shape_cast %138 : vector<1x64x64xf32> to vector<64x64xf32>
    %cst_155 = arith.constant dense<0.000000e+00> : vector<32x64xf32>
    %140 = tpu.matmul %137, %139, %cst_155 {dimension_numbers = #tpu.dot_dimension_numbers<[1], [0], [0], [1], [0, 0, 1, 1], [], []>} : vector<32x64xf32>, vector<64x64xf32>, vector<32x64xf32> -> vector<32x64xf32>
    %141 = arith.addf %134, %140 : vector<32x64xf32>
    %c0_156 = arith.constant 0 : index
    %c0_157 = arith.constant 0 : index
    %142 = vector.load %arg17[%c0_156, %c0_157] : memref<1x64xf32, #tpu.memory_space<vmem>>, vector<1x64xf32>
    %143 = vector.broadcast %142 : vector<1x64xf32> to vector<32x64xf32>
    %144 = arith.addf %141, %143 : vector<32x64xf32>
    %c0_158 = arith.constant 0 : index
    %c0_159 = arith.constant 0 : index
    %145 = vector.load %arg18[%c0_158, %c0_159] : memref<32x64xf32, #tpu.memory_space<vmem>>, vector<32x64xf32>
    tpu.vector_store %arg18[%c0_158, %c0_159], %144 {strides = array<i32>} : memref<32x64xf32, #tpu.memory_space<vmem>>, vector<32x64xf32>,
    return
  }
  func.func @transform_0(%arg0: i32) -> (i32, i32) {
    %c0_i32 = arith.constant 0 : i32
    %c0_i32_0 = arith.constant 0 : i32
    %c0_i32_1 = arith.constant 0 : i32
    return %c0_i32, %c0_i32_0 : i32, i32
  }
  func.func @transform_1(%arg0: i32) -> (i32, i32) {
    %c0_i32 = arith.constant 0 : i32
    %c0_i32_0 = arith.constant 0 : i32
    %c0_i32_1 = arith.constant 0 : i32
    return %c0_i32, %c0_i32_0 : i32, i32
  }
  func.func @transform_2(%arg0: i32) -> (i32, i32) {
    %c0_i32 = arith.constant 0 : i32
    %c0_i32_0 = arith.constant 0 : i32
    %c0_i32_1 = arith.constant 0 : i32
    return %c0_i32, %c0_i32_0 : i32, i32
  }
  func.func @transform_3(%arg0: i32) -> (i32, i32, i32) {
    %c0_i32 = arith.constant 0 : i32
    %c0_i32_0 = arith.constant 0 : i32
    %c0_i32_1 = arith.constant 0 : i32
    %c0_i32_2 = arith.constant 0 : i32
    return %c0_i32, %c0_i32_0, %c0_i32_1 : i32, i32, i32
  }
  func.func @transform_4(%arg0: i32) -> (i32, i32, i32) {
    %c0_i32 = arith.constant 0 : i32
    %c0_i32_0 = arith.constant 0 : i32
    %c0_i32_1 = arith.constant 0 : i32
    %c0_i32_2 = arith.constant 0 : i32
    return %c0_i32, %c0_i32_0, %c0_i32_1 : i32, i32, i32
  }
  func.func @transform_5(%arg0: i32) -> (i32, i32, i32) {
    %c0_i32 = arith.constant 0 : i32
    %c0_i32_0 = arith.constant 0 : i32
    %c0_i32_1 = arith.constant 0 : i32
    %c0_i32_2 = arith.constant 0 : i32
    return %c0_i32, %c0_i32_0, %c0_i32_1 : i32, i32, i32
  }
  func.func @transform_6(%arg0: i32) -> (i32, i32, i32) {
    %c0_i32 = arith.constant 0 : i32
    %c0_i32_0 = arith.constant 0 : i32
    %c0_i32_1 = arith.constant 0 : i32
    %c0_i32_2 = arith.constant 0 : i32
    return %c0_i32, %c0_i32_0, %c0_i32_1 : i32, i32, i32
  }
  func.func @transform_7(%arg0: i32) -> (i32, i32) {
    %c0_i32 = arith.constant 0 : i32
    %c0_i32_0 = arith.constant 0 : i32
    %c0_i32_1 = arith.constant 0 : i32
    return %c0_i32, %c0_i32_0 : i32, i32
  }
  func.func @transform_8(%arg0: i32) -> (i32, i32, i32) {
    %c0_i32 = arith.constant 0 : i32
    %c0_i32_0 = arith.constant 0 : i32
    %c0_i32_1 = arith.constant 0 : i32
    %c0_i32_2 = arith.constant 0 : i32
    return %c0_i32, %c0_i32_0, %c0_i32_1 : i32, i32, i32
  }
  func.func @transform_9(%arg0: i32) -> (i32, i32) {
    %c0_i32 = arith.constant 0 : i32
    %c0_i32_0 = arith.constant 0 : i32
    %c0_i32_1 = arith.constant 0 : i32
    return %c0_i32, %c0_i32_0 : i32, i32
  }
  func.func @transform_10(%arg0: i32) -> (i32, i32, i32) {
    %c0_i32 = arith.constant 0 : i32
    %c0_i32_0 = arith.constant 0 : i32
    %c0_i32_1 = arith.constant 0 : i32
    %c0_i32_2 = arith.constant 0 : i32
    return %c0_i32, %c0_i32_0, %c0_i32_1 : i32, i32, i32
  }
  func.func @transform_11(%arg0: i32) -> (i32, i32, i32) {
    %c0_i32 = arith.constant 0 : i32
    %c0_i32_0 = arith.constant 0 : i32
    %c0_i32_1 = arith.constant 0 : i32
    %c0_i32_2 = arith.constant 0 : i32
    return %c0_i32, %c0_i32_0, %c0_i32_1 : i32, i32, i32
  }
  func.func @transform_12(%arg0: i32) -> (i32, i32, i32) {
    %c0_i32 = arith.constant 0 : i32
    %c0_i32_0 = arith.constant 0 : i32
    %c0_i32_1 = arith.constant 0 : i32
    %c0_i32_2 = arith.constant 0 : i32
    return %c0_i32, %c0_i32_0, %c0_i32_1 : i32, i32, i32
  }
  func.func @transform_13(%arg0: i32) -> (i32, i32, i32) {
    %c0_i32 = arith.constant 0 : i32
    %c0_i32_0 = arith.constant 0 : i32
    %c0_i32_1 = arith.constant 0 : i32
    %c0_i32_2 = arith.constant 0 : i32
    return %c0_i32, %c0_i32_0, %c0_i32_1 : i32, i32, i32
  }
  func.func @transform_14(%arg0: i32) -> (i32, i32) {
    %c0_i32 = arith.constant 0 : i32
    %c0_i32_0 = arith.constant 0 : i32
    %c0_i32_1 = arith.constant 0 : i32
    return %c0_i32, %c0_i32_0 : i32, i32
  }
  func.func @transform_15(%arg0: i32) -> (i32, i32, i32) {
    %c0_i32 = arith.constant 0 : i32
    %c0_i32_0 = arith.constant 0 : i32
    %c0_i32_1 = arith.constant 0 : i32
    %c0_i32_2 = arith.constant 0 : i32
    return %c0_i32, %c0_i32_0, %c0_i32_1 : i32, i32, i32
  }
  func.func @transform_16(%arg0: i32) -> (i32, i32) {
    %c0_i32 = arith.constant 0 : i32
    %c0_i32_0 = arith.constant 0 : i32
    %c0_i32_1 = arith.constant 0 : i32
    return %c0_i32, %c0_i32_0 : i32, i32
  }
  func.func @transform_17(%arg0: i32) -> (i32, i32) {
    %c0_i32 = arith.constant 0 : i32
    %c0_i32_0 = arith.constant 0 : i32
    %c0_i32_1 = arith.constant 0 : i32
    return %c0_i32, %c0_i32_0 : i32, i32
  }
}

</mosaic_0001>

<llo_original>
// kernel: tile.34
$region0: #{tile.34}
  %s0 = inlined_call_operand.vmem [shape: f32[16,4], index: 0, kind: input, shape index: {}]
  %s1 = inlined_call_operand.vmem [shape: f32[1,64], index: 1, kind: output, shape index: {}]
  $region1: #{tile.34} parent=0
    #allocation0 [shape = 'u8[4096]{0}', space=vmem, size = 0x1000, scoped, tag = 'scoped mem for output reshape']
    %v2 = vld [vmem:[%s0] sm:$0x1]
    %vm3 = vcmask 31744
    %4 = vst.msk [vmem:[#allocation0] sm:$0x1] %vm3, %v2
    %s5 = scalar_lea.vmem %s0, 15
    %v6 = vld [vmem:[%s5] sm:$0x1]
    %7 = vrot.lane.b32.xlu0 %v6, 60
    %v8 = vpop.permute.xlu0 %7
    %vm9 = vcmask 523744
    %10 = vst.msk [vmem:[#allocation0] sm:$0x1] %vm9, %v8
    %s11 = scalar_lea.vmem %s0, 14
    %v12 = vld [vmem:[%s11] sm:$0x1]
    %13 = vrot.lane.b32.xlu0 %v12, 56
    %v14 = vpop.permute.xlu0 %13
    %vm15 = vcmask 490944
    %16 = vst.msk [vmem:[#allocation0] sm:$0x1] %vm15, %v14
    %s17 = scalar_lea.vmem %s0, 13
    %v18 = vld [vmem:[%s17] sm:$0x1]
    %19 = vrot.lane.b32.xlu0 %v18, 52
    %v20 = vpop.permute.xlu0 %19
    %vm21 = vcmask 458144
    %22 = vst.msk [vmem:[#allocation0] sm:$0x1] %vm21, %v20
    %s23 = scalar_lea.vmem %s0, 12
    %v24 = vld [vmem:[%s23] sm:$0x1]
    %25 = vrot.lane.b32.xlu0 %v24, 48
    %v26 = vpop.permute.xlu0 %25
    %vm27 = vcmask 425344
    %28 = vst.msk [vmem:[#allocation0] sm:$0x1] %vm27, %v26
    %s29 = scalar_lea.vmem %s0, 11
    %v30 = vld [vmem:[%s29] sm:$0x1]
    %31 = vrot.lane.b32.xlu0 %v30, 44
    %v32 = vpop.permute.xlu0 %31
    %vm33 = vcmask 392544
    %34 = vst.msk [vmem:[#allocation0] sm:$0x1] %vm33, %v32
    %s35 = scalar_lea.vmem %s0, 10
    %v36 = vld [vmem:[%s35] sm:$0x1]
    %37 = vrot.lane.b32.xlu0 %v36, 40
    %v38 = vpop.permute.xlu0 %37
    %vm39 = vcmask 359744
    %40 = vst.msk [vmem:[#allocation0] sm:$0x1] %vm39, %v38
    %s41 = scalar_lea.vmem %s0, 9
    %v42 = vld [vmem:[%s41] sm:$0x1]
    %43 = vrot.lane.b32.xlu0 %v42, 36
    %v44 = vpop.permute.xlu0 %43
    %vm45 = vcmask 326944
    %46 = vst.msk [vmem:[#allocation0] sm:$0x1] %vm45, %v44
    %s47 = scalar_lea.vmem %s0, 8
    %v48 = vld [vmem:[%s47] sm:$0x1]
    %49 = vrot.lane.b32.xlu0 %v48, 32
    %v50 = vpop.permute.xlu0 %49
    %vm51 = vcmask 294144
    %52 = vst.msk [vmem:[#allocation0] sm:$0x1] %vm51, %v50
    %s53 = scalar_lea.vmem %s0, 7
    %v54 = vld [vmem:[%s53] sm:$0x1]
    %55 = vrot.lane.b32.xlu0 %v54, 28
    %v56 = vpop.permute.xlu0 %55
    %vm57 = vcmask 261344
    %58 = vst.msk [vmem:[#allocation0] sm:$0x1] %vm57, %v56
    %s59 = scalar_lea.vmem %s0, 6
    %v60 = vld [vmem:[%s59] sm:$0x1]
    %61 = vrot.lane.b32.xlu0 %v60, 24
    %v62 = vpop.permute.xlu0 %61
    %vm63 = vcmask 228544
    %64 = vst.msk [vmem:[#allocation0] sm:$0x1] %vm63, %v62
    %s65 = scalar_lea.vmem %s0, 5
    %v66 = vld [vmem:[%s65] sm:$0x1]
    %67 = vrot.lane.b32.xlu0 %v66, 20
    %v68 = vpop.permute.xlu0 %67
    %vm69 = vcmask 195744
    %70 = vst.msk [vmem:[#allocation0] sm:$0x1] %vm69, %v68
    %s71 = scalar_lea.vmem %s0, 4
    %v72 = vld [vmem:[%s71] sm:$0x1]
    %73 = vrot.lane.b32.xlu0 %v72, 16
    %v74 = vpop.permute.xlu0 %73
    %vm75 = vcmask 162944
    %76 = vst.msk [vmem:[#allocation0] sm:$0x1] %vm75, %v74
    %s77 = scalar_lea.vmem %s0, 3
    %v78 = vld [vmem:[%s77] sm:$0x1]
    %79 = vrot.lane.b32.xlu0 %v78, 12
    %v80 = vpop.permute.xlu0 %79
    %vm81 = vcmask 130144
    %82 = vst.msk [vmem:[#allocation0] sm:$0x1] %vm81, %v80
    %s83 = scalar_lea.vmem %s0, 2
    %v84 = vld [vmem:[%s83] sm:$0x1]
    %85 = vrot.lane.b32.xlu0 %v84, 8
    %v86 = vpop.permute.xlu0 %85
    %vm87 = vcmask 97344
    %88 = vst.msk [vmem:[#allocation0] sm:$0x1] %vm87, %v86
    %s89 = scalar_lea.vmem %s0, 1
    %v90 = vld [vmem:[%s89] sm:$0x1]
    %91 = vrot.lane.b32.xlu0 %v90, 4
    %v92 = vpop.permute.xlu0 %91
    %vm93 = vcmask 64544
    %94 = vst.msk [vmem:[#allocation0] sm:$0x1] %vm93, %v92
    %s96 = sshllo.u32 0, 1
    %v98 = vld [vmem:[#allocation0] sm:%s96]
    %s99 = sshllo.u32 0, 1
    %100 = vst [vmem:[%s1] sm:%s99] %v98

// kernel: tile.33
$region0: #{tile.33}
  #allocation0 [shape = 's32[1]{0}', space=sflag, size = 0x4, scoped, tag = 'scoped memory for tile.33']
  %s0 = inlined_call_operand.vmem [shape: f32[4], index: 0, kind: input, shape index: {}]
  %s1 = inlined_call_operand.vmem [shape: f32[16,4], index: 1, kind: output, shape index: {}]
  // Predicated region
  $region2: #{tile.33} parent=0 // pred_check
    _
  $region3: #{tile.33} parent=0 // pred_check_branch
    %3 = sbr.rel (0) target = $region5
  $region4: #{tile.33} parent=0 // pred_region
    _
  $region5: #{tile.33} parent=0 // pred_fallthru
    _
  %v4 = vld [vmem:[%s0] ss:$0 sm:$0xff]
  %5 = vst [vmem:[%s1] sm:$0xff] %v4
  %s6 = scalar_lea.vmem %s1, 8
  %7 = vst [vmem:[%s6] sm:$0xff] %v4

// kernel: tile.23
$region0: #{tile.23}
  #allocation0 [shape = 's32[1]{0}', space=sflag, size = 0x4, scoped, tag = 'scoped memory for tile.23']
  %s0 = inlined_call_operand.vmem [shape: f32[8], index: 0, kind: input, shape index: {}]
  %s1 = inlined_call_operand.vmem [shape: f32[8,8], index: 1, kind: output, shape index: {}]
  // Predicated region
  $region2: #{tile.23} parent=0 // pred_check
    _
  $region3: #{tile.23} parent=0 // pred_check_branch
    %3 = sbr.rel (0) target = $region5
  $region4: #{tile.23} parent=0 // pred_region
    _
  $region5: #{tile.23} parent=0 // pred_fallthru
    _
  %v4 = vld [vmem:[%s0] ss:$0 sm:$0xff]
  %5 = vst [vmem:[%s1] sm:$0xff] %v4

// kernel: tile.24
$region0: #{tile.24}
  %s0 = inlined_call_operand.vmem [shape: f32[8,8], index: 0, kind: input, shape index: {}]
  %s1 = inlined_call_operand.vmem [shape: f32[1,64], index: 1, kind: output, shape index: {}]
  $region1: #{tile.24} parent=0
    #allocation0 [shape = 'u8[4096]{0}', space=vmem, size = 0x1000, scoped, tag = 'scoped mem for output reshape']
    %v2 = vld [vmem:[%s0] sm:$0x1]
    %vm3 = vcmask 64512
    %4 = vst.msk [vmem:[#allocation0] sm:$0x1] %vm3, %v2
    %s5 = scalar_lea.vmem %s0, 7
    %v6 = vld [vmem:[%s5] sm:$0x1]
    %7 = vrot.lane.b32.xlu0 %v6, 56
    %v8 = vpop.permute.xlu0 %7
    %vm9 = vcmask 523712
    %10 = vst.msk [vmem:[#allocation0] sm:$0x1] %vm9, %v8
    %s11 = scalar_lea.vmem %s0, 6
    %v12 = vld [vmem:[%s11] sm:$0x1]
    %13 = vrot.lane.b32.xlu0 %v12, 48
    %v14 = vpop.permute.xlu0 %13
    %vm15 = vcmask 458112
    %16 = vst.msk [vmem:[#allocation0] sm:$0x1] %vm15, %v14
    %s17 = scalar_lea.vmem %s0, 5
    %v18 = vld [vmem:[%s17] sm:$0x1]
    %19 = vrot.lane.b32.xlu0 %v18, 40
    %v20 = vpop.permute.xlu0 %19
    %vm21 = vcmask 392512
    %22 = vst.msk [vmem:[#allocation0] sm:$0x1] %vm21, %v20
    %s23 = scalar_lea.vmem %s0, 4
    %v24 = vld [vmem:[%s23] sm:$0x1]
    %25 = vrot.lane.b32.xlu0 %v24, 32
    %v26 = vpop.permute.xlu0 %25
    %vm27 = vcmask 326912
    %28 = vst.msk [vmem:[#allocation0] sm:$0x1] %vm27, %v26
    %s29 = scalar_lea.vmem %s0, 3
    %v30 = vld [vmem:[%s29] sm:$0x1]
    %31 = vrot.lane.b32.xlu0 %v30, 24
    %v32 = vpop.permute.xlu0 %31
    %vm33 = vcmask 261312
    %34 = vst.msk [vmem:[#allocation0] sm:$0x1] %vm33, %v32
    %s35 = scalar_lea.vmem %s0, 2
    %v36 = vld [vmem:[%s35] sm:$0x1]
    %37 = vrot.lane.b32.xlu0 %v36, 16
    %v38 = vpop.permute.xlu0 %37
    %vm39 = vcmask 195712
    %40 = vst.msk [vmem:[#allocation0] sm:$0x1] %vm39, %v38
    %s41 = scalar_lea.vmem %s0, 1
    %v42 = vld [vmem:[%s41] sm:$0x1]
    %43 = vrot.lane.b32.xlu0 %v42, 8
    %v44 = vpop.permute.xlu0 %43
    %vm45 = vcmask 130112
    %46 = vst.msk [vmem:[#allocation0] sm:$0x1] %vm45, %v44
    %s48 = sshllo.u32 0, 1
    %v50 = vld [vmem:[#allocation0] sm:%s48]
    %s51 = sshllo.u32 0, 1
    %52 = vst [vmem:[%s1] sm:%s51] %v50

// kernel: multiscale_decoder_forward.1
$region0: #{multiscale_decoder_forward.1}
  #allocation0 [shape = 'u32[]', space=smem, size = 0x4, offset = 0x4, fixed_abs, tag = 'smem constant byte address 0x4 - core index']
  #allocation1 [shape = 'u32[144,128]{1,0:T(1,128)}', space=vmem, size = 0x12000, scoped, tag = 'internal scratch']
  %s0 = inlined_call_operand.vmem [shape: f32[8,64], index: 0, kind: input, shape index: {}]
  %s1 = inlined_call_operand.vmem [shape: f32[16,64], index: 1, kind: input, shape index: {}]
  %s2 = inlined_call_operand.vmem [shape: f32[32,64], index: 2, kind: input, shape index: {}]
  %s3 = inlined_call_operand.vmem [shape: f32[3,16,16], index: 3, kind: input, shape index: {}]
  %s4 = inlined_call_operand.vmem [shape: f32[3,64,64], index: 4, kind: input, shape index: {}]
  %s5 = inlined_call_operand.vmem [shape: f32[3,16,8], index: 5, kind: input, shape index: {}]
  %s6 = inlined_call_operand.vmem [shape: f32[3,64,64], index: 6, kind: input, shape index: {}]
  %s7 = inlined_call_operand.vmem [shape: f32[1,64], index: 7, kind: input, shape index: {}]
  %s8 = inlined_call_operand.vmem [shape: f32[3,64,64], index: 8, kind: input, shape index: {}]
  %s9 = inlined_call_operand.vmem [shape: f32[1,64], index: 9, kind: input, shape index: {}]
  %s10 = inlined_call_operand.vmem [shape: f32[3,32,32], index: 10, kind: input, shape index: {}]
  %s11 = inlined_call_operand.vmem [shape: f32[3,64,64], index: 11, kind: input, shape index: {}]
  %s12 = inlined_call_operand.vmem [shape: f32[3,32,16], index: 12, kind: input, shape index: {}]
  %s13 = inlined_call_operand.vmem [shape: f32[3,64,64], index: 13, kind: input, shape index: {}]
  %s14 = inlined_call_operand.vmem [shape: f32[1,64], index: 14, kind: input, shape index: {}]
  %s15 = inlined_call_operand.vmem [shape: f32[3,64,64], index: 15, kind: input, shape index: {}]
  %s16 = inlined_call_operand.vmem [shape: f32[1,64], index: 16, kind: input, shape index: {}]
  %s17 = inlined_call_operand.vmem [shape: f32[32,64], index: 17, kind: output, shape index: {}]
  %s18 = sld [smem:[#allocation0]]
  $region78: #{multiscale_decoder_forward.1} parent=0
    _
  %s20 = ssub.s32 1, %s18
  %s21 = scalar_select 0, %s20, %s18
  // Predicated region
  $region2: #{multiscale_decoder_forward.1} parent=0 // pred_check
    _
  $region3: #{multiscale_decoder_forward.1} parent=0 // pred_check_branch
    %23 = sbr.rel (0) target = $region5
  $region4: #{multiscale_decoder_forward.1} parent=0 // pred_region
    _
  $region5: #{multiscale_decoder_forward.1} parent=0 // pred_fallthru
    _
  // Predicated region
  $region6: #{multiscale_decoder_forward.1} parent=0 // pred_check
    _
  $region7: #{multiscale_decoder_forward.1} parent=0 // pred_check_branch
    %25 = sbr.rel (0) target = $region9
  $region8: #{multiscale_decoder_forward.1} parent=0 // pred_region
    _
  $region9: #{multiscale_decoder_forward.1} parent=0 // pred_fallthru
    _
  // Predicated region
  $region10: #{multiscale_decoder_forward.1} parent=0 // pred_check
    _
  $region11: #{multiscale_decoder_forward.1} parent=0 // pred_check_branch
    %27 = sbr.rel (0) target = $region13
  $region12: #{multiscale_decoder_forward.1} parent=0 // pred_region
    _
  $region13: #{multiscale_decoder_forward.1} parent=0 // pred_fallthru
    _
  // Predicated region
  $region14: #{multiscale_decoder_forward.1} parent=0 // pred_check
    _
  $region15: #{multiscale_decoder_forward.1} parent=0 // pred_check_branch
    %29 = sbr.rel (0) target = $region17
  $region16: #{multiscale_decoder_forward.1} parent=0 // pred_region
    _
  $region17: #{multiscale_decoder_forward.1} parent=0 // pred_fallthru
    _
  // Predicated region
  $region18: #{multiscale_decoder_forward.1} parent=0 // pred_check
    _
  $region19: #{multiscale_decoder_forward.1} parent=0 // pred_check_branch
    %31 = sbr.rel (0) target = $region21
  $region20: #{multiscale_decoder_forward.1} parent=0 // pred_region
    _
  $region21: #{multiscale_decoder_forward.1} parent=0 // pred_fallthru
    _
  // Predicated region
  $region22: #{multiscale_decoder_forward.1} parent=0 // pred_check
    _
  $region23: #{multiscale_decoder_forward.1} parent=0 // pred_check_branch
    %33 = sbr.rel (0) target = $region25
  $region24: #{multiscale_decoder_forward.1} parent=0 // pred_region
    _
  $region25: #{multiscale_decoder_forward.1} parent=0 // pred_fallthru
    _
  // Predicated region
  $region26: #{multiscale_decoder_forward.1} parent=0 // pred_check
    _
  $region27: #{multiscale_decoder_forward.1} parent=0 // pred_check_branch
    %35 = sbr.rel (0) target = $region29
  $region28: #{multiscale_decoder_forward.1} parent=0 // pred_region
    _
  $region29: #{multiscale_decoder_forward.1} parent=0 // pred_fallthru
    _
  // Predicated region
  $region30: #{multiscale_decoder_forward.1} parent=0 // pred_check
    _
  $region31: #{multiscale_decoder_forward.1} parent=0 // pred_check_branch
    %37 = sbr.rel (0) target = $region33
  $region32: #{multiscale_decoder_forward.1} parent=0 // pred_region
    _
  $region33: #{multiscale_decoder_forward.1} parent=0 // pred_fallthru
    _
  // Predicated region
  $region34: #{multiscale_decoder_forward.1} parent=0 // pred_check
    _
  $region35: #{multiscale_decoder_forward.1} parent=0 // pred_check_branch
    %39 = sbr.rel (0) target = $region37
  $region36: #{multiscale_decoder_forward.1} parent=0 // pred_region
    _
  $region37: #{multiscale_decoder_forward.1} parent=0 // pred_fallthru
    _
  // Predicated region
  $region38: #{multiscale_decoder_forward.1} parent=0 // pred_check
    _
  $region39: #{multiscale_decoder_forward.1} parent=0 // pred_check_branch
    %41 = sbr.rel (0) target = $region41
  $region40: #{multiscale_decoder_forward.1} parent=0 // pred_region
    _
  $region41: #{multiscale_decoder_forward.1} parent=0 // pred_fallthru
    _
  // Predicated region
  $region42: #{multiscale_decoder_forward.1} parent=0 // pred_check
    _
  $region43: #{multiscale_decoder_forward.1} parent=0 // pred_check_branch
    %43 = sbr.rel (0) target = $region45
  $region44: #{multiscale_decoder_forward.1} parent=0 // pred_region
    _
  $region45: #{multiscale_decoder_forward.1} parent=0 // pred_fallthru
    _
  // Predicated region
  $region46: #{multiscale_decoder_forward.1} parent=0 // pred_check
    _
  $region47: #{multiscale_decoder_forward.1} parent=0 // pred_check_branch
    %45 = sbr.rel (0) target = $region49
  $region48: #{multiscale_decoder_forward.1} parent=0 // pred_region
    _
  $region49: #{multiscale_decoder_forward.1} parent=0 // pred_fallthru
    _
  // Predicated region
  $region50: #{multiscale_decoder_forward.1} parent=0 // pred_check
    _
  $region51: #{multiscale_decoder_forward.1} parent=0 // pred_check_branch
    %47 = sbr.rel (0) target = $region53
  $region52: #{multiscale_decoder_forward.1} parent=0 // pred_region
    _
  $region53: #{multiscale_decoder_forward.1} parent=0 // pred_fallthru
    _
  // Predicated region
  $region54: #{multiscale_decoder_forward.1} parent=0 // pred_check
    _
  $region55: #{multiscale_decoder_forward.1} parent=0 // pred_check_branch
    %49 = sbr.rel (0) target = $region57
  $region56: #{multiscale_decoder_forward.1} parent=0 // pred_region
    _
  $region57: #{multiscale_decoder_forward.1} parent=0 // pred_fallthru
    _
  // Predicated region
  $region58: #{multiscale_decoder_forward.1} parent=0 // pred_check
    _
  $region59: #{multiscale_decoder_forward.1} parent=0 // pred_check_branch
    %51 = sbr.rel (0) target = $region61
  $region60: #{multiscale_decoder_forward.1} parent=0 // pred_region
    _
  $region61: #{multiscale_decoder_forward.1} parent=0 // pred_fallthru
    _
  // Predicated region
  $region62: #{multiscale_decoder_forward.1} parent=0 // pred_check
    _
  $region63: #{multiscale_decoder_forward.1} parent=0 // pred_check_branch
    %53 = sbr.rel (0) target = $region65
  $region64: #{multiscale_decoder_forward.1} parent=0 // pred_region
    _
  $region65: #{multiscale_decoder_forward.1} parent=0 // pred_fallthru
    _
  // Predicated region
  $region66: #{multiscale_decoder_forward.1} parent=0 // pred_check
    _
  $region67: #{multiscale_decoder_forward.1} parent=0 // pred_check_branch
    %55 = sbr.rel (0) target = $region69
  $region68: #{multiscale_decoder_forward.1} parent=0 // pred_region
    _
  $region69: #{multiscale_decoder_forward.1} parent=0 // pred_fallthru
    _
  %v56 = vld [vmem:[%s0] sm:$0xff]
  %v57 = vld [vmem:[%s1] sm:$0xff]
  %v58 = vld [vmem:[%s1 + $0x8] sm:$0xff]
  %v59 = vld [vmem:[%s3] sm:$0xff]
  %v60 = vld [vmem:[%s3 + $0x8] sm:$0xff]
  %vm61 = vcmask 130048
  %v63 = vsel %vm61, %v59, 0
  %v66 = vsel %vm61, %v60, 0
  %68 = vmatprep.subr.mxu0 0.0
  %69 = vmatpush1.msra.mxu0 %v57
  %70 = vmatprep.subr.mxu0 0.0
  %71 = vmatpush1.msra.mxu0 %v58
  %72 = vmatprep.subr.mxu0 0.0
  %73 = vmatpush1.msra.mxu0 0.0
  %74 = vmatprep.subr.mxu0 0.0
  %75 = vmatpush1.msra.mxu0 0.0
  %76 = vmatprep.subr.mxu0 0.0
  %77 = vmatpush1.msra.mxu0 0.0
  %78 = vmatprep.subr.mxu0 0.0
  %79 = vmatpush1.msra.mxu0 0.0
  %80 = vmatprep.subr.mxu0 0.0
  %81 = vmatpush1.msra.mxu0 0.0
  %82 = vmatprep.subr.mxu0 0.0
  %83 = vmatpush1.msra.mxu0 0.0
  %84 = vmatprep.subr.mxu0 0.0
  %85 = vmatpush1.msra.mxu0 0.0
  %86 = vmatprep.subr.mxu0 0.0
  %87 = vmatpush1.msra.mxu0 0.0
  %88 = vmatprep.subr.mxu0 0.0
  %89 = vmatpush1.msra.mxu0 0.0
  %90 = vmatprep.subr.mxu0 0.0
  %91 = vmatpush1.msra.mxu0 0.0
  %92 = vmatprep.subr.mxu0 0.0
  %93 = vmatpush1.msra.mxu0 0.0
  %94 = vmatprep.subr.mxu0 0.0
  %95 = vmatpush1.msra.mxu0 0.0
  %96 = vmatprep.subr.mxu0 0.0
  %97 = vmatpush1.msra.mxu0 0.0
  %98 = vmatprep.subr.mxu0 0.0
  %99 = vmatpush1.msra.mxu0 0.0
  %100 = vmatprep.subr.mxu0 0.0
  %101 = vmatpush1.msra.mxu0 0.0
  %102 = vmatprep.subr.mxu0 0.0
  %103 = vmatpush1.msra.mxu0 0.0
  %104 = vmatprep.subr.mxu0 0.0
  %105 = vmatpush1.msra.mxu0 0.0
  %106 = vmatprep.subr.mxu0 0.0
  %107 = vmatpush1.msra.mxu0 0.0
  %108 = vmatprep.subr.mxu0 0.0
  %109 = vmatpush1.msra.mxu0 0.0
  %110 = vmatprep.subr.mxu0 0.0
  %111 = vmatpush1.msra.mxu0 0.0
  %112 = vmatprep.subr.mxu0 0.0
  %113 = vmatpush1.msra.mxu0 0.0
  %114 = vmatprep.subr.mxu0 0.0
  %115 = vmatpush1.msra.mxu0 0.0
  %116 = vmatprep.subr.mxu0 0.0
  %117 = vmatpush1.msra.mxu0 0.0
  %118 = vmatprep.subr.mxu0 0.0
  %119 = vmatpush1.msra.mxu0 0.0
  %120 = vmatprep.subr.mxu0 0.0
  %121 = vmatpush1.msra.mxu0 0.0
  %122 = vmatprep.subr.mxu0 0.0
  %123 = vmatpush1.msra.mxu0 0.0
  %124 = vmatprep.subr.mxu0 0.0
  %125 = vmatpush1.msra.mxu0 0.0
  %126 = vmatprep.subr.mxu0 0.0
  %127 = vmatpush1.msra.mxu0 0.0
  %128 = vmatprep.subr.mxu0 0.0
  %129 = vmatpush1.msra.mxu0 0.0
  %130 = vmatprep.subr.mxu0 0.0
  %131 = vmatpush1.msra.mxu0 0.0
  %132 = vmatprep.mubr.f32.mxu0 0.0
  %133 = vmatmul.mubr.f32.gmra.mrb[0].mxu0 %v63
  %v134 = vpop.f32.mrb[0].mxu0
  %v135 = vadd.f32 0.0, %v134
  %v136 = vpop.f32.mrb[0].mxu0
  %137 = vmatprep.mubr.f32.mxu0 0.0
  %138 = vmatmul.mubr.f32.gmra.mrb[0].mxu0 %v66
  %v139 = vpop.f32.mrb[0].mxu0
  %v140 = vadd.f32 0.0, %v139
  %v141 = vpop.f32.mrb[0].mxu0
  %142 = vdwg.mxu0
  %v143 = vld [vmem:[%s4] sm:$0xff]
  %v144 = vld [vmem:[%s4 + $0x8] sm:$0xff]
  %v145 = vld [vmem:[%s4 + $0x10] sm:$0xff]
  %v146 = vld [vmem:[%s4 + $0x18] sm:$0xff]
  %v147 = vld [vmem:[%s4 + $0x20] sm:$0xff]
  %v148 = vld [vmem:[%s4 + $0x28] sm:$0xff]
  %v149 = vld [vmem:[%s4 + $0x30] sm:$0xff]
  %v150 = vld [vmem:[%s4 + $0x38] sm:$0xff]
  %v151 = vld [vmem:[%s5] sm:$0xff]
  %v152 = vld [vmem:[%s5 + $0x8] sm:$0xff]
  %vm153 = vcmask 64512
  %v155 = vsel %vm153, %v151, 0
  %v158 = vsel %vm153, %v152, 0
  %160 = vmatprep.subr.mxu0 0.0
  %161 = vmatpush1.msra.mxu0 %v56
  %162 = vmatprep.subr.mxu0 0.0
  %163 = vmatpush1.msra.mxu0 0.0
  %164 = vmatprep.subr.mxu0 0.0
  %165 = vmatpush1.msra.mxu0 0.0
  %166 = vmatprep.subr.mxu0 0.0
  %167 = vmatpush1.msra.mxu0 0.0
  %168 = vmatprep.subr.mxu0 0.0
  %169 = vmatpush1.msra.mxu0 0.0
  %170 = vmatprep.subr.mxu0 0.0
  %171 = vmatpush1.msra.mxu0 0.0
  %172 = vmatprep.subr.mxu0 0.0
  %173 = vmatpush1.msra.mxu0 0.0
  %174 = vmatprep.subr.mxu0 0.0
  %175 = vmatpush1.msra.mxu0 0.0
  %176 = vmatprep.subr.mxu0 0.0
  %177 = vmatpush1.msra.mxu0 0.0
  %178 = vmatprep.subr.mxu0 0.0
  %179 = vmatpush1.msra.mxu0 0.0
  %180 = vmatprep.subr.mxu0 0.0
  %181 = vmatpush1.msra.mxu0 0.0
  %182 = vmatprep.subr.mxu0 0.0
  %183 = vmatpush1.msra.mxu0 0.0
  %184 = vmatprep.subr.mxu0 0.0
  %185 = vmatpush1.msra.mxu0 0.0
  %186 = vmatprep.subr.mxu0 0.0
  %187 = vmatpush1.msra.mxu0 0.0
  %188 = vmatprep.subr.mxu0 0.0
  %189 = vmatpush1.msra.mxu0 0.0
  %190 = vmatprep.subr.mxu0 0.0
  %191 = vmatpush1.msra.mxu0 0.0
  %192 = vmatprep.subr.mxu0 0.0
  %193 = vmatpush1.msra.mxu0 0.0
  %194 = vmatprep.subr.mxu0 0.0
  %195 = vmatpush1.msra.mxu0 0.0
  %196 = vmatprep.subr.mxu0 0.0
  %197 = vmatpush1.msra.mxu0 0.0
  %198 = vmatprep.subr.mxu0 0.0
  %199 = vmatpush1.msra.mxu0 0.0
  %200 = vmatprep.subr.mxu0 0.0
  %201 = vmatpush1.msra.mxu0 0.0
  %202 = vmatprep.subr.mxu0 0.0
  %203 = vmatpush1.msra.mxu0 0.0
  %204 = vmatprep.subr.mxu0 0.0
  %205 = vmatpush1.msra.mxu0 0.0
  %206 = vmatprep.subr.mxu0 0.0
  %207 = vmatpush1.msra.mxu0 0.0
  %208 = vmatprep.subr.mxu0 0.0
  %209 = vmatpush1.msra.mxu0 0.0
  %210 = vmatprep.subr.mxu0 0.0
  %211 = vmatpush1.msra.mxu0 0.0
  %212 = vmatprep.subr.mxu0 0.0
  %213 = vmatpush1.msra.mxu0 0.0
  %214 = vmatprep.subr.mxu0 0.0
  %215 = vmatpush1.msra.mxu0 0.0
  %216 = vmatprep.subr.mxu0 0.0
  %217 = vmatpush1.msra.mxu0 0.0
  %218 = vmatprep.subr.mxu0 0.0
  %219 = vmatpush1.msra.mxu0 0.0
  %220 = vmatprep.subr.mxu0 0.0
  %221 = vmatpush1.msra.mxu0 0.0
  %222 = vmatprep.subr.mxu0 0.0
  %223 = vmatpush1.msra.mxu0 0.0
  %224 = vmatprep.mubr.f32.mxu0 0.0
  %225 = vmatmul.mubr.f32.gmra.mrb[0].mxu0 %v155
  %v226 = vpop.f32.mrb[0].mxu0
  %v227 = vadd.f32 0.0, %v226
  %v228 = vpop.f32.mrb[0].mxu0
  %229 = vmatprep.mubr.f32.mxu0 0.0
  %230 = vmatmul.mubr.f32.gmra.mrb[0].mxu0 %v158
  %v231 = vpop.f32.mrb[0].mxu0
  %v232 = vadd.f32 0.0, %v231
  %v233 = vpop.f32.mrb[0].mxu0
  %234 = vdwg.mxu0
  %v235 = vld [vmem:[%s6] sm:$0xff]
  %v236 = vld [vmem:[%s6 + $0x8] sm:$0xff]
  %v237 = vld [vmem:[%s6 + $0x10] sm:$0xff]
  %v238 = vld [vmem:[%s6 + $0x18] sm:$0xff]
  %v239 = vld [vmem:[%s6 + $0x20] sm:$0xff]
  %v240 = vld [vmem:[%s6 + $0x28] sm:$0xff]
  %v241 = vld [vmem:[%s6 + $0x30] sm:$0xff]
  %v242 = vld [vmem:[%s6 + $0x38] sm:$0xff]
  %vm243 = vcmask 523264
  %v245 = vsel %vm243, %v227, 0
  %v248 = vsel %vm243, %v232, 0
  %250 = vmatprep.subr.mxu0 0.0
  %251 = vmatpush1.msra.mxu0 %v235
  %252 = vmatprep.subr.mxu0 0.0
  %253 = vmatpush1.msra.mxu0 %v236
  %254 = vmatprep.subr.mxu0 0.0
  %255 = vmatpush1.msra.mxu0 %v237
  %256 = vmatprep.subr.mxu0 0.0
  %257 = vmatpush1.msra.mxu0 %v238
  %258 = vmatprep.subr.mxu0 0.0
  %259 = vmatpush1.msra.mxu0 %v239
  %260 = vmatprep.subr.mxu0 0.0
  %261 = vmatpush1.msra.mxu0 %v240
  %262 = vmatprep.subr.mxu0 0.0
  %263 = vmatpush1.msra.mxu0 %v241
  %264 = vmatprep.subr.mxu0 0.0
  %265 = vmatpush1.msra.mxu0 %v242
  %266 = vmatprep.subr.mxu0 0.0
  %267 = vmatpush1.msra.mxu0 0.0
  %268 = vmatprep.subr.mxu0 0.0
  %269 = vmatpush1.msra.mxu0 0.0
  %270 = vmatprep.subr.mxu0 0.0
  %271 = vmatpush1.msra.mxu0 0.0
  %272 = vmatprep.subr.mxu0 0.0
  %273 = vmatpush1.msra.mxu0 0.0
  %274 = vmatprep.subr.mxu0 0.0
  %275 = vmatpush1.msra.mxu0 0.0
  %276 = vmatprep.subr.mxu0 0.0
  %277 = vmatpush1.msra.mxu0 0.0
  %278 = vmatprep.subr.mxu0 0.0
  %279 = vmatpush1.msra.mxu0 0.0
  %280 = vmatprep.subr.mxu0 0.0
  %281 = vmatpush1.msra.mxu0 0.0
  %282 = vmatprep.subr.mxu0 0.0
  %283 = vmatpush1.msra.mxu0 0.0
  %284 = vmatprep.subr.mxu0 0.0
  %285 = vmatpush1.msra.mxu0 0.0
  %286 = vmatprep.subr.mxu0 0.0
  %287 = vmatpush1.msra.mxu0 0.0
  %288 = vmatprep.subr.mxu0 0.0
  %289 = vmatpush1.msra.mxu0 0.0
  %290 = vmatprep.subr.mxu0 0.0
  %291 = vmatpush1.msra.mxu0 0.0
  %292 = vmatprep.subr.mxu0 0.0
  %293 = vmatpush1.msra.mxu0 0.0
  %294 = vmatprep.subr.mxu0 0.0
  %295 = vmatpush1.msra.mxu0 0.0
  %296 = vmatprep.subr.mxu0 0.0
  %297 = vmatpush1.msra.mxu0 0.0
  %298 = vmatprep.subr.mxu0 0.0
  %299 = vmatpush1.msra.mxu0 0.0
  %300 = vmatprep.subr.mxu0 0.0
  %301 = vmatpush1.msra.mxu0 0.0
  %302 = vmatprep.subr.mxu0 0.0
  %303 = vmatpush1.msra.mxu0 0.0
  %304 = vmatprep.subr.mxu0 0.0
  %305 = vmatpush1.msra.mxu0 0.0
  %306 = vmatprep.subr.mxu0 0.0
  %307 = vmatpush1.msra.mxu0 0.0
  %308 = vmatprep.subr.mxu0 0.0
  %309 = vmatpush1.msra.mxu0 0.0
  %310 = vmatprep.subr.mxu0 0.0
  %311 = vmatpush1.msra.mxu0 0.0
  %312 = vmatprep.subr.mxu0 0.0
  %313 = vmatpush1.msra.mxu0 0.0
  %314 = vmatprep.mubr.f32.mxu0 0.0
  %315 = vmatmul.mubr.f32.gmra.mrb[0].mxu0 %v245
  %v316 = vpop.f32.mrb[0].mxu0
  %v317 = vadd.f32 0.0, %v316
  %v318 = vpop.f32.mrb[0].mxu0
  %319 = vmatprep.mubr.f32.mxu0 0.0
  %320 = vmatmul.mubr.f32.gmra.mrb[0].mxu0 %v248
  %v321 = vpop.f32.mrb[0].mxu0
  %v322 = vadd.f32 0.0, %v321
  %v323 = vpop.f32.mrb[0].mxu0
  %324 = vdwg.mxu0
  %v326 = vsel %vm243, %v135, 0
  %v329 = vsel %vm243, %v140, 0
  %331 = vmatprep.subr.mxu0 0.0
  %332 = vmatpush1.msra.mxu0 %v143
  %333 = vmatprep.subr.mxu0 0.0
  %334 = vmatpush1.msra.mxu0 %v144
  %335 = vmatprep.subr.mxu0 0.0
  %336 = vmatpush1.msra.mxu0 %v145
  %337 = vmatprep.subr.mxu0 0.0
  %338 = vmatpush1.msra.mxu0 %v146
  %339 = vmatprep.subr.mxu0 0.0
  %340 = vmatpush1.msra.mxu0 %v147
  %341 = vmatprep.subr.mxu0 0.0
  %342 = vmatpush1.msra.mxu0 %v148
  %343 = vmatprep.subr.mxu0 0.0
  %344 = vmatpush1.msra.mxu0 %v149
  %345 = vmatprep.subr.mxu0 0.0
  %346 = vmatpush1.msra.mxu0 %v150
  %347 = vmatprep.subr.mxu0 0.0
  %348 = vmatpush1.msra.mxu0 0.0
  %349 = vmatprep.subr.mxu0 0.0
  %350 = vmatpush1.msra.mxu0 0.0
  %351 = vmatprep.subr.mxu0 0.0
  %352 = vmatpush1.msra.mxu0 0.0
  %353 = vmatprep.subr.mxu0 0.0
  %354 = vmatpush1.msra.mxu0 0.0
  %355 = vmatprep.subr.mxu0 0.0
  %356 = vmatpush1.msra.mxu0 0.0
  %357 = vmatprep.subr.mxu0 0.0
  %358 = vmatpush1.msra.mxu0 0.0
  %359 = vmatprep.subr.mxu0 0.0
  %360 = vmatpush1.msra.mxu0 0.0
  %361 = vmatprep.subr.mxu0 0.0
  %362 = vmatpush1.msra.mxu0 0.0
  %363 = vmatprep.subr.mxu0 0.0
  %364 = vmatpush1.msra.mxu0 0.0
  %365 = vmatprep.subr.mxu0 0.0
  %366 = vmatpush1.msra.mxu0 0.0
  %367 = vmatprep.subr.mxu0 0.0
  %368 = vmatpush1.msra.mxu0 0.0
  %369 = vmatprep.subr.mxu0 0.0
  %370 = vmatpush1.msra.mxu0 0.0
  %371 = vmatprep.subr.mxu0 0.0
  %372 = vmatpush1.msra.mxu0 0.0
  %373 = vmatprep.subr.mxu0 0.0
  %374 = vmatpush1.msra.mxu0 0.0
  %375 = vmatprep.subr.mxu0 0.0
  %376 = vmatpush1.msra.mxu0 0.0
  %377 = vmatprep.subr.mxu0 0.0
  %378 = vmatpush1.msra.mxu0 0.0
  %379 = vmatprep.subr.mxu0 0.0
  %380 = vmatpush1.msra.mxu0 0.0
  %381 = vmatprep.subr.mxu0 0.0
  %382 = vmatpush1.msra.mxu0 0.0
  %383 = vmatprep.subr.mxu0 0.0
  %384 = vmatpush1.msra.mxu0 0.0
  %385 = vmatprep.subr.mxu0 0.0
  %386 = vmatpush1.msra.mxu0 0.0
  %387 = vmatprep.subr.mxu0 0.0
  %388 = vmatpush1.msra.mxu0 0.0
  %389 = vmatprep.subr.mxu0 0.0
  %390 = vmatpush1.msra.mxu0 0.0
  %391 = vmatprep.subr.mxu0 0.0
  %392 = vmatpush1.msra.mxu0 0.0
  %393 = vmatprep.subr.mxu0 0.0
  %394 = vmatpush1.msra.mxu0 0.0
  %395 = vmatprep.mubr.f32.mxu0 0.0
  %396 = vmatmul.mubr.f32.gmra.mrb[0].mxu0 %v326
  %v397 = vpop.f32.mrb[0].mxu0
  %v398 = vadd.f32 %v317, %v397
  %v399 = vpop.f32.mrb[0].mxu0
  %400 = vmatprep.mubr.f32.mxu0 0.0
  %401 = vmatmul.mubr.f32.gmra.mrb[0].mxu0 %v329
  %v402 = vpop.f32.mrb[0].mxu0
  %v403 = vadd.f32 %v322, %v402
  %v404 = vpop.f32.mrb[0].mxu0
  %405 = vdwg.mxu0
  %s406 = scalar_lea.vmem %s3, 16
  %v407 = vld [vmem:[%s406] sm:$0xff]
  %v408 = vld [vmem:[%s406 + $0x8] sm:$0xff]
  %v410 = vsel %vm61, %v407, 0
  %v413 = vsel %vm61, %v408, 0
  %415 = vmatprep.subr.mxu0 0.0
  %416 = vmatpush1.msra.mxu0 %v57
  %417 = vmatprep.subr.mxu0 0.0
  %418 = vmatpush1.msra.mxu0 %v58
  %419 = vmatprep.subr.mxu0 0.0
  %420 = vmatpush1.msra.mxu0 0.0
  %421 = vmatprep.subr.mxu0 0.0
  %422 = vmatpush1.msra.mxu0 0.0
  %423 = vmatprep.subr.mxu0 0.0
  %424 = vmatpush1.msra.mxu0 0.0
  %425 = vmatprep.subr.mxu0 0.0
  %426 = vmatpush1.msra.mxu0 0.0
  %427 = vmatprep.subr.mxu0 0.0
  %428 = vmatpush1.msra.mxu0 0.0
  %429 = vmatprep.subr.mxu0 0.0
  %430 = vmatpush1.msra.mxu0 0.0
  %431 = vmatprep.subr.mxu0 0.0
  %432 = vmatpush1.msra.mxu0 0.0
  %433 = vmatprep.subr.mxu0 0.0
  %434 = vmatpush1.msra.mxu0 0.0
  %435 = vmatprep.subr.mxu0 0.0
  %436 = vmatpush1.msra.mxu0 0.0
  %437 = vmatprep.subr.mxu0 0.0
  %438 = vmatpush1.msra.mxu0 0.0
  %439 = vmatprep.subr.mxu0 0.0
  %440 = vmatpush1.msra.mxu0 0.0
  %441 = vmatprep.subr.mxu0 0.0
  %442 = vmatpush1.msra.mxu0 0.0
  %443 = vmatprep.subr.mxu0 0.0
  %444 = vmatpush1.msra.mxu0 0.0
  %445 = vmatprep.subr.mxu0 0.0
  %446 = vmatpush1.msra.mxu0 0.0
  %447 = vmatprep.subr.mxu0 0.0
  %448 = vmatpush1.msra.mxu0 0.0
  %449 = vmatprep.subr.mxu0 0.0
  %450 = vmatpush1.msra.mxu0 0.0
  %451 = vmatprep.subr.mxu0 0.0
  %452 = vmatpush1.msra.mxu0 0.0
  %453 = vmatprep.subr.mxu0 0.0
  %454 = vmatpush1.msra.mxu0 0.0
  %455 = vmatprep.subr.mxu0 0.0
  %456 = vmatpush1.msra.mxu0 0.0
  %457 = vmatprep.subr.mxu0 0.0
  %458 = vmatpush1.msra.mxu0 0.0
  %459 = vmatprep.subr.mxu0 0.0
  %460 = vmatpush1.msra.mxu0 0.0
  %461 = vmatprep.subr.mxu0 0.0
  %462 = vmatpush1.msra.mxu0 0.0
  %463 = vmatprep.subr.mxu0 0.0
  %464 = vmatpush1.msra.mxu0 0.0
  %465 = vmatprep.subr.mxu0 0.0
  %466 = vmatpush1.msra.mxu0 0.0
  %467 = vmatprep.subr.mxu0 0.0
  %468 = vmatpush1.msra.mxu0 0.0
  %469 = vmatprep.subr.mxu0 0.0
  %470 = vmatpush1.msra.mxu0 0.0
  %471 = vmatprep.subr.mxu0 0.0
  %472 = vmatpush1.msra.mxu0 0.0
  %473 = vmatprep.subr.mxu0 0.0
  %474 = vmatpush1.msra.mxu0 0.0
  %475 = vmatprep.subr.mxu0 0.0
  %476 = vmatpush1.msra.mxu0 0.0
  %477 = vmatprep.subr.mxu0 0.0
  %478 = vmatpush1.msra.mxu0 0.0
  %479 = vmatprep.mubr.f32.mxu0 0.0
  %480 = vmatmul.mubr.f32.gmra.mrb[0].mxu0 %v410
  %v481 = vpop.f32.mrb[0].mxu0
  %v482 = vadd.f32 0.0, %v481
  %v483 = vpop.f32.mrb[0].mxu0
  %484 = vmatprep.mubr.f32.mxu0 0.0
  %485 = vmatmul.mubr.f32.gmra.mrb[0].mxu0 %v413
  %v486 = vpop.f32.mrb[0].mxu0
  %v487 = vadd.f32 0.0, %v486
  %v488 = vpop.f32.mrb[0].mxu0
  %489 = vdwg.mxu0
  %s490 = scalar_lea.vmem %s4, 64
  %v491 = vld [vmem:[%s490] sm:$0xff]
  %v492 = vld [vmem:[%s490 + $0x8] sm:$0xff]
  %v493 = vld [vmem:[%s490 + $0x10] sm:$0xff]
  %v494 = vld [vmem:[%s490 + $0x18] sm:$0xff]
  %v495 = vld [vmem:[%s490 + $0x20] sm:$0xff]
  %v496 = vld [vmem:[%s490 + $0x28] sm:$0xff]
  %v497 = vld [vmem:[%s490 + $0x30] sm:$0xff]
  %v498 = vld [vmem:[%s490 + $0x38] sm:$0xff]
  %v500 = vsel %vm243, %v482, 0
  %v503 = vsel %vm243, %v487, 0
  %505 = vmatprep.subr.mxu0 0.0
  %506 = vmatpush1.msra.mxu0 %v491
  %507 = vmatprep.subr.mxu0 0.0
  %508 = vmatpush1.msra.mxu0 %v492
  %509 = vmatprep.subr.mxu0 0.0
  %510 = vmatpush1.msra.mxu0 %v493
  %511 = vmatprep.subr.mxu0 0.0
  %512 = vmatpush1.msra.mxu0 %v494
  %513 = vmatprep.subr.mxu0 0.0
  %514 = vmatpush1.msra.mxu0 %v495
  %515 = vmatprep.subr.mxu0 0.0
  %516 = vmatpush1.msra.mxu0 %v496
  %517 = vmatprep.subr.mxu0 0.0
  %518 = vmatpush1.msra.mxu0 %v497
  %519 = vmatprep.subr.mxu0 0.0
  %520 = vmatpush1.msra.mxu0 %v498
  %521 = vmatprep.subr.mxu0 0.0
  %522 = vmatpush1.msra.mxu0 0.0
  %523 = vmatprep.subr.mxu0 0.0
  %524 = vmatpush1.msra.mxu0 0.0
  %525 = vmatprep.subr.mxu0 0.0
  %526 = vmatpush1.msra.mxu0 0.0
  %527 = vmatprep.subr.mxu0 0.0
  %528 = vmatpush1.msra.mxu0 0.0
  %529 = vmatprep.subr.mxu0 0.0
  %530 = vmatpush1.msra.mxu0 0.0
  %531 = vmatprep.subr.mxu0 0.0
  %532 = vmatpush1.msra.mxu0 0.0
  %533 = vmatprep.subr.mxu0 0.0
  %534 = vmatpush1.msra.mxu0 0.0
  %535 = vmatprep.subr.mxu0 0.0
  %536 = vmatpush1.msra.mxu0 0.0
  %537 = vmatprep.subr.mxu0 0.0
  %538 = vmatpush1.msra.mxu0 0.0
  %539 = vmatprep.subr.mxu0 0.0
  %540 = vmatpush1.msra.mxu0 0.0
  %541 = vmatprep.subr.mxu0 0.0
  %542 = vmatpush1.msra.mxu0 0.0
  %543 = vmatprep.subr.mxu0 0.0
  %544 = vmatpush1.msra.mxu0 0.0
  %545 = vmatprep.subr.mxu0 0.0
  %546 = vmatpush1.msra.mxu0 0.0
  %547 = vmatprep.subr.mxu0 0.0
  %548 = vmatpush1.msra.mxu0 0.0
  %549 = vmatprep.subr.mxu0 0.0
  %550 = vmatpush1.msra.mxu0 0.0
  %551 = vmatprep.subr.mxu0 0.0
  %552 = vmatpush1.msra.mxu0 0.0
  %553 = vmatprep.subr.mxu0 0.0
  %554 = vmatpush1.msra.mxu0 0.0
  %555 = vmatprep.subr.mxu0 0.0
  %556 = vmatpush1.msra.mxu0 0.0
  %557 = vmatprep.subr.mxu0 0.0
  %558 = vmatpush1.msra.mxu0 0.0
  %559 = vmatprep.subr.mxu0 0.0
  %560 = vmatpush1.msra.mxu0 0.0
  %561 = vmatprep.subr.mxu0 0.0
  %562 = vmatpush1.msra.mxu0 0.0
  %563 = vmatprep.subr.mxu0 0.0
  %564 = vmatpush1.msra.mxu0 0.0
  %565 = vmatprep.subr.mxu0 0.0
  %566 = vmatpush1.msra.mxu0 0.0
  %567 = vmatprep.subr.mxu0 0.0
  %568 = vmatpush1.msra.mxu0 0.0
  %569 = vmatprep.mubr.f32.mxu0 0.0
  %570 = vmatmul.mubr.f32.gmra.mrb[0].mxu0 %v500
  %v571 = vpop.f32.mrb[0].mxu0
  %v572 = vadd.f32 0.0, %v571
  %v573 = vpop.f32.mrb[0].mxu0
  %574 = vmatprep.mubr.f32.mxu0 0.0
  %575 = vmatmul.mubr.f32.gmra.mrb[0].mxu0 %v503
  %v576 = vpop.f32.mrb[0].mxu0
  %v577 = vadd.f32 0.0, %v576
  %v578 = vpop.f32.mrb[0].mxu0
  %579 = vdwg.mxu0
  %v580 = vadd.f32 %v398, %v572
  %v581 = vadd.f32 %v403, %v577
  %s582 = scalar_lea.vmem %s5, 16
  %v583 = vld [vmem:[%s582] sm:$0xff]
  %v584 = vld [vmem:[%s582 + $0x8] sm:$0xff]
  %v586 = vsel %vm153, %v583, 0
  %v589 = vsel %vm153, %v584, 0
  %591 = vmatprep.subr.mxu0 0.0
  %592 = vmatpush1.msra.mxu0 %v56
  %593 = vmatprep.subr.mxu0 0.0
  %594 = vmatpush1.msra.mxu0 0.0
  %595 = vmatprep.subr.mxu0 0.0
  %596 = vmatpush1.msra.mxu0 0.0
  %597 = vmatprep.subr.mxu0 0.0
  %598 = vmatpush1.msra.mxu0 0.0
  %599 = vmatprep.subr.mxu0 0.0
  %600 = vmatpush1.msra.mxu0 0.0
  %601 = vmatprep.subr.mxu0 0.0
  %602 = vmatpush1.msra.mxu0 0.0
  %603 = vmatprep.subr.mxu0 0.0
  %604 = vmatpush1.msra.mxu0 0.0
  %605 = vmatprep.subr.mxu0 0.0
  %606 = vmatpush1.msra.mxu0 0.0
  %607 = vmatprep.subr.mxu0 0.0
  %608 = vmatpush1.msra.mxu0 0.0
  %609 = vmatprep.subr.mxu0 0.0
  %610 = vmatpush1.msra.mxu0 0.0
  %611 = vmatprep.subr.mxu0 0.0
  %612 = vmatpush1.msra.mxu0 0.0
  %613 = vmatprep.subr.mxu0 0.0
  %614 = vmatpush1.msra.mxu0 0.0
  %615 = vmatprep.subr.mxu0 0.0
  %616 = vmatpush1.msra.mxu0 0.0
  %617 = vmatprep.subr.mxu0 0.0
  %618 = vmatpush1.msra.mxu0 0.0
  %619 = vmatprep.subr.mxu0 0.0
  %620 = vmatpush1.msra.mxu0 0.0
  %621 = vmatprep.subr.mxu0 0.0
  %622 = vmatpush1.msra.mxu0 0.0
  %623 = vmatprep.subr.mxu0 0.0
  %624 = vmatpush1.msra.mxu0 0.0
  %625 = vmatprep.subr.mxu0 0.0
  %626 = vmatpush1.msra.mxu0 0.0
  %627 = vmatprep.subr.mxu0 0.0
  %628 = vmatpush1.msra.mxu0 0.0
  %629 = vmatprep.subr.mxu0 0.0
  %630 = vmatpush1.msra.mxu0 0.0
  %631 = vmatprep.subr.mxu0 0.0
  %632 = vmatpush1.msra.mxu0 0.0
  %633 = vmatprep.subr.mxu0 0.0
  %634 = vmatpush1.msra.mxu0 0.0
  %635 = vmatprep.subr.mxu0 0.0
  %636 = vmatpush1.msra.mxu0 0.0
  %637 = vmatprep.subr.mxu0 0.0
  %638 = vmatpush1.msra.mxu0 0.0
  %639 = vmatprep.subr.mxu0 0.0
  %640 = vmatpush1.msra.mxu0 0.0
  %641 = vmatprep.subr.mxu0 0.0
  %642 = vmatpush1.msra.mxu0 0.0
  %643 = vmatprep.subr.mxu0 0.0
  %644 = vmatpush1.msra.mxu0 0.0
  %645 = vmatprep.subr.mxu0 0.0
  %646 = vmatpush1.msra.mxu0 0.0
  %647 = vmatprep.subr.mxu0 0.0
  %648 = vmatpush1.msra.mxu0 0.0
  %649 = vmatprep.subr.mxu0 0.0
  %650 = vmatpush1.msra.mxu0 0.0
  %651 = vmatprep.subr.mxu0 0.0
  %652 = vmatpush1.msra.mxu0 0.0
  %653 = vmatprep.subr.mxu0 0.0
  %654 = vmatpush1.msra.mxu0 0.0
  %655 = vmatprep.mubr.f32.mxu0 0.0
  %656 = vmatmul.mubr.f32.gmra.mrb[0].mxu0 %v586
  %v657 = vpop.f32.mrb[0].mxu0
  %v658 = vadd.f32 0.0, %v657
  %v659 = vpop.f32.mrb[0].mxu0
  %660 = vmatprep.mubr.f32.mxu0 0.0
  %661 = vmatmul.mubr.f32.gmra.mrb[0].mxu0 %v589
  %v662 = vpop.f32.mrb[0].mxu0
  %v663 = vadd.f32 0.0, %v662
  %v664 = vpop.f32.mrb[0].mxu0
  %665 = vdwg.mxu0
  %s666 = scalar_lea.vmem %s6, 64
  %v667 = vld [vmem:[%s666] sm:$0xff]
  %v668 = vld [vmem:[%s666 + $0x8] sm:$0xff]
  %v669 = vld [vmem:[%s666 + $0x10] sm:$0xff]
  %v670 = vld [vmem:[%s666 + $0x18] sm:$0xff]
  %v671 = vld [vmem:[%s666 + $0x20] sm:$0xff]
  %v672 = vld [vmem:[%s666 + $0x28] sm:$0xff]
  %v673 = vld [vmem:[%s666 + $0x30] sm:$0xff]
  %v674 = vld [vmem:[%s666 + $0x38] sm:$0xff]
  %v676 = vsel %vm243, %v658, 0
  %v679 = vsel %vm243, %v663, 0
  %681 = vmatprep.subr.mxu0 0.0
  %682 = vmatpush1.msra.mxu0 %v667
  %683 = vmatprep.subr.mxu0 0.0
  %684 = vmatpush1.msra.mxu0 %v668
  %685 = vmatprep.subr.mxu0 0.0
  %686 = vmatpush1.msra.mxu0 %v669
  %687 = vmatprep.subr.mxu0 0.0
  %688 = vmatpush1.msra.mxu0 %v670
  %689 = vmatprep.subr.mxu0 0.0
  %690 = vmatpush1.msra.mxu0 %v671
  %691 = vmatprep.subr.mxu0 0.0
  %692 = vmatpush1.msra.mxu0 %v672
  %693 = vmatprep.subr.mxu0 0.0
  %694 = vmatpush1.msra.mxu0 %v673
  %695 = vmatprep.subr.mxu0 0.0
  %696 = vmatpush1.msra.mxu0 %v674
  %697 = vmatprep.subr.mxu0 0.0
  %698 = vmatpush1.msra.mxu0 0.0
  %699 = vmatprep.subr.mxu0 0.0
  %700 = vmatpush1.msra.mxu0 0.0
  %701 = vmatprep.subr.mxu0 0.0
  %702 = vmatpush1.msra.mxu0 0.0
  %703 = vmatprep.subr.mxu0 0.0
  %704 = vmatpush1.msra.mxu0 0.0
  %705 = vmatprep.subr.mxu0 0.0
  %706 = vmatpush1.msra.mxu0 0.0
  %707 = vmatprep.subr.mxu0 0.0
  %708 = vmatpush1.msra.mxu0 0.0
  %709 = vmatprep.subr.mxu0 0.0
  %710 = vmatpush1.msra.mxu0 0.0
  %711 = vmatprep.subr.mxu0 0.0
  %712 = vmatpush1.msra.mxu0 0.0
  %713 = vmatprep.subr.mxu0 0.0
  %714 = vmatpush1.msra.mxu0 0.0
  %715 = vmatprep.subr.mxu0 0.0
  %716 = vmatpush1.msra.mxu0 0.0
  %717 = vmatprep.subr.mxu0 0.0
  %718 = vmatpush1.msra.mxu0 0.0
  %719 = vmatprep.subr.mxu0 0.0
  %720 = vmatpush1.msra.mxu0 0.0
  %721 = vmatprep.subr.mxu0 0.0
  %722 = vmatpush1.msra.mxu0 0.0
  %723 = vmatprep.subr.mxu0 0.0
  %724 = vmatpush1.msra.mxu0 0.0
  %725 = vmatprep.subr.mxu0 0.0
  %726 = vmatpush1.msra.mxu0 0.0
  %727 = vmatprep.subr.mxu0 0.0
  %728 = vmatpush1.msra.mxu0 0.0
  %729 = vmatprep.subr.mxu0 0.0
  %730 = vmatpush1.msra.mxu0 0.0
  %731 = vmatprep.subr.mxu0 0.0
  %732 = vmatpush1.msra.mxu0 0.0
  %733 = vmatprep.subr.mxu0 0.0
  %734 = vmatpush1.msra.mxu0 0.0
  %735 = vmatprep.subr.mxu0 0.0
  %736 = vmatpush1.msra.mxu0 0.0
  %737 = vmatprep.subr.mxu0 0.0
  %738 = vmatpush1.msra.mxu0 0.0
  %739 = vmatprep.subr.mxu0 0.0
  %740 = vmatpush1.msra.mxu0 0.0
  %741 = vmatprep.subr.mxu0 0.0
  %742 = vmatpush1.msra.mxu0 0.0
  %743 = vmatprep.subr.mxu0 0.0
  %744 = vmatpush1.msra.mxu0 0.0
  %745 = vmatprep.mubr.f32.mxu0 0.0
  %746 = vmatmul.mubr.f32.gmra.mrb[0].mxu0 %v676
  %v747 = vpop.f32.mrb[0].mxu0
  %v748 = vadd.f32 0.0, %v747
  %v749 = vpop.f32.mrb[0].mxu0
  %750 = vmatprep.mubr.f32.mxu0 0.0
  %751 = vmatmul.mubr.f32.gmra.mrb[0].mxu0 %v679
  %v752 = vpop.f32.mrb[0].mxu0
  %v753 = vadd.f32 0.0, %v752
  %v754 = vpop.f32.mrb[0].mxu0
  %755 = vdwg.mxu0
  %v756 = vadd.f32 %v580, %v748
  %v757 = vadd.f32 %v581, %v753
  %s758 = scalar_lea.vmem %s3, 32
  %v759 = vld [vmem:[%s758] sm:$0xff]
  %v760 = vld [vmem:[%s758 + $0x8] sm:$0xff]
  %v762 = vsel %vm61, %v759, 0
  %v765 = vsel %vm61, %v760, 0
  %767 = vmatprep.subr.mxu0 0.0
  %768 = vmatpush1.msra.mxu0 %v57
  %769 = vmatprep.subr.mxu0 0.0
  %770 = vmatpush1.msra.mxu0 %v58
  %771 = vmatprep.subr.mxu0 0.0
  %772 = vmatpush1.msra.mxu0 0.0
  %773 = vmatprep.subr.mxu0 0.0
  %774 = vmatpush1.msra.mxu0 0.0
  %775 = vmatprep.subr.mxu0 0.0
  %776 = vmatpush1.msra.mxu0 0.0
  %777 = vmatprep.subr.mxu0 0.0
  %778 = vmatpush1.msra.mxu0 0.0
  %779 = vmatprep.subr.mxu0 0.0
  %780 = vmatpush1.msra.mxu0 0.0
  %781 = vmatprep.subr.mxu0 0.0
  %782 = vmatpush1.msra.mxu0 0.0
  %783 = vmatprep.subr.mxu0 0.0
  %784 = vmatpush1.msra.mxu0 0.0
  %785 = vmatprep.subr.mxu0 0.0
  %786 = vmatpush1.msra.mxu0 0.0
  %787 = vmatprep.subr.mxu0 0.0
  %788 = vmatpush1.msra.mxu0 0.0
  %789 = vmatprep.subr.mxu0 0.0
  %790 = vmatpush1.msra.mxu0 0.0
  %791 = vmatprep.subr.mxu0 0.0
  %792 = vmatpush1.msra.mxu0 0.0
  %793 = vmatprep.subr.mxu0 0.0
  %794 = vmatpush1.msra.mxu0 0.0
  %795 = vmatprep.subr.mxu0 0.0
  %796 = vmatpush1.msra.mxu0 0.0
  %797 = vmatprep.subr.mxu0 0.0
  %798 = vmatpush1.msra.mxu0 0.0
  %799 = vmatprep.subr.mxu0 0.0
  %800 = vmatpush1.msra.mxu0 0.0
  %801 = vmatprep.subr.mxu0 0.0
  %802 = vmatpush1.msra.mxu0 0.0
  %803 = vmatprep.subr.mxu0 0.0
  %804 = vmatpush1.msra.mxu0 0.0
  %805 = vmatprep.subr.mxu0 0.0
  %806 = vmatpush1.msra.mxu0 0.0
  %807 = vmatprep.subr.mxu0 0.0
  %808 = vmatpush1.msra.mxu0 0.0
  %809 = vmatprep.subr.mxu0 0.0
  %810 = vmatpush1.msra.mxu0 0.0
  %811 = vmatprep.subr.mxu0 0.0
  %812 = vmatpush1.msra.mxu0 0.0
  %813 = vmatprep.subr.mxu0 0.0
  %814 = vmatpush1.msra.mxu0 0.0
  %815 = vmatprep.subr.mxu0 0.0
  %816 = vmatpush1.msra.mxu0 0.0
  %817 = vmatprep.subr.mxu0 0.0
  %818 = vmatpush1.msra.mxu0 0.0
  %819 = vmatprep.subr.mxu0 0.0
  %820 = vmatpush1.msra.mxu0 0.0
  %821 = vmatprep.subr.mxu0 0.0
  %822 = vmatpush1.msra.mxu0 0.0
  %823 = vmatprep.subr.mxu0 0.0
  %824 = vmatpush1.msra.mxu0 0.0
  %825 = vmatprep.subr.mxu0 0.0
  %826 = vmatpush1.msra.mxu0 0.0
  %827 = vmatprep.subr.mxu0 0.0
  %828 = vmatpush1.msra.mxu0 0.0
  %829 = vmatprep.subr.mxu0 0.0
  %830 = vmatpush1.msra.mxu0 0.0
  %831 = vmatprep.mubr.f32.mxu0 0.0
  %832 = vmatmul.mubr.f32.gmra.mrb[0].mxu0 %v762
  %v833 = vpop.f32.mrb[0].mxu0
  %v834 = vadd.f32 0.0, %v833
  %v835 = vpop.f32.mrb[0].mxu0
  %836 = vmatprep.mubr.f32.mxu0 0.0
  %837 = vmatmul.mubr.f32.gmra.mrb[0].mxu0 %v765
  %v838 = vpop.f32.mrb[0].mxu0
  %v839 = vadd.f32 0.0, %v838
  %v840 = vpop.f32.mrb[0].mxu0
  %841 = vdwg.mxu0
  %s842 = scalar_lea.vmem %s4, 128
  %v843 = vld [vmem:[%s842] sm:$0xff]
  %v844 = vld [vmem:[%s842 + $0x8] sm:$0xff]
  %v845 = vld [vmem:[%s842 + $0x10] sm:$0xff]
  %v846 = vld [vmem:[%s842 + $0x18] sm:$0xff]
  %v847 = vld [vmem:[%s842 + $0x20] sm:$0xff]
  %v848 = vld [vmem:[%s842 + $0x28] sm:$0xff]
  %v849 = vld [vmem:[%s842 + $0x30] sm:$0xff]
  %v850 = vld [vmem:[%s842 + $0x38] sm:$0xff]
  %v852 = vsel %vm243, %v834, 0
  %v855 = vsel %vm243, %v839, 0
  %857 = vmatprep.subr.mxu0 0.0
  %858 = vmatpush1.msra.mxu0 %v843
  %859 = vmatprep.subr.mxu0 0.0
  %860 = vmatpush1.msra.mxu0 %v844
  %861 = vmatprep.subr.mxu0 0.0
  %862 = vmatpush1.msra.mxu0 %v845
  %863 = vmatprep.subr.mxu0 0.0
  %864 = vmatpush1.msra.mxu0 %v846
  %865 = vmatprep.subr.mxu0 0.0
  %866 = vmatpush1.msra.mxu0 %v847
  %867 = vmatprep.subr.mxu0 0.0
  %868 = vmatpush1.msra.mxu0 %v848
  %869 = vmatprep.subr.mxu0 0.0
  %870 = vmatpush1.msra.mxu0 %v849
  %871 = vmatprep.subr.mxu0 0.0
  %872 = vmatpush1.msra.mxu0 %v850
  %873 = vmatprep.subr.mxu0 0.0
  %874 = vmatpush1.msra.mxu0 0.0
  %875 = vmatprep.subr.mxu0 0.0
  %876 = vmatpush1.msra.mxu0 0.0
  %877 = vmatprep.subr.mxu0 0.0
  %878 = vmatpush1.msra.mxu0 0.0
  %879 = vmatprep.subr.mxu0 0.0
  %880 = vmatpush1.msra.mxu0 0.0
  %881 = vmatprep.subr.mxu0 0.0
  %882 = vmatpush1.msra.mxu0 0.0
  %883 = vmatprep.subr.mxu0 0.0
  %884 = vmatpush1.msra.mxu0 0.0
  %885 = vmatprep.subr.mxu0 0.0
  %886 = vmatpush1.msra.mxu0 0.0
  %887 = vmatprep.subr.mxu0 0.0
  %888 = vmatpush1.msra.mxu0 0.0
  %889 = vmatprep.subr.mxu0 0.0
  %890 = vmatpush1.msra.mxu0 0.0
  %891 = vmatprep.subr.mxu0 0.0
  %892 = vmatpush1.msra.mxu0 0.0
  %893 = vmatprep.subr.mxu0 0.0
  %894 = vmatpush1.msra.mxu0 0.0
  %895 = vmatprep.subr.mxu0 0.0
  %896 = vmatpush1.msra.mxu0 0.0
  %897 = vmatprep.subr.mxu0 0.0
  %898 = vmatpush1.msra.mxu0 0.0
  %899 = vmatprep.subr.mxu0 0.0
  %900 = vmatpush1.msra.mxu0 0.0
  %901 = vmatprep.subr.mxu0 0.0
  %902 = vmatpush1.msra.mxu0 0.0
  %903 = vmatprep.subr.mxu0 0.0
  %904 = vmatpush1.msra.mxu0 0.0
  %905 = vmatprep.subr.mxu0 0.0
  %906 = vmatpush1.msra.mxu0 0.0
  %907 = vmatprep.subr.mxu0 0.0
  %908 = vmatpush1.msra.mxu0 0.0
  %909 = vmatprep.subr.mxu0 0.0
  %910 = vmatpush1.msra.mxu0 0.0
  %911 = vmatprep.subr.mxu0 0.0
  %912 = vmatpush1.msra.mxu0 0.0
  %913 = vmatprep.subr.mxu0 0.0
  %914 = vmatpush1.msra.mxu0 0.0
  %915 = vmatprep.subr.mxu0 0.0
  %916 = vmatpush1.msra.mxu0 0.0
  %917 = vmatprep.subr.mxu0 0.0
  %918 = vmatpush1.msra.mxu0 0.0
  %919 = vmatprep.subr.mxu0 0.0
  %920 = vmatpush1.msra.mxu0 0.0
  %921 = vmatprep.mubr.f32.mxu0 0.0
  %922 = vmatmul.mubr.f32.gmra.mrb[0].mxu0 %v852
  %v923 = vpop.f32.mrb[0].mxu0
  %v924 = vadd.f32 0.0, %v923
  %v925 = vpop.f32.mrb[0].mxu0
  %926 = vmatprep.mubr.f32.mxu0 0.0
  %927 = vmatmul.mubr.f32.gmra.mrb[0].mxu0 %v855
  %v928 = vpop.f32.mrb[0].mxu0
  %v929 = vadd.f32 0.0, %v928
  %v930 = vpop.f32.mrb[0].mxu0
  %931 = vdwg.mxu0
  %v932 = vadd.f32 %v756, %v924
  %v933 = vadd.f32 %v757, %v929
  %s934 = scalar_lea.vmem %s5, 32
  %v935 = vld [vmem:[%s934] sm:$0xff]
  %v936 = vld [vmem:[%s934 + $0x8] sm:$0xff]
  %v938 = vsel %vm153, %v935, 0
  %v941 = vsel %vm153, %v936, 0
  %943 = vmatprep.subr.mxu0 0.0
  %944 = vmatpush1.msra.mxu0 %v56
  %945 = vmatprep.subr.mxu0 0.0
  %946 = vmatpush1.msra.mxu0 0.0
  %947 = vmatprep.subr.mxu0 0.0
  %948 = vmatpush1.msra.mxu0 0.0
  %949 = vmatprep.subr.mxu0 0.0
  %950 = vmatpush1.msra.mxu0 0.0
  %951 = vmatprep.subr.mxu0 0.0
  %952 = vmatpush1.msra.mxu0 0.0
  %953 = vmatprep.subr.mxu0 0.0
  %954 = vmatpush1.msra.mxu0 0.0
  %955 = vmatprep.subr.mxu0 0.0
  %956 = vmatpush1.msra.mxu0 0.0
  %957 = vmatprep.subr.mxu0 0.0
  %958 = vmatpush1.msra.mxu0 0.0
  %959 = vmatprep.subr.mxu0 0.0
  %960 = vmatpush1.msra.mxu0 0.0
  %961 = vmatprep.subr.mxu0 0.0
  %962 = vmatpush1.msra.mxu0 0.0
  %963 = vmatprep.subr.mxu0 0.0
  %964 = vmatpush1.msra.mxu0 0.0
  %965 = vmatprep.subr.mxu0 0.0
  %966 = vmatpush1.msra.mxu0 0.0
  %967 = vmatprep.subr.mxu0 0.0
  %968 = vmatpush1.msra.mxu0 0.0
  %969 = vmatprep.subr.mxu0 0.0
  %970 = vmatpush1.msra.mxu0 0.0
  %971 = vmatprep.subr.mxu0 0.0
  %972 = vmatpush1.msra.mxu0 0.0
  %973 = vmatprep.subr.mxu0 0.0
  %974 = vmatpush1.msra.mxu0 0.0
  %975 = vmatprep.subr.mxu0 0.0
  %976 = vmatpush1.msra.mxu0 0.0
  %977 = vmatprep.subr.mxu0 0.0
  %978 = vmatpush1.msra.mxu0 0.0
  %979 = vmatprep.subr.mxu0 0.0
  %980 = vmatpush1.msra.mxu0 0.0
  %981 = vmatprep.subr.mxu0 0.0
  %982 = vmatpush1.msra.mxu0 0.0
  %983 = vmatprep.subr.mxu0 0.0
  %984 = vmatpush1.msra.mxu0 0.0
  %985 = vmatprep.subr.mxu0 0.0
  %986 = vmatpush1.msra.mxu0 0.0
  %987 = vmatprep.subr.mxu0 0.0
  %988 = vmatpush1.msra.mxu0 0.0
  %989 = vmatprep.subr.mxu0 0.0
  %990 = vmatpush1.msra.mxu0 0.0
  %991 = vmatprep.subr.mxu0 0.0
  %992 = vmatpush1.msra.mxu0 0.0
  %993 = vmatprep.subr.mxu0 0.0
  %994 = vmatpush1.msra.mxu0 0.0
  %995 = vmatprep.subr.mxu0 0.0
  %996 = vmatpush1.msra.mxu0 0.0
  %997 = vmatprep.subr.mxu0 0.0
  %998 = vmatpush1.msra.mxu0 0.0
  %999 = vmatprep.subr.mxu0 0.0
  %1000 = vmatpush1.msra.mxu0 0.0
  %1001 = vmatprep.subr.mxu0 0.0
  %1002 = vmatpush1.msra.mxu0 0.0
  %1003 = vmatprep.subr.mxu0 0.0
  %1004 = vmatpush1.msra.mxu0 0.0
  %1005 = vmatprep.subr.mxu0 0.0
  %1006 = vmatpush1.msra.mxu0 0.0
  %1007 = vmatprep.mubr.f32.mxu0 0.0
  %1008 = vmatmul.mubr.f32.gmra.mrb[0].mxu0 %v938
  %v1009 = vpop.f32.mrb[0].mxu0
  %v1010 = vadd.f32 0.0, %v1009
  %v1011 = vpop.f32.mrb[0].mxu0
  %1012 = vmatprep.mubr.f32.mxu0 0.0
  %1013 = vmatmul.mubr.f32.gmra.mrb[0].mxu0 %v941
  %v1014 = vpop.f32.mrb[0].mxu0
  %v1015 = vadd.f32 0.0, %v1014
  %v1016 = vpop.f32.mrb[0].mxu0
  %1017 = vdwg.mxu0
  %s1018 = scalar_lea.vmem %s6, 128
  %v1019 = vld [vmem:[%s1018] sm:$0xff]
  %v1020 = vld [vmem:[%s1018 + $0x8] sm:$0xff]
  %v1021 = vld [vmem:[%s1018 + $0x10] sm:$0xff]
  %v1022 = vld [vmem:[%s1018 + $0x18] sm:$0xff]
  %v1023 = vld [vmem:[%s1018 + $0x20] sm:$0xff]
  %v1024 = vld [vmem:[%s1018 + $0x28] sm:$0xff]
  %v1025 = vld [vmem:[%s1018 + $0x30] sm:$0xff]
  %v1026 = vld [vmem:[%s1018 + $0x38] sm:$0xff]
  %v1028 = vsel %vm243, %v1010, 0
  %v1031 = vsel %vm243, %v1015, 0
  %1033 = vmatprep.subr.mxu0 0.0
  %1034 = vmatpush1.msra.mxu0 %v1019
  %1035 = vmatprep.subr.mxu0 0.0
  %1036 = vmatpush1.msra.mxu0 %v1020
  %1037 = vmatprep.subr.mxu0 0.0
  %1038 = vmatpush1.msra.mxu0 %v1021
  %1039 = vmatprep.subr.mxu0 0.0
  %1040 = vmatpush1.msra.mxu0 %v1022
  %1041 = vmatprep.subr.mxu0 0.0
  %1042 = vmatpush1.msra.mxu0 %v1023
  %1043 = vmatprep.subr.mxu0 0.0
  %1044 = vmatpush1.msra.mxu0 %v1024
  %1045 = vmatprep.subr.mxu0 0.0
  %1046 = vmatpush1.msra.mxu0 %v1025
  %1047 = vmatprep.subr.mxu0 0.0
  %1048 = vmatpush1.msra.mxu0 %v1026
  %1049 = vmatprep.subr.mxu0 0.0
  %1050 = vmatpush1.msra.mxu0 0.0
  %1051 = vmatprep.subr.mxu0 0.0
  %1052 = vmatpush1.msra.mxu0 0.0
  %1053 = vmatprep.subr.mxu0 0.0
  %1054 = vmatpush1.msra.mxu0 0.0
  %1055 = vmatprep.subr.mxu0 0.0
  %1056 = vmatpush1.msra.mxu0 0.0
  %1057 = vmatprep.subr.mxu0 0.0
  %1058 = vmatpush1.msra.mxu0 0.0
  %1059 = vmatprep.subr.mxu0 0.0
  %1060 = vmatpush1.msra.mxu0 0.0
  %1061 = vmatprep.subr.mxu0 0.0
  %1062 = vmatpush1.msra.mxu0 0.0
  %1063 = vmatprep.subr.mxu0 0.0
  %1064 = vmatpush1.msra.mxu0 0.0
  %1065 = vmatprep.subr.mxu0 0.0
  %1066 = vmatpush1.msra.mxu0 0.0
  %1067 = vmatprep.subr.mxu0 0.0
  %1068 = vmatpush1.msra.mxu0 0.0
  %1069 = vmatprep.subr.mxu0 0.0
  %1070 = vmatpush1.msra.mxu0 0.0
  %1071 = vmatprep.subr.mxu0 0.0
  %1072 = vmatpush1.msra.mxu0 0.0
  %1073 = vmatprep.subr.mxu0 0.0
  %1074 = vmatpush1.msra.mxu0 0.0
  %1075 = vmatprep.subr.mxu0 0.0
  %1076 = vmatpush1.msra.mxu0 0.0
  %1077 = vmatprep.subr.mxu0 0.0
  %1078 = vmatpush1.msra.mxu0 0.0
  %1079 = vmatprep.subr.mxu0 0.0
  %1080 = vmatpush1.msra.mxu0 0.0
  %1081 = vmatprep.subr.mxu0 0.0
  %1082 = vmatpush1.msra.mxu0 0.0
  %1083 = vmatprep.subr.mxu0 0.0
  %1084 = vmatpush1.msra.mxu0 0.0
  %1085 = vmatprep.subr.mxu0 0.0
  %1086 = vmatpush1.msra.mxu0 0.0
  %1087 = vmatprep.subr.mxu0 0.0
  %1088 = vmatpush1.msra.mxu0 0.0
  %1089 = vmatprep.subr.mxu0 0.0
  %1090 = vmatpush1.msra.mxu0 0.0
  %1091 = vmatprep.subr.mxu0 0.0
  %1092 = vmatpush1.msra.mxu0 0.0
  %1093 = vmatprep.subr.mxu0 0.0
  %1094 = vmatpush1.msra.mxu0 0.0
  %1095 = vmatprep.subr.mxu0 0.0
  %1096 = vmatpush1.msra.mxu0 0.0
  %1097 = vmatprep.mubr.f32.mxu0 0.0
  %1098 = vmatmul.mubr.f32.gmra.mrb[0].mxu0 %v1028
  %v1099 = vpop.f32.mrb[0].mxu0
  %v1100 = vadd.f32 0.0, %v1099
  %v1101 = vpop.f32.mrb[0].mxu0
  %1102 = vmatprep.mubr.f32.mxu0 0.0
  %1103 = vmatmul.mubr.f32.gmra.mrb[0].mxu0 %v1031
  %v1104 = vpop.f32.mrb[0].mxu0
  %v1105 = vadd.f32 0.0, %v1104
  %v1106 = vpop.f32.mrb[0].mxu0
  %1107 = vdwg.mxu0
  %v1108 = vadd.f32 %v932, %v1100
  %v1109 = vadd.f32 %v933, %v1105
  %v1110 = vld [vmem:[%s7] sm:$0x1]
  %v1112 = vlaneseq
  %v1113 = vshrl.u32 %v1112, 7
  %v1114 = vsub.s32 0, %v1113
  %v1115 = vrot.slane %v1110, %v1114
  %v1117 = vadd.f32 %v1108, %v1115
  %v1118 = vadd.f32 %v1109, %v1115
  %1119 = vmatprep.subr.mxu0 0.0
  %1120 = vmatpush1.msra.mxu0 %v1117
  %1121 = vmatprep.subr.mxu0 0.0
  %1122 = vmatpush1.msra.mxu0 %v1118
  %1123 = vmatprep.subr.mxu0 0.0
  %1124 = vmatpush1.msra.mxu0 0.0
  %1125 = vmatprep.subr.mxu0 0.0
  %1126 = vmatpush1.msra.mxu0 0.0
  %1127 = vmatprep.subr.mxu0 0.0
  %1128 = vmatpush1.msra.mxu0 0.0
  %1129 = vmatprep.subr.mxu0 0.0
  %1130 = vmatpush1.msra.mxu0 0.0
  %1131 = vmatprep.subr.mxu0 0.0
  %1132 = vmatpush1.msra.mxu0 0.0
  %1133 = vmatprep.subr.mxu0 0.0
  %1134 = vmatpush1.msra.mxu0 0.0
  %1135 = vmatprep.subr.mxu0 0.0
  %1136 = vmatpush1.msra.mxu0 0.0
  %1137 = vmatprep.subr.mxu0 0.0
  %1138 = vmatpush1.msra.mxu0 0.0
  %1139 = vmatprep.subr.mxu0 0.0
  %1140 = vmatpush1.msra.mxu0 0.0
  %1141 = vmatprep.subr.mxu0 0.0
  %1142 = vmatpush1.msra.mxu0 0.0
  %1143 = vmatprep.subr.mxu0 0.0
  %1144 = vmatpush1.msra.mxu0 0.0
  %1145 = vmatprep.subr.mxu0 0.0
  %1146 = vmatpush1.msra.mxu0 0.0
  %1147 = vmatprep.subr.mxu0 0.0
  %1148 = vmatpush1.msra.mxu0 0.0
  %1149 = vmatprep.subr.mxu0 0.0
  %1150 = vmatpush1.msra.mxu0 0.0
  %1151 = vmatprep.subr.mxu0 0.0
  %1152 = vmatpush1.msra.mxu0 0.0
  %1153 = vmatprep.subr.mxu0 0.0
  %1154 = vmatpush1.msra.mxu0 0.0
  %1155 = vmatprep.subr.mxu0 0.0
  %1156 = vmatpush1.msra.mxu0 0.0
  %1157 = vmatprep.subr.mxu0 0.0
  %1158 = vmatpush1.msra.mxu0 0.0
  %1159 = vmatprep.subr.mxu0 0.0
  %1160 = vmatpush1.msra.mxu0 0.0
  %1161 = vmatprep.subr.mxu0 0.0
  %1162 = vmatpush1.msra.mxu0 0.0
  %1163 = vmatprep.subr.mxu0 0.0
  %1164 = vmatpush1.msra.mxu0 0.0
  %1165 = vmatprep.subr.mxu0 0.0
  %1166 = vmatpush1.msra.mxu0 0.0
  %1167 = vmatprep.subr.mxu0 0.0
  %1168 = vmatpush1.msra.mxu0 0.0
  %1169 = vmatprep.subr.mxu0 0.0
  %1170 = vmatpush1.msra.mxu0 0.0
  %1171 = vmatprep.subr.mxu0 0.0
  %1172 = vmatpush1.msra.mxu0 0.0
  %1173 = vmatprep.subr.mxu0 0.0
  %1174 = vmatpush1.msra.mxu0 0.0
  %1175 = vmatprep.subr.mxu0 0.0
  %1176 = vmatpush1.msra.mxu0 0.0
  %1177 = vmatprep.subr.mxu0 0.0
  %1178 = vmatpush1.msra.mxu0 0.0
  %1179 = vmatprep.subr.mxu0 0.0
  %1180 = vmatpush1.msra.mxu0 0.0
  %1181 = vmatprep.subr.mxu0 0.0
  %1182 = vmatpush1.msra.mxu0 0.0
  %1183 = vmatprep.mubr.f32.mxu0 0.0
  %1184 = vmatmul.mubr.f32.gmra.mrb[0].mxu0 %v63
  %v1185 = vpop.f32.mrb[0].mxu0
  %v1186 = vadd.f32 0.0, %v1185
  %v1187 = vpop.f32.mrb[0].mxu0
  %1188 = vmatprep.mubr.f32.mxu0 0.0
  %1189 = vmatmul.mubr.f32.gmra.mrb[0].mxu0 %v66
  %v1190 = vpop.f32.mrb[0].mxu0
  %v1191 = vadd.f32 0.0, %v1190
  %v1192 = vpop.f32.mrb[0].mxu0
  %1193 = vdwg.mxu0
  %v1194 = vld [vmem:[%s8] sm:$0xff]
  %v1195 = vld [vmem:[%s8 + $0x8] sm:$0xff]
  %v1196 = vld [vmem:[%s8 + $0x10] sm:$0xff]
  %v1197 = vld [vmem:[%s8 + $0x18] sm:$0xff]
  %v1198 = vld [vmem:[%s8 + $0x20] sm:$0xff]
  %v1199 = vld [vmem:[%s8 + $0x28] sm:$0xff]
  %v1200 = vld [vmem:[%s8 + $0x30] sm:$0xff]
  %v1201 = vld [vmem:[%s8 + $0x38] sm:$0xff]
  %1202 = vmatprep.subr.mxu0 0.0
  %1203 = vmatpush1.msra.mxu0 %v1117
  %1204 = vmatprep.subr.mxu0 0.0
  %1205 = vmatpush1.msra.mxu0 %v1118
  %1206 = vmatprep.subr.mxu0 0.0
  %1207 = vmatpush1.msra.mxu0 0.0
  %1208 = vmatprep.subr.mxu0 0.0
  %1209 = vmatpush1.msra.mxu0 0.0
  %1210 = vmatprep.subr.mxu0 0.0
  %1211 = vmatpush1.msra.mxu0 0.0
  %1212 = vmatprep.subr.mxu0 0.0
  %1213 = vmatpush1.msra.mxu0 0.0
  %1214 = vmatprep.subr.mxu0 0.0
  %1215 = vmatpush1.msra.mxu0 0.0
  %1216 = vmatprep.subr.mxu0 0.0
  %1217 = vmatpush1.msra.mxu0 0.0
  %1218 = vmatprep.subr.mxu0 0.0
  %1219 = vmatpush1.msra.mxu0 0.0
  %1220 = vmatprep.subr.mxu0 0.0
  %1221 = vmatpush1.msra.mxu0 0.0
  %1222 = vmatprep.subr.mxu0 0.0
  %1223 = vmatpush1.msra.mxu0 0.0
  %1224 = vmatprep.subr.mxu0 0.0
  %1225 = vmatpush1.msra.mxu0 0.0
  %1226 = vmatprep.subr.mxu0 0.0
  %1227 = vmatpush1.msra.mxu0 0.0
  %1228 = vmatprep.subr.mxu0 0.0
  %1229 = vmatpush1.msra.mxu0 0.0
  %1230 = vmatprep.subr.mxu0 0.0
  %1231 = vmatpush1.msra.mxu0 0.0
  %1232 = vmatprep.subr.mxu0 0.0
  %1233 = vmatpush1.msra.mxu0 0.0
  %1234 = vmatprep.subr.mxu0 0.0
  %1235 = vmatpush1.msra.mxu0 0.0
  %1236 = vmatprep.subr.mxu0 0.0
  %1237 = vmatpush1.msra.mxu0 0.0
  %1238 = vmatprep.subr.mxu0 0.0
  %1239 = vmatpush1.msra.mxu0 0.0
  %1240 = vmatprep.subr.mxu0 0.0
  %1241 = vmatpush1.msra.mxu0 0.0
  %1242 = vmatprep.subr.mxu0 0.0
  %1243 = vmatpush1.msra.mxu0 0.0
  %1244 = vmatprep.subr.mxu0 0.0
  %1245 = vmatpush1.msra.mxu0 0.0
  %1246 = vmatprep.subr.mxu0 0.0
  %1247 = vmatpush1.msra.mxu0 0.0
  %1248 = vmatprep.subr.mxu0 0.0
  %1249 = vmatpush1.msra.mxu0 0.0
  %1250 = vmatprep.subr.mxu0 0.0
  %1251 = vmatpush1.msra.mxu0 0.0
  %1252 = vmatprep.subr.mxu0 0.0
  %1253 = vmatpush1.msra.mxu0 0.0
  %1254 = vmatprep.subr.mxu0 0.0
  %1255 = vmatpush1.msra.mxu0 0.0
  %1256 = vmatprep.subr.mxu0 0.0
  %1257 = vmatpush1.msra.mxu0 0.0
  %1258 = vmatprep.subr.mxu0 0.0
  %1259 = vmatpush1.msra.mxu0 0.0
  %1260 = vmatprep.subr.mxu0 0.0
  %1261 = vmatpush1.msra.mxu0 0.0
  %1262 = vmatprep.subr.mxu0 0.0
  %1263 = vmatpush1.msra.mxu0 0.0
  %1264 = vmatprep.subr.mxu0 0.0
  %1265 = vmatpush1.msra.mxu0 0.0
  %1266 = vmatprep.mubr.f32.mxu0 0.0
  %1267 = vmatmul.mubr.f32.gmra.mrb[0].mxu0 %v410
  %v1268 = vpop.f32.mrb[0].mxu0
  %v1269 = vadd.f32 0.0, %v1268
  %v1270 = vpop.f32.mrb[0].mxu0
  %1271 = vmatprep.mubr.f32.mxu0 0.0
  %1272 = vmatmul.mubr.f32.gmra.mrb[0].mxu0 %v413
  %v1273 = vpop.f32.mrb[0].mxu0
  %v1274 = vadd.f32 0.0, %v1273
  %v1275 = vpop.f32.mrb[0].mxu0
  %1276 = vdwg.mxu0
  %s1277 = scalar_lea.vmem %s8, 64
  %v1278 = vld [vmem:[%s1277] sm:$0xff]
  %v1279 = vld [vmem:[%s1277 + $0x8] sm:$0xff]
  %v1280 = vld [vmem:[%s1277 + $0x10] sm:$0xff]
  %v1281 = vld [vmem:[%s1277 + $0x18] sm:$0xff]
  %v1282 = vld [vmem:[%s1277 + $0x20] sm:$0xff]
  %v1283 = vld [vmem:[%s1277 + $0x28] sm:$0xff]
  %v1284 = vld [vmem:[%s1277 + $0x30] sm:$0xff]
  %v1285 = vld [vmem:[%s1277 + $0x38] sm:$0xff]
  %v1287 = vsel %vm243, %v1269, 0
  %v1290 = vsel %vm243, %v1274, 0
  %1292 = vmatprep.subr.mxu0 0.0
  %1293 = vmatpush1.msra.mxu0 %v1278
  %1294 = vmatprep.subr.mxu0 0.0
  %1295 = vmatpush1.msra.mxu0 %v1279
  %1296 = vmatprep.subr.mxu0 0.0
  %1297 = vmatpush1.msra.mxu0 %v1280
  %1298 = vmatprep.subr.mxu0 0.0
  %1299 = vmatpush1.msra.mxu0 %v1281
  %1300 = vmatprep.subr.mxu0 0.0
  %1301 = vmatpush1.msra.mxu0 %v1282
  %1302 = vmatprep.subr.mxu0 0.0
  %1303 = vmatpush1.msra.mxu0 %v1283
  %1304 = vmatprep.subr.mxu0 0.0
  %1305 = vmatpush1.msra.mxu0 %v1284
  %1306 = vmatprep.subr.mxu0 0.0
  %1307 = vmatpush1.msra.mxu0 %v1285
  %1308 = vmatprep.subr.mxu0 0.0
  %1309 = vmatpush1.msra.mxu0 0.0
  %1310 = vmatprep.subr.mxu0 0.0
  %1311 = vmatpush1.msra.mxu0 0.0
  %1312 = vmatprep.subr.mxu0 0.0
  %1313 = vmatpush1.msra.mxu0 0.0
  %1314 = vmatprep.subr.mxu0 0.0
  %1315 = vmatpush1.msra.mxu0 0.0
  %1316 = vmatprep.subr.mxu0 0.0
  %1317 = vmatpush1.msra.mxu0 0.0
  %1318 = vmatprep.subr.mxu0 0.0
  %1319 = vmatpush1.msra.mxu0 0.0
  %1320 = vmatprep.subr.mxu0 0.0
  %1321 = vmatpush1.msra.mxu0 0.0
  %1322 = vmatprep.subr.mxu0 0.0
  %1323 = vmatpush1.msra.mxu0 0.0
  %1324 = vmatprep.subr.mxu0 0.0
  %1325 = vmatpush1.msra.mxu0 0.0
  %1326 = vmatprep.subr.mxu0 0.0
  %1327 = vmatpush1.msra.mxu0 0.0
  %1328 = vmatprep.subr.mxu0 0.0
  %1329 = vmatpush1.msra.mxu0 0.0
  %1330 = vmatprep.subr.mxu0 0.0
  %1331 = vmatpush1.msra.mxu0 0.0
  %1332 = vmatprep.subr.mxu0 0.0
  %1333 = vmatpush1.msra.mxu0 0.0
  %1334 = vmatprep.subr.mxu0 0.0
  %1335 = vmatpush1.msra.mxu0 0.0
  %1336 = vmatprep.subr.mxu0 0.0
  %1337 = vmatpush1.msra.mxu0 0.0
  %1338 = vmatprep.subr.mxu0 0.0
  %1339 = vmatpush1.msra.mxu0 0.0
  %1340 = vmatprep.subr.mxu0 0.0
  %1341 = vmatpush1.msra.mxu0 0.0
  %1342 = vmatprep.subr.mxu0 0.0
  %1343 = vmatpush1.msra.mxu0 0.0
  %1344 = vmatprep.subr.mxu0 0.0
  %1345 = vmatpush1.msra.mxu0 0.0
  %1346 = vmatprep.subr.mxu0 0.0
  %1347 = vmatpush1.msra.mxu0 0.0
  %1348 = vmatprep.subr.mxu0 0.0
  %1349 = vmatpush1.msra.mxu0 0.0
  %1350 = vmatprep.subr.mxu0 0.0
  %1351 = vmatpush1.msra.mxu0 0.0
  %1352 = vmatprep.subr.mxu0 0.0
  %1353 = vmatpush1.msra.mxu0 0.0
  %1354 = vmatprep.subr.mxu0 0.0
  %1355 = vmatpush1.msra.mxu0 0.0
  %1356 = vmatprep.mubr.f32.mxu0 0.0
  %1357 = vmatmul.mubr.f32.gmra.mrb[0].mxu0 %v1287
  %v1358 = vpop.f32.mrb[0].mxu0
  %v1359 = vadd.f32 0.0, %v1358
  %v1360 = vpop.f32.mrb[0].mxu0
  %1361 = vmatprep.mubr.f32.mxu0 0.0
  %1362 = vmatmul.mubr.f32.gmra.mrb[0].mxu0 %v1290
  %v1363 = vpop.f32.mrb[0].mxu0
  %v1364 = vadd.f32 0.0, %v1363
  %v1365 = vpop.f32.mrb[0].mxu0
  %1366 = vdwg.mxu0
  %v1368 = vsel %vm243, %v1186, 0
  %v1371 = vsel %vm243, %v1191, 0
  %1373 = vmatprep.subr.mxu0 0.0
  %1374 = vmatpush1.msra.mxu0 %v1194
  %1375 = vmatprep.subr.mxu0 0.0
  %1376 = vmatpush1.msra.mxu0 %v1195
  %1377 = vmatprep.subr.mxu0 0.0
  %1378 = vmatpush1.msra.mxu0 %v1196
  %1379 = vmatprep.subr.mxu0 0.0
  %1380 = vmatpush1.msra.mxu0 %v1197
  %1381 = vmatprep.subr.mxu0 0.0
  %1382 = vmatpush1.msra.mxu0 %v1198
  %1383 = vmatprep.subr.mxu0 0.0
  %1384 = vmatpush1.msra.mxu0 %v1199
  %1385 = vmatprep.subr.mxu0 0.0
  %1386 = vmatpush1.msra.mxu0 %v1200
  %1387 = vmatprep.subr.mxu0 0.0
  %1388 = vmatpush1.msra.mxu0 %v1201
  %1389 = vmatprep.subr.mxu0 0.0
  %1390 = vmatpush1.msra.mxu0 0.0
  %1391 = vmatprep.subr.mxu0 0.0
  %1392 = vmatpush1.msra.mxu0 0.0
  %1393 = vmatprep.subr.mxu0 0.0
  %1394 = vmatpush1.msra.mxu0 0.0
  %1395 = vmatprep.subr.mxu0 0.0
  %1396 = vmatpush1.msra.mxu0 0.0
  %1397 = vmatprep.subr.mxu0 0.0
  %1398 = vmatpush1.msra.mxu0 0.0
  %1399 = vmatprep.subr.mxu0 0.0
  %1400 = vmatpush1.msra.mxu0 0.0
  %1401 = vmatprep.subr.mxu0 0.0
  %1402 = vmatpush1.msra.mxu0 0.0
  %1403 = vmatprep.subr.mxu0 0.0
  %1404 = vmatpush1.msra.mxu0 0.0
  %1405 = vmatprep.subr.mxu0 0.0
  %1406 = vmatpush1.msra.mxu0 0.0
  %1407 = vmatprep.subr.mxu0 0.0
  %1408 = vmatpush1.msra.mxu0 0.0
  %1409 = vmatprep.subr.mxu0 0.0
  %1410 = vmatpush1.msra.mxu0 0.0
  %1411 = vmatprep.subr.mxu0 0.0
  %1412 = vmatpush1.msra.mxu0 0.0
  %1413 = vmatprep.subr.mxu0 0.0
  %1414 = vmatpush1.msra.mxu0 0.0
  %1415 = vmatprep.subr.mxu0 0.0
  %1416 = vmatpush1.msra.mxu0 0.0
  %1417 = vmatprep.subr.mxu0 0.0
  %1418 = vmatpush1.msra.mxu0 0.0
  %1419 = vmatprep.subr.mxu0 0.0
  %1420 = vmatpush1.msra.mxu0 0.0
  %1421 = vmatprep.subr.mxu0 0.0
  %1422 = vmatpush1.msra.mxu0 0.0
  %1423 = vmatprep.subr.mxu0 0.0
  %1424 = vmatpush1.msra.mxu0 0.0
  %1425 = vmatprep.subr.mxu0 0.0
  %1426 = vmatpush1.msra.mxu0 0.0
  %1427 = vmatprep.subr.mxu0 0.0
  %1428 = vmatpush1.msra.mxu0 0.0
  %1429 = vmatprep.subr.mxu0 0.0
  %1430 = vmatpush1.msra.mxu0 0.0
  %1431 = vmatprep.subr.mxu0 0.0
  %1432 = vmatpush1.msra.mxu0 0.0
  %1433 = vmatprep.subr.mxu0 0.0
  %1434 = vmatpush1.msra.mxu0 0.0
  %1435 = vmatprep.subr.mxu0 0.0
  %1436 = vmatpush1.msra.mxu0 0.0
  %1437 = vmatprep.mubr.f32.mxu0 0.0
  %1438 = vmatmul.mubr.f32.gmra.mrb[0].mxu0 %v1368
  %v1439 = vpop.f32.mrb[0].mxu0
  %v1440 = vadd.f32 %v1359, %v1439
  %v1441 = vpop.f32.mrb[0].mxu0
  %1442 = vmatprep.mubr.f32.mxu0 0.0
  %1443 = vmatmul.mubr.f32.gmra.mrb[0].mxu0 %v1371
  %v1444 = vpop.f32.mrb[0].mxu0
  %v1445 = vadd.f32 %v1364, %v1444
  %v1446 = vpop.f32.mrb[0].mxu0
  %1447 = vdwg.mxu0
  %1448 = vmatprep.subr.mxu0 0.0
  %1449 = vmatpush1.msra.mxu0 %v1117
  %1450 = vmatprep.subr.mxu0 0.0
  %1451 = vmatpush1.msra.mxu0 %v1118
  %1452 = vmatprep.subr.mxu0 0.0
  %1453 = vmatpush1.msra.mxu0 0.0
  %1454 = vmatprep.subr.mxu0 0.0
  %1455 = vmatpush1.msra.mxu0 0.0
  %1456 = vmatprep.subr.mxu0 0.0
  %1457 = vmatpush1.msra.mxu0 0.0
  %1458 = vmatprep.subr.mxu0 0.0
  %1459 = vmatpush1.msra.mxu0 0.0
  %1460 = vmatprep.subr.mxu0 0.0
  %1461 = vmatpush1.msra.mxu0 0.0
  %1462 = vmatprep.subr.mxu0 0.0
  %1463 = vmatpush1.msra.mxu0 0.0
  %1464 = vmatprep.subr.mxu0 0.0
  %1465 = vmatpush1.msra.mxu0 0.0
  %1466 = vmatprep.subr.mxu0 0.0
  %1467 = vmatpush1.msra.mxu0 0.0
  %1468 = vmatprep.subr.mxu0 0.0
  %1469 = vmatpush1.msra.mxu0 0.0
  %1470 = vmatprep.subr.mxu0 0.0
  %1471 = vmatpush1.msra.mxu0 0.0
  %1472 = vmatprep.subr.mxu0 0.0
  %1473 = vmatpush1.msra.mxu0 0.0
  %1474 = vmatprep.subr.mxu0 0.0
  %1475 = vmatpush1.msra.mxu0 0.0
  %1476 = vmatprep.subr.mxu0 0.0
  %1477 = vmatpush1.msra.mxu0 0.0
  %1478 = vmatprep.subr.mxu0 0.0
  %1479 = vmatpush1.msra.mxu0 0.0
  %1480 = vmatprep.subr.mxu0 0.0
  %1481 = vmatpush1.msra.mxu0 0.0
  %1482 = vmatprep.subr.mxu0 0.0
  %1483 = vmatpush1.msra.mxu0 0.0
  %1484 = vmatprep.subr.mxu0 0.0
  %1485 = vmatpush1.msra.mxu0 0.0
  %1486 = vmatprep.subr.mxu0 0.0
  %1487 = vmatpush1.msra.mxu0 0.0
  %1488 = vmatprep.subr.mxu0 0.0
  %1489 = vmatpush1.msra.mxu0 0.0
  %1490 = vmatprep.subr.mxu0 0.0
  %1491 = vmatpush1.msra.mxu0 0.0
  %1492 = vmatprep.subr.mxu0 0.0
  %1493 = vmatpush1.msra.mxu0 0.0
  %1494 = vmatprep.subr.mxu0 0.0
  %1495 = vmatpush1.msra.mxu0 0.0
  %1496 = vmatprep.subr.mxu0 0.0
  %1497 = vmatpush1.msra.mxu0 0.0
  %1498 = vmatprep.subr.mxu0 0.0
  %1499 = vmatpush1.msra.mxu0 0.0
  %1500 = vmatprep.subr.mxu0 0.0
  %1501 = vmatpush1.msra.mxu0 0.0
  %1502 = vmatprep.subr.mxu0 0.0
  %1503 = vmatpush1.msra.mxu0 0.0
  %1504 = vmatprep.subr.mxu0 0.0
  %1505 = vmatpush1.msra.mxu0 0.0
  %1506 = vmatprep.subr.mxu0 0.0
  %1507 = vmatpush1.msra.mxu0 0.0
  %1508 = vmatprep.subr.mxu0 0.0
  %1509 = vmatpush1.msra.mxu0 0.0
  %1510 = vmatprep.subr.mxu0 0.0
  %1511 = vmatpush1.msra.mxu0 0.0
  %1512 = vmatprep.mubr.f32.mxu0 0.0
  %1513 = vmatmul.mubr.f32.gmra.mrb[0].mxu0 %v762
  %v1514 = vpop.f32.mrb[0].mxu0
  %v1515 = vadd.f32 0.0, %v1514
  %v1516 = vpop.f32.mrb[0].mxu0
  %1517 = vmatprep.mubr.f32.mxu0 0.0
  %1518 = vmatmul.mubr.f32.gmra.mrb[0].mxu0 %v765
  %v1519 = vpop.f32.mrb[0].mxu0
  %v1520 = vadd.f32 0.0, %v1519
  %v1521 = vpop.f32.mrb[0].mxu0
  %1522 = vdwg.mxu0
  %s1523 = scalar_lea.vmem %s8, 128
  %v1524 = vld [vmem:[%s1523] sm:$0xff]
  %v1525 = vld [vmem:[%s1523 + $0x8] sm:$0xff]
  %v1526 = vld [vmem:[%s1523 + $0x10] sm:$0xff]
  %v1527 = vld [vmem:[%s1523 + $0x18] sm:$0xff]
  %v1528 = vld [vmem:[%s1523 + $0x20] sm:$0xff]
  %v1529 = vld [vmem:[%s1523 + $0x28] sm:$0xff]
  %v1530 = vld [vmem:[%s1523 + $0x30] sm:$0xff]
  %v1531 = vld [vmem:[%s1523 + $0x38] sm:$0xff]
  %v1533 = vsel %vm243, %v1515, 0
  %v1536 = vsel %vm243, %v1520, 0
  %1538 = vmatprep.subr.mxu0 0.0
  %1539 = vmatpush1.msra.mxu0 %v1524
  %1540 = vmatprep.subr.mxu0 0.0
  %1541 = vmatpush1.msra.mxu0 %v1525
  %1542 = vmatprep.subr.mxu0 0.0
  %1543 = vmatpush1.msra.mxu0 %v1526
  %1544 = vmatprep.subr.mxu0 0.0
  %1545 = vmatpush1.msra.mxu0 %v1527
  %1546 = vmatprep.subr.mxu0 0.0
  %1547 = vmatpush1.msra.mxu0 %v1528
  %1548 = vmatprep.subr.mxu0 0.0
  %1549 = vmatpush1.msra.mxu0 %v1529
  %1550 = vmatprep.subr.mxu0 0.0
  %1551 = vmatpush1.msra.mxu0 %v1530
  %1552 = vmatprep.subr.mxu0 0.0
  %1553 = vmatpush1.msra.mxu0 %v1531
  %1554 = vmatprep.subr.mxu0 0.0
  %1555 = vmatpush1.msra.mxu0 0.0
  %1556 = vmatprep.subr.mxu0 0.0
  %1557 = vmatpush1.msra.mxu0 0.0
  %1558 = vmatprep.subr.mxu0 0.0
  %1559 = vmatpush1.msra.mxu0 0.0
  %1560 = vmatprep.subr.mxu0 0.0
  %1561 = vmatpush1.msra.mxu0 0.0
  %1562 = vmatprep.subr.mxu0 0.0
  %1563 = vmatpush1.msra.mxu0 0.0
  %1564 = vmatprep.subr.mxu0 0.0
  %1565 = vmatpush1.msra.mxu0 0.0
  %1566 = vmatprep.subr.mxu0 0.0
  %1567 = vmatpush1.msra.mxu0 0.0
  %1568 = vmatprep.subr.mxu0 0.0
  %1569 = vmatpush1.msra.mxu0 0.0
  %1570 = vmatprep.subr.mxu0 0.0
  %1571 = vmatpush1.msra.mxu0 0.0
  %1572 = vmatprep.subr.mxu0 0.0
  %1573 = vmatpush1.msra.mxu0 0.0
  %1574 = vmatprep.subr.mxu0 0.0
  %1575 = vmatpush1.msra.mxu0 0.0
  %1576 = vmatprep.subr.mxu0 0.0
  %1577 = vmatpush1.msra.mxu0 0.0
  %1578 = vmatprep.subr.mxu0 0.0
  %1579 = vmatpush1.msra.mxu0 0.0
  %1580 = vmatprep.subr.mxu0 0.0
  %1581 = vmatpush1.msra.mxu0 0.0
  %1582 = vmatprep.subr.mxu0 0.0
  %1583 = vmatpush1.msra.mxu0 0.0
  %1584 = vmatprep.subr.mxu0 0.0
  %1585 = vmatpush1.msra.mxu0 0.0
  %1586 = vmatprep.subr.mxu0 0.0
  %1587 = vmatpush1.msra.mxu0 0.0
  %1588 = vmatprep.subr.mxu0 0.0
  %1589 = vmatpush1.msra.mxu0 0.0
  %1590 = vmatprep.subr.mxu0 0.0
  %1591 = vmatpush1.msra.mxu0 0.0
  %1592 = vmatprep.subr.mxu0 0.0
  %1593 = vmatpush1.msra.mxu0 0.0
  %1594 = vmatprep.subr.mxu0 0.0
  %1595 = vmatpush1.msra.mxu0 0.0
  %1596 = vmatprep.subr.mxu0 0.0
  %1597 = vmatpush1.msra.mxu0 0.0
  %1598 = vmatprep.subr.mxu0 0.0
  %1599 = vmatpush1.msra.mxu0 0.0
  %1600 = vmatprep.subr.mxu0 0.0
  %1601 = vmatpush1.msra.mxu0 0.0
  %1602 = vmatprep.mubr.f32.mxu0 0.0
  %1603 = vmatmul.mubr.f32.gmra.mrb[0].mxu0 %v1533
  %v1604 = vpop.f32.mrb[0].mxu0
  %v1605 = vadd.f32 0.0, %v1604
  %v1606 = vpop.f32.mrb[0].mxu0
  %1607 = vmatprep.mubr.f32.mxu0 0.0
  %1608 = vmatmul.mubr.f32.gmra.mrb[0].mxu0 %v1536
  %v1609 = vpop.f32.mrb[0].mxu0
  %v1610 = vadd.f32 0.0, %v1609
  %v1611 = vpop.f32.mrb[0].mxu0
  %1612 = vdwg.mxu0
  %v1613 = vadd.f32 %v1440, %v1605
  %v1614 = vadd.f32 %v1445, %v1610
  %v1615 = vld [vmem:[%s9] sm:$0x1]
  %v1617 = vlaneseq
  %v1618 = vshrl.u32 %v1617, 7
  %v1619 = vsub.s32 0, %v1618
  %v1620 = vrot.slane %v1615, %v1619
  %v1622 = vadd.f32 %v1613, %v1620
  %v1623 = vadd.f32 %v1614, %v1620
  %v1624 = vld [vmem:[%s2] sm:$0xff]
  %v1625 = vld [vmem:[%s2 + $0x8] sm:$0xff]
  %v1626 = vld [vmem:[%s2 + $0x10] sm:$0xff]
  %v1627 = vld [vmem:[%s2 + $0x18] sm:$0xff]
  %v1628 = vld [vmem:[%s10] sm:$0xff]
  %v1629 = vld [vmem:[%s10 + $0x8] sm:$0xff]
  %v1630 = vld [vmem:[%s10 + $0x10] sm:$0xff]
  %v1631 = vld [vmem:[%s10 + $0x18] sm:$0xff]
  %vm1632 = vcmask 261120
  %v1634 = vsel %vm1632, %v1628, 0
  %v1637 = vsel %vm1632, %v1629, 0
  %v1640 = vsel %vm1632, %v1630, 0
  %v1643 = vsel %vm1632, %v1631, 0
  %1645 = vmatprep.subr.mxu0 0.0
  %1646 = vmatpush1.msra.mxu0 %v1624
  %1647 = vmatprep.subr.mxu0 0.0
  %1648 = vmatpush1.msra.mxu0 %v1625
  %1649 = vmatprep.subr.mxu0 0.0
  %1650 = vmatpush1.msra.mxu0 %v1626
  %1651 = vmatprep.subr.mxu0 0.0
  %1652 = vmatpush1.msra.mxu0 %v1627
  %1653 = vmatprep.subr.mxu0 0.0
  %1654 = vmatpush1.msra.mxu0 0.0
  %1655 = vmatprep.subr.mxu0 0.0
  %1656 = vmatpush1.msra.mxu0 0.0
  %1657 = vmatprep.subr.mxu0 0.0
  %1658 = vmatpush1.msra.mxu0 0.0
  %1659 = vmatprep.subr.mxu0 0.0
  %1660 = vmatpush1.msra.mxu0 0.0
  %1661 = vmatprep.subr.mxu0 0.0
  %1662 = vmatpush1.msra.mxu0 0.0
  %1663 = vmatprep.subr.mxu0 0.0
  %1664 = vmatpush1.msra.mxu0 0.0
  %1665 = vmatprep.subr.mxu0 0.0
  %1666 = vmatpush1.msra.mxu0 0.0
  %1667 = vmatprep.subr.mxu0 0.0
  %1668 = vmatpush1.msra.mxu0 0.0
  %1669 = vmatprep.subr.mxu0 0.0
  %1670 = vmatpush1.msra.mxu0 0.0
  %1671 = vmatprep.subr.mxu0 0.0
  %1672 = vmatpush1.msra.mxu0 0.0
  %1673 = vmatprep.subr.mxu0 0.0
  %1674 = vmatpush1.msra.mxu0 0.0
  %1675 = vmatprep.subr.mxu0 0.0
  %1676 = vmatpush1.msra.mxu0 0.0
  %1677 = vmatprep.subr.mxu0 0.0
  %1678 = vmatpush1.msra.mxu0 0.0
  %1679 = vmatprep.subr.mxu0 0.0
  %1680 = vmatpush1.msra.mxu0 0.0
  %1681 = vmatprep.subr.mxu0 0.0
  %1682 = vmatpush1.msra.mxu0 0.0
  %1683 = vmatprep.subr.mxu0 0.0
  %1684 = vmatpush1.msra.mxu0 0.0
  %1685 = vmatprep.subr.mxu0 0.0
  %1686 = vmatpush1.msra.mxu0 0.0
  %1687 = vmatprep.subr.mxu0 0.0
  %1688 = vmatpush1.msra.mxu0 0.0
  %1689 = vmatprep.subr.mxu0 0.0
  %1690 = vmatpush1.msra.mxu0 0.0
  %1691 = vmatprep.subr.mxu0 0.0
  %1692 = vmatpush1.msra.mxu0 0.0
  %1693 = vmatprep.subr.mxu0 0.0
  %1694 = vmatpush1.msra.mxu0 0.0
  %1695 = vmatprep.subr.mxu0 0.0
  %1696 = vmatpush1.msra.mxu0 0.0
  %1697 = vmatprep.subr.mxu0 0.0
  %1698 = vmatpush1.msra.mxu0 0.0
  %1699 = vmatprep.subr.mxu0 0.0
  %1700 = vmatpush1.msra.mxu0 0.0
  %1701 = vmatprep.subr.mxu0 0.0
  %1702 = vmatpush1.msra.mxu0 0.0
  %1703 = vmatprep.subr.mxu0 0.0
  %1704 = vmatpush1.msra.mxu0 0.0
  %1705 = vmatprep.subr.mxu0 0.0
  %1706 = vmatpush1.msra.mxu0 0.0
  %1707 = vmatprep.subr.mxu0 0.0
  %1708 = vmatpush1.msra.mxu0 0.0
  %1709 = vmatprep.mubr.f32.mxu0 0.0
  %1710 = vmatmul.mubr.f32.gmra.mrb[0].mxu0 %v1634
  %v1711 = vpop.f32.mrb[0].mxu0
  %v1712 = vadd.f32 0.0, %v1711
  %v1713 = vpop.f32.mrb[0].mxu0
  %1714 = vmatprep.mubr.f32.mxu0 0.0
  %1715 = vmatmul.mubr.f32.gmra.mrb[0].mxu0 %v1637
  %v1716 = vpop.f32.mrb[0].mxu0
  %v1717 = vadd.f32 0.0, %v1716
  %v1718 = vpop.f32.mrb[0].mxu0
  %1719 = vmatprep.mubr.f32.mxu0 0.0
  %1720 = vmatmul.mubr.f32.gmra.mrb[0].mxu0 %v1640
  %v1721 = vpop.f32.mrb[0].mxu0
  %v1722 = vadd.f32 0.0, %v1721
  %v1723 = vpop.f32.mrb[0].mxu0
  %1724 = vmatprep.mubr.f32.mxu0 0.0
  %1725 = vmatmul.mubr.f32.gmra.mrb[0].mxu0 %v1643
  %v1726 = vpop.f32.mrb[0].mxu0
  %v1727 = vadd.f32 0.0, %v1726
  %v1728 = vpop.f32.mrb[0].mxu0
  %1729 = vdwg.mxu0
  %v1730 = vld [vmem:[%s11] sm:$0xff]
  %v1731 = vld [vmem:[%s11 + $0x8] sm:$0xff]
  %v1732 = vld [vmem:[%s11 + $0x10] sm:$0xff]
  %v1733 = vld [vmem:[%s11 + $0x18] sm:$0xff]
  %v1734 = vld [vmem:[%s11 + $0x20] sm:$0xff]
  %v1735 = vld [vmem:[%s11 + $0x28] sm:$0xff]
  %v1736 = vld [vmem:[%s11 + $0x30] sm:$0xff]
  %v1737 = vld [vmem:[%s11 + $0x38] sm:$0xff]
  %v1738 = vld [vmem:[%s12] sm:$0xff]
  %v1739 = vld [vmem:[%s12 + $0x8] sm:$0xff]
  %v1740 = vld [vmem:[%s12 + $0x10] sm:$0xff]
  %v1741 = vld [vmem:[%s12 + $0x18] sm:$0xff]
  %v1743 = vsel %vm61, %v1738, 0
  %v1746 = vsel %vm61, %v1739, 0
  %v1749 = vsel %vm61, %v1740, 0
  %v1752 = vsel %vm61, %v1741, 0
  %1754 = vmatprep.subr.mxu0 0.0
  %1755 = vmatpush1.msra.mxu0 %v1622
  %1756 = vmatprep.subr.mxu0 0.0
  %1757 = vmatpush1.msra.mxu0 %v1623
  %1758 = vmatprep.subr.mxu0 0.0
  %1759 = vmatpush1.msra.mxu0 0.0
  %1760 = vmatprep.subr.mxu0 0.0
  %1761 = vmatpush1.msra.mxu0 0.0
  %1762 = vmatprep.subr.mxu0 0.0
  %1763 = vmatpush1.msra.mxu0 0.0
  %1764 = vmatprep.subr.mxu0 0.0
  %1765 = vmatpush1.msra.mxu0 0.0
  %1766 = vmatprep.subr.mxu0 0.0
  %1767 = vmatpush1.msra.mxu0 0.0
  %1768 = vmatprep.subr.mxu0 0.0
  %1769 = vmatpush1.msra.mxu0 0.0
  %1770 = vmatprep.subr.mxu0 0.0
  %1771 = vmatpush1.msra.mxu0 0.0
  %1772 = vmatprep.subr.mxu0 0.0
  %1773 = vmatpush1.msra.mxu0 0.0
  %1774 = vmatprep.subr.mxu0 0.0
  %1775 = vmatpush1.msra.mxu0 0.0
  %1776 = vmatprep.subr.mxu0 0.0
  %1777 = vmatpush1.msra.mxu0 0.0
  %1778 = vmatprep.subr.mxu0 0.0
  %1779 = vmatpush1.msra.mxu0 0.0
  %1780 = vmatprep.subr.mxu0 0.0
  %1781 = vmatpush1.msra.mxu0 0.0
  %1782 = vmatprep.subr.mxu0 0.0
  %1783 = vmatpush1.msra.mxu0 0.0
  %1784 = vmatprep.subr.mxu0 0.0
  %1785 = vmatpush1.msra.mxu0 0.0
  %1786 = vmatprep.subr.mxu0 0.0
  %1787 = vmatpush1.msra.mxu0 0.0
  %1788 = vmatprep.subr.mxu0 0.0
  %1789 = vmatpush1.msra.mxu0 0.0
  %1790 = vmatprep.subr.mxu0 0.0
  %1791 = vmatpush1.msra.mxu0 0.0
  %1792 = vmatprep.subr.mxu0 0.0
  %1793 = vmatpush1.msra.mxu0 0.0
  %1794 = vmatprep.subr.mxu0 0.0
  %1795 = vmatpush1.msra.mxu0 0.0
  %1796 = vmatprep.subr.mxu0 0.0
  %1797 = vmatpush1.msra.mxu0 0.0
  %1798 = vmatprep.subr.mxu0 0.0
  %1799 = vmatpush1.msra.mxu0 0.0
  %1800 = vmatprep.subr.mxu0 0.0
  %1801 = vmatpush1.msra.mxu0 0.0
  %1802 = vmatprep.subr.mxu0 0.0
  %1803 = vmatpush1.msra.mxu0 0.0
  %1804 = vmatprep.subr.mxu0 0.0
  %1805 = vmatpush1.msra.mxu0 0.0
  %1806 = vmatprep.subr.mxu0 0.0
  %1807 = vmatpush1.msra.mxu0 0.0
  %1808 = vmatprep.subr.mxu0 0.0
  %1809 = vmatpush1.msra.mxu0 0.0
  %1810 = vmatprep.subr.mxu0 0.0
  %1811 = vmatpush1.msra.mxu0 0.0
  %1812 = vmatprep.subr.mxu0 0.0
  %1813 = vmatpush1.msra.mxu0 0.0
  %1814 = vmatprep.subr.mxu0 0.0
  %1815 = vmatpush1.msra.mxu0 0.0
  %1816 = vmatprep.subr.mxu0 0.0
  %1817 = vmatpush1.msra.mxu0 0.0
  %1818 = vmatprep.mubr.f32.mxu0 0.0
  %1819 = vmatmul.mubr.f32.gmra.mrb[0].mxu0 %v1743
  %v1820 = vpop.f32.mrb[0].mxu0
  %v1821 = vadd.f32 0.0, %v1820
  %v1822 = vpop.f32.mrb[0].mxu0
  %1823 = vmatprep.mubr.f32.mxu0 0.0
  %1824 = vmatmul.mubr.f32.gmra.mrb[0].mxu0 %v1746
  %v1825 = vpop.f32.mrb[0].mxu0
  %v1826 = vadd.f32 0.0, %v1825
  %v1827 = vpop.f32.mrb[0].mxu0
  %1828 = vmatprep.mubr.f32.mxu0 0.0
  %1829 = vmatmul.mubr.f32.gmra.mrb[0].mxu0 %v1749
  %v1830 = vpop.f32.mrb[0].mxu0
  %v1831 = vadd.f32 0.0, %v1830
  %v1832 = vpop.f32.mrb[0].mxu0
  %1833 = vmatprep.mubr.f32.mxu0 0.0
  %1834 = vmatmul.mubr.f32.gmra.mrb[0].mxu0 %v1752
  %v1835 = vpop.f32.mrb[0].mxu0
  %v1836 = vadd.f32 0.0, %v1835
  %v1837 = vpop.f32.mrb[0].mxu0
  %1838 = vdwg.mxu0
  %v1839 = vld [vmem:[%s13] sm:$0xff]
  %v1840 = vld [vmem:[%s13 + $0x8] sm:$0xff]
  %v1841 = vld [vmem:[%s13 + $0x10] sm:$0xff]
  %v1842 = vld [vmem:[%s13 + $0x18] sm:$0xff]
  %v1843 = vld [vmem:[%s13 + $0x20] sm:$0xff]
  %v1844 = vld [vmem:[%s13 + $0x28] sm:$0xff]
  %v1845 = vld [vmem:[%s13 + $0x30] sm:$0xff]
  %v1846 = vld [vmem:[%s13 + $0x38] sm:$0xff]
  %v1848 = vsel %vm243, %v1821, 0
  %v1851 = vsel %vm243, %v1826, 0
  %v1854 = vsel %vm243, %v1831, 0
  %v1857 = vsel %vm243, %v1836, 0
  %1859 = vmatprep.subr.mxu0 0.0
  %1860 = vmatpush1.msra.mxu0 %v1839
  %1861 = vmatprep.subr.mxu0 0.0
  %1862 = vmatpush1.msra.mxu0 %v1840
  %1863 = vmatprep.subr.mxu0 0.0
  %1864 = vmatpush1.msra.mxu0 %v1841
  %1865 = vmatprep.subr.mxu0 0.0
  %1866 = vmatpush1.msra.mxu0 %v1842
  %1867 = vmatprep.subr.mxu0 0.0
  %1868 = vmatpush1.msra.mxu0 %v1843
  %1869 = vmatprep.subr.mxu0 0.0
  %1870 = vmatpush1.msra.mxu0 %v1844
  %1871 = vmatprep.subr.mxu0 0.0
  %1872 = vmatpush1.msra.mxu0 %v1845
  %1873 = vmatprep.subr.mxu0 0.0
  %1874 = vmatpush1.msra.mxu0 %v1846
  %1875 = vmatprep.subr.mxu0 0.0
  %1876 = vmatpush1.msra.mxu0 0.0
  %1877 = vmatprep.subr.mxu0 0.0
  %1878 = vmatpush1.msra.mxu0 0.0
  %1879 = vmatprep.subr.mxu0 0.0
  %1880 = vmatpush1.msra.mxu0 0.0
  %1881 = vmatprep.subr.mxu0 0.0
  %1882 = vmatpush1.msra.mxu0 0.0
  %1883 = vmatprep.subr.mxu0 0.0
  %1884 = vmatpush1.msra.mxu0 0.0
  %1885 = vmatprep.subr.mxu0 0.0
  %1886 = vmatpush1.msra.mxu0 0.0
  %1887 = vmatprep.subr.mxu0 0.0
  %1888 = vmatpush1.msra.mxu0 0.0
  %1889 = vmatprep.subr.mxu0 0.0
  %1890 = vmatpush1.msra.mxu0 0.0
  %1891 = vmatprep.subr.mxu0 0.0
  %1892 = vmatpush1.msra.mxu0 0.0
  %1893 = vmatprep.subr.mxu0 0.0
  %1894 = vmatpush1.msra.mxu0 0.0
  %1895 = vmatprep.subr.mxu0 0.0
  %1896 = vmatpush1.msra.mxu0 0.0
  %1897 = vmatprep.subr.mxu0 0.0
  %1898 = vmatpush1.msra.mxu0 0.0
  %1899 = vmatprep.subr.mxu0 0.0
  %1900 = vmatpush1.msra.mxu0 0.0
  %1901 = vmatprep.subr.mxu0 0.0
  %1902 = vmatpush1.msra.mxu0 0.0
  %1903 = vmatprep.subr.mxu0 0.0
  %1904 = vmatpush1.msra.mxu0 0.0
  %1905 = vmatprep.subr.mxu0 0.0
  %1906 = vmatpush1.msra.mxu0 0.0
  %1907 = vmatprep.subr.mxu0 0.0
  %1908 = vmatpush1.msra.mxu0 0.0
  %1909 = vmatprep.subr.mxu0 0.0
  %1910 = vmatpush1.msra.mxu0 0.0
  %1911 = vmatprep.subr.mxu0 0.0
  %1912 = vmatpush1.msra.mxu0 0.0
  %1913 = vmatprep.subr.mxu0 0.0
  %1914 = vmatpush1.msra.mxu0 0.0
  %1915 = vmatprep.subr.mxu0 0.0
  %1916 = vmatpush1.msra.mxu0 0.0
  %1917 = vmatprep.subr.mxu0 0.0
  %1918 = vmatpush1.msra.mxu0 0.0
  %1919 = vmatprep.subr.mxu0 0.0
  %1920 = vmatpush1.msra.mxu0 0.0
  %1921 = vmatprep.subr.mxu0 0.0
  %1922 = vmatpush1.msra.mxu0 0.0
  %1923 = vmatprep.mubr.f32.mxu0 0.0
  %1924 = vmatmul.mubr.f32.gmra.mrb[0].mxu0 %v1848
  %v1925 = vpop.f32.mrb[0].mxu0
  %v1926 = vadd.f32 0.0, %v1925
  %v1927 = vpop.f32.mrb[0].mxu0
  %1928 = vmatprep.mubr.f32.mxu0 0.0
  %1929 = vmatmul.mubr.f32.gmra.mrb[0].mxu0 %v1851
  %v1930 = vpop.f32.mrb[0].mxu0
  %v1931 = vadd.f32 0.0, %v1930
  %v1932 = vpop.f32.mrb[0].mxu0
  %1933 = vmatprep.mubr.f32.mxu0 0.0
  %1934 = vmatmul.mubr.f32.gmra.mrb[0].mxu0 %v1854
  %v1935 = vpop.f32.mrb[0].mxu0
  %v1936 = vadd.f32 0.0, %v1935
  %v1937 = vpop.f32.mrb[0].mxu0
  %1938 = vmatprep.mubr.f32.mxu0 0.0
  %1939 = vmatmul.mubr.f32.gmra.mrb[0].mxu0 %v1857
  %v1940 = vpop.f32.mrb[0].mxu0
  %v1941 = vadd.f32 0.0, %v1940
  %v1942 = vpop.f32.mrb[0].mxu0
  %1943 = vdwg.mxu0
  %v1945 = vsel %vm243, %v1712, 0
  %v1948 = vsel %vm243, %v1717, 0
  %v1951 = vsel %vm243, %v1722, 0
  %v1954 = vsel %vm243, %v1727, 0
  %1956 = vmatprep.subr.mxu0 0.0
  %1957 = vmatpush1.msra.mxu0 %v1730
  %1958 = vmatprep.subr.mxu0 0.0
  %1959 = vmatpush1.msra.mxu0 %v1731
  %1960 = vmatprep.subr.mxu0 0.0
  %1961 = vmatpush1.msra.mxu0 %v1732
  %1962 = vmatprep.subr.mxu0 0.0
  %1963 = vmatpush1.msra.mxu0 %v1733
  %1964 = vmatprep.subr.mxu0 0.0
  %1965 = vmatpush1.msra.mxu0 %v1734
  %1966 = vmatprep.subr.mxu0 0.0
  %1967 = vmatpush1.msra.mxu0 %v1735
  %1968 = vmatprep.subr.mxu0 0.0
  %1969 = vmatpush1.msra.mxu0 %v1736
  %1970 = vmatprep.subr.mxu0 0.0
  %1971 = vmatpush1.msra.mxu0 %v1737
  %1972 = vmatprep.subr.mxu0 0.0
  %1973 = vmatpush1.msra.mxu0 0.0
  %1974 = vmatprep.subr.mxu0 0.0
  %1975 = vmatpush1.msra.mxu0 0.0
  %1976 = vmatprep.subr.mxu0 0.0
  %1977 = vmatpush1.msra.mxu0 0.0
  %1978 = vmatprep.subr.mxu0 0.0
  %1979 = vmatpush1.msra.mxu0 0.0
  %1980 = vmatprep.subr.mxu0 0.0
  %1981 = vmatpush1.msra.mxu0 0.0
  %1982 = vmatprep.subr.mxu0 0.0
  %1983 = vmatpush1.msra.mxu0 0.0
  %1984 = vmatprep.subr.mxu0 0.0
  %1985 = vmatpush1.msra.mxu0 0.0
  %1986 = vmatprep.subr.mxu0 0.0
  %1987 = vmatpush1.msra.mxu0 0.0
  %1988 = vmatprep.subr.mxu0 0.0
  %1989 = vmatpush1.msra.mxu0 0.0
  %1990 = vmatprep.subr.mxu0 0.0
  %1991 = vmatpush1.msra.mxu0 0.0
  %1992 = vmatprep.subr.mxu0 0.0
  %1993 = vmatpush1.msra.mxu0 0.0
  %1994 = vmatprep.subr.mxu0 0.0
  %1995 = vmatpush1.msra.mxu0 0.0
  %1996 = vmatprep.subr.mxu0 0.0
  %1997 = vmatpush1.msra.mxu0 0.0
  %1998 = vmatprep.subr.mxu0 0.0
  %1999 = vmatpush1.msra.mxu0 0.0
  %2000 = vmatprep.subr.mxu0 0.0
  %2001 = vmatpush1.msra.mxu0 0.0
  %2002 = vmatprep.subr.mxu0 0.0
  %2003 = vmatpush1.msra.mxu0 0.0
  %2004 = vmatprep.subr.mxu0 0.0
  %2005 = vmatpush1.msra.mxu0 0.0
  %2006 = vmatprep.subr.mxu0 0.0
  %2007 = vmatpush1.msra.mxu0 0.0
  %2008 = vmatprep.subr.mxu0 0.0
  %2009 = vmatpush1.msra.mxu0 0.0
  %2010 = vmatprep.subr.mxu0 0.0
  %2011 = vmatpush1.msra.mxu0 0.0
  %2012 = vmatprep.subr.mxu0 0.0
  %2013 = vmatpush1.msra.mxu0 0.0
  %2014 = vmatprep.subr.mxu0 0.0
  %2015 = vmatpush1.msra.mxu0 0.0
  %2016 = vmatprep.subr.mxu0 0.0
  %2017 = vmatpush1.msra.mxu0 0.0
  %2018 = vmatprep.subr.mxu0 0.0
  %2019 = vmatpush1.msra.mxu0 0.0
  %2020 = vmatprep.mubr.f32.mxu0 0.0
  %2021 = vmatmul.mubr.f32.gmra.mrb[0].mxu0 %v1945
  %v2022 = vpop.f32.mrb[0].mxu0
  %v2023 = vadd.f32 %v1926, %v2022
  %v2024 = vpop.f32.mrb[0].mxu0
  %2025 = vmatprep.mubr.f32.mxu0 0.0
  %2026 = vmatmul.mubr.f32.gmra.mrb[0].mxu0 %v1948
  %v2027 = vpop.f32.mrb[0].mxu0
  %v2028 = vadd.f32 %v1931, %v2027
  %v2029 = vpop.f32.mrb[0].mxu0
  %2030 = vmatprep.mubr.f32.mxu0 0.0
  %2031 = vmatmul.mubr.f32.gmra.mrb[0].mxu0 %v1951
  %v2032 = vpop.f32.mrb[0].mxu0
  %v2033 = vadd.f32 %v1936, %v2032
  %v2034 = vpop.f32.mrb[0].mxu0
  %2035 = vmatprep.mubr.f32.mxu0 0.0
  %2036 = vmatmul.mubr.f32.gmra.mrb[0].mxu0 %v1954
  %v2037 = vpop.f32.mrb[0].mxu0
  %v2038 = vadd.f32 %v1941, %v2037
  %v2039 = vpop.f32.mrb[0].mxu0
  %2040 = vdwg.mxu0
  %s2041 = scalar_lea.vmem %s10, 32
  %v2042 = vld [vmem:[%s2041] sm:$0xff]
  %v2043 = vld [vmem:[%s2041 + $0x8] sm:$0xff]
  %v2044 = vld [vmem:[%s2041 + $0x10] sm:$0xff]
  %v2045 = vld [vmem:[%s2041 + $0x18] sm:$0xff]
  %v2047 = vsel %vm1632, %v2042, 0
  %v2050 = vsel %vm1632, %v2043, 0
  %v2053 = vsel %vm1632, %v2044, 0
  %v2056 = vsel %vm1632, %v2045, 0
  %2058 = vmatprep.subr.mxu0 0.0
  %2059 = vmatpush1.msra.mxu0 %v1624
  %2060 = vmatprep.subr.mxu0 0.0
  %2061 = vmatpush1.msra.mxu0 %v1625
  %2062 = vmatprep.subr.mxu0 0.0
  %2063 = vmatpush1.msra.mxu0 %v1626
  %2064 = vmatprep.subr.mxu0 0.0
  %2065 = vmatpush1.msra.mxu0 %v1627
  %2066 = vmatprep.subr.mxu0 0.0
  %2067 = vmatpush1.msra.mxu0 0.0
  %2068 = vmatprep.subr.mxu0 0.0
  %2069 = vmatpush1.msra.mxu0 0.0
  %2070 = vmatprep.subr.mxu0 0.0
  %2071 = vmatpush1.msra.mxu0 0.0
  %2072 = vmatprep.subr.mxu0 0.0
  %2073 = vmatpush1.msra.mxu0 0.0
  %2074 = vmatprep.subr.mxu0 0.0
  %2075 = vmatpush1.msra.mxu0 0.0
  %2076 = vmatprep.subr.mxu0 0.0
  %2077 = vmatpush1.msra.mxu0 0.0
  %2078 = vmatprep.subr.mxu0 0.0
  %2079 = vmatpush1.msra.mxu0 0.0
  %2080 = vmatprep.subr.mxu0 0.0
  %2081 = vmatpush1.msra.mxu0 0.0
  %2082 = vmatprep.subr.mxu0 0.0
  %2083 = vmatpush1.msra.mxu0 0.0
  %2084 = vmatprep.subr.mxu0 0.0
  %2085 = vmatpush1.msra.mxu0 0.0
  %2086 = vmatprep.subr.mxu0 0.0
  %2087 = vmatpush1.msra.mxu0 0.0
  %2088 = vmatprep.subr.mxu0 0.0
  %2089 = vmatpush1.msra.mxu0 0.0
  %2090 = vmatprep.subr.mxu0 0.0
  %2091 = vmatpush1.msra.mxu0 0.0
  %2092 = vmatprep.subr.mxu0 0.0
  %2093 = vmatpush1.msra.mxu0 0.0
  %2094 = vmatprep.subr.mxu0 0.0
  %2095 = vmatpush1.msra.mxu0 0.0
  %2096 = vmatprep.subr.mxu0 0.0
  %2097 = vmatpush1.msra.mxu0 0.0
  %2098 = vmatprep.subr.mxu0 0.0
  %2099 = vmatpush1.msra.mxu0 0.0
  %2100 = vmatprep.subr.mxu0 0.0
  %2101 = vmatpush1.msra.mxu0 0.0
  %2102 = vmatprep.subr.mxu0 0.0
  %2103 = vmatpush1.msra.mxu0 0.0
  %2104 = vmatprep.subr.mxu0 0.0
  %2105 = vmatpush1.msra.mxu0 0.0
  %2106 = vmatprep.subr.mxu0 0.0
  %2107 = vmatpush1.msra.mxu0 0.0
  %2108 = vmatprep.subr.mxu0 0.0
  %2109 = vmatpush1.msra.mxu0 0.0
  %2110 = vmatprep.subr.mxu0 0.0
  %2111 = vmatpush1.msra.mxu0 0.0
  %2112 = vmatprep.subr.mxu0 0.0
  %2113 = vmatpush1.msra.mxu0 0.0
  %2114 = vmatprep.subr.mxu0 0.0
  %2115 = vmatpush1.msra.mxu0 0.0
  %2116 = vmatprep.subr.mxu0 0.0
  %2117 = vmatpush1.msra.mxu0 0.0
  %2118 = vmatprep.subr.mxu0 0.0
  %2119 = vmatpush1.msra.mxu0 0.0
  %2120 = vmatprep.subr.mxu0 0.0
  %2121 = vmatpush1.msra.mxu0 0.0
  %2122 = vmatprep.mubr.f32.mxu0 0.0
  %2123 = vmatmul.mubr.f32.gmra.mrb[0].mxu0 %v2047
  %v2124 = vpop.f32.mrb[0].mxu0
  %v2125 = vadd.f32 0.0, %v2124
  %v2126 = vpop.f32.mrb[0].mxu0
  %2127 = vmatprep.mubr.f32.mxu0 0.0
  %2128 = vmatmul.mubr.f32.gmra.mrb[0].mxu0 %v2050
  %v2129 = vpop.f32.mrb[0].mxu0
  %v2130 = vadd.f32 0.0, %v2129
  %v2131 = vpop.f32.mrb[0].mxu0
  %2132 = vmatprep.mubr.f32.mxu0 0.0
  %2133 = vmatmul.mubr.f32.gmra.mrb[0].mxu0 %v2053
  %v2134 = vpop.f32.mrb[0].mxu0
  %v2135 = vadd.f32 0.0, %v2134
  %v2136 = vpop.f32.mrb[0].mxu0
  %2137 = vmatprep.mubr.f32.mxu0 0.0
  %2138 = vmatmul.mubr.f32.gmra.mrb[0].mxu0 %v2056
  %v2139 = vpop.f32.mrb[0].mxu0
  %v2140 = vadd.f32 0.0, %v2139
  %v2141 = vpop.f32.mrb[0].mxu0
  %2142 = vdwg.mxu0
  %s2143 = scalar_lea.vmem %s11, 64
  %v2144 = vld [vmem:[%s2143] sm:$0xff]
  %v2145 = vld [vmem:[%s2143 + $0x8] sm:$0xff]
  %v2146 = vld [vmem:[%s2143 + $0x10] sm:$0xff]
  %v2147 = vld [vmem:[%s2143 + $0x18] sm:$0xff]
  %v2148 = vld [vmem:[%s2143 + $0x20] sm:$0xff]
  %v2149 = vld [vmem:[%s2143 + $0x28] sm:$0xff]
  %v2150 = vld [vmem:[%s2143 + $0x30] sm:$0xff]
  %v2151 = vld [vmem:[%s2143 + $0x38] sm:$0xff]
  %v2153 = vsel %vm243, %v2125, 0
  %v2156 = vsel %vm243, %v2130, 0
  %v2159 = vsel %vm243, %v2135, 0
  %v2162 = vsel %vm243, %v2140, 0
  %2164 = vmatprep.subr.mxu0 0.0
  %2165 = vmatpush1.msra.mxu0 %v2144
  %2166 = vmatprep.subr.mxu0 0.0
  %2167 = vmatpush1.msra.mxu0 %v2145
  %2168 = vmatprep.subr.mxu0 0.0
  %2169 = vmatpush1.msra.mxu0 %v2146
  %2170 = vmatprep.subr.mxu0 0.0
  %2171 = vmatpush1.msra.mxu0 %v2147
  %2172 = vmatprep.subr.mxu0 0.0
  %2173 = vmatpush1.msra.mxu0 %v2148
  %2174 = vmatprep.subr.mxu0 0.0
  %2175 = vmatpush1.msra.mxu0 %v2149
  %2176 = vmatprep.subr.mxu0 0.0
  %2177 = vmatpush1.msra.mxu0 %v2150
  %2178 = vmatprep.subr.mxu0 0.0
  %2179 = vmatpush1.msra.mxu0 %v2151
  %2180 = vmatprep.subr.mxu0 0.0
  %2181 = vmatpush1.msra.mxu0 0.0
  %2182 = vmatprep.subr.mxu0 0.0
  %2183 = vmatpush1.msra.mxu0 0.0
  %2184 = vmatprep.subr.mxu0 0.0
  %2185 = vmatpush1.msra.mxu0 0.0
  %2186 = vmatprep.subr.mxu0 0.0
  %2187 = vmatpush1.msra.mxu0 0.0
  %2188 = vmatprep.subr.mxu0 0.0
  %2189 = vmatpush1.msra.mxu0 0.0
  %2190 = vmatprep.subr.mxu0 0.0
  %2191 = vmatpush1.msra.mxu0 0.0
  %2192 = vmatprep.subr.mxu0 0.0
  %2193 = vmatpush1.msra.mxu0 0.0
  %2194 = vmatprep.subr.mxu0 0.0
  %2195 = vmatpush1.msra.mxu0 0.0
  %2196 = vmatprep.subr.mxu0 0.0
  %2197 = vmatpush1.msra.mxu0 0.0
  %2198 = vmatprep.subr.mxu0 0.0
  %2199 = vmatpush1.msra.mxu0 0.0
  %2200 = vmatprep.subr.mxu0 0.0
  %2201 = vmatpush1.msra.mxu0 0.0
  %2202 = vmatprep.subr.mxu0 0.0
  %2203 = vmatpush1.msra.mxu0 0.0
  %2204 = vmatprep.subr.mxu0 0.0
  %2205 = vmatpush1.msra.mxu0 0.0
  %2206 = vmatprep.subr.mxu0 0.0
  %2207 = vmatpush1.msra.mxu0 0.0
  %2208 = vmatprep.subr.mxu0 0.0
  %2209 = vmatpush1.msra.mxu0 0.0
  %2210 = vmatprep.subr.mxu0 0.0
  %2211 = vmatpush1.msra.mxu0 0.0
  %2212 = vmatprep.subr.mxu0 0.0
  %2213 = vmatpush1.msra.mxu0 0.0
  %2214 = vmatprep.subr.mxu0 0.0
  %2215 = vmatpush1.msra.mxu0 0.0
  %2216 = vmatprep.subr.mxu0 0.0
  %2217 = vmatpush1.msra.mxu0 0.0
  %2218 = vmatprep.subr.mxu0 0.0
  %2219 = vmatpush1.msra.mxu0 0.0
  %2220 = vmatprep.subr.mxu0 0.0
  %2221 = vmatpush1.msra.mxu0 0.0
  %2222 = vmatprep.subr.mxu0 0.0
  %2223 = vmatpush1.msra.mxu0 0.0
  %2224 = vmatprep.subr.mxu0 0.0
  %2225 = vmatpush1.msra.mxu0 0.0
  %2226 = vmatprep.subr.mxu0 0.0
  %2227 = vmatpush1.msra.mxu0 0.0
  %2228 = vmatprep.mubr.f32.mxu0 0.0
  %2229 = vmatmul.mubr.f32.gmra.mrb[0].mxu0 %v2153
  %v2230 = vpop.f32.mrb[0].mxu0
  %v2231 = vadd.f32 0.0, %v2230
  %v2232 = vpop.f32.mrb[0].mxu0
  %2233 = vmatprep.mubr.f32.mxu0 0.0
  %2234 = vmatmul.mubr.f32.gmra.mrb[0].mxu0 %v2156
  %v2235 = vpop.f32.mrb[0].mxu0
  %v2236 = vadd.f32 0.0, %v2235
  %v2237 = vpop.f32.mrb[0].mxu0
  %2238 = vmatprep.mubr.f32.mxu0 0.0
  %2239 = vmatmul.mubr.f32.gmra.mrb[0].mxu0 %v2159
  %v2240 = vpop.f32.mrb[0].mxu0
  %v2241 = vadd.f32 0.0, %v2240
  %v2242 = vpop.f32.mrb[0].mxu0
  %2243 = vmatprep.mubr.f32.mxu0 0.0
  %2244 = vmatmul.mubr.f32.gmra.mrb[0].mxu0 %v2162
  %v2245 = vpop.f32.mrb[0].mxu0
  %v2246 = vadd.f32 0.0, %v2245
  %v2247 = vpop.f32.mrb[0].mxu0
  %2248 = vdwg.mxu0
  %v2249 = vadd.f32 %v2023, %v2231
  %v2250 = vadd.f32 %v2028, %v2236
  %v2251 = vadd.f32 %v2033, %v2241
  %v2252 = vadd.f32 %v2038, %v2246
  %s2253 = scalar_lea.vmem %s12, 32
  %v2254 = vld [vmem:[%s2253] sm:$0xff]
  %v2255 = vld [vmem:[%s2253 + $0x8] sm:$0xff]
  %v2256 = vld [vmem:[%s2253 + $0x10] sm:$0xff]
  %v2257 = vld [vmem:[%s2253 + $0x18] sm:$0xff]
  %v2259 = vsel %vm61, %v2254, 0
  %v2262 = vsel %vm61, %v2255, 0
  %v2265 = vsel %vm61, %v2256, 0
  %v2268 = vsel %vm61, %v2257, 0
  %2270 = vmatprep.subr.mxu0 0.0
  %2271 = vmatpush1.msra.mxu0 %v1622
  %2272 = vmatprep.subr.mxu0 0.0
  %2273 = vmatpush1.msra.mxu0 %v1623
  %2274 = vmatprep.subr.mxu0 0.0
  %2275 = vmatpush1.msra.mxu0 0.0
  %2276 = vmatprep.subr.mxu0 0.0
  %2277 = vmatpush1.msra.mxu0 0.0
  %2278 = vmatprep.subr.mxu0 0.0
  %2279 = vmatpush1.msra.mxu0 0.0
  %2280 = vmatprep.subr.mxu0 0.0
  %2281 = vmatpush1.msra.mxu0 0.0
  %2282 = vmatprep.subr.mxu0 0.0
  %2283 = vmatpush1.msra.mxu0 0.0
  %2284 = vmatprep.subr.mxu0 0.0
  %2285 = vmatpush1.msra.mxu0 0.0
  %2286 = vmatprep.subr.mxu0 0.0
  %2287 = vmatpush1.msra.mxu0 0.0
  %2288 = vmatprep.subr.mxu0 0.0
  %2289 = vmatpush1.msra.mxu0 0.0
  %2290 = vmatprep.subr.mxu0 0.0
  %2291 = vmatpush1.msra.mxu0 0.0
  %2292 = vmatprep.subr.mxu0 0.0
  %2293 = vmatpush1.msra.mxu0 0.0
  %2294 = vmatprep.subr.mxu0 0.0
  %2295 = vmatpush1.msra.mxu0 0.0
  %2296 = vmatprep.subr.mxu0 0.0
  %2297 = vmatpush1.msra.mxu0 0.0
  %2298 = vmatprep.subr.mxu0 0.0
  %2299 = vmatpush1.msra.mxu0 0.0
  %2300 = vmatprep.subr.mxu0 0.0
  %2301 = vmatpush1.msra.mxu0 0.0
  %2302 = vmatprep.subr.mxu0 0.0
  %2303 = vmatpush1.msra.mxu0 0.0
  %2304 = vmatprep.subr.mxu0 0.0
  %2305 = vmatpush1.msra.mxu0 0.0
  %2306 = vmatprep.subr.mxu0 0.0
  %2307 = vmatpush1.msra.mxu0 0.0
  %2308 = vmatprep.subr.mxu0 0.0
  %2309 = vmatpush1.msra.mxu0 0.0
  %2310 = vmatprep.subr.mxu0 0.0
  %2311 = vmatpush1.msra.mxu0 0.0
  %2312 = vmatprep.subr.mxu0 0.0
  %2313 = vmatpush1.msra.mxu0 0.0
  %2314 = vmatprep.subr.mxu0 0.0
  %2315 = vmatpush1.msra.mxu0 0.0
  %2316 = vmatprep.subr.mxu0 0.0
  %2317 = vmatpush1.msra.mxu0 0.0
  %2318 = vmatprep.subr.mxu0 0.0
  %2319 = vmatpush1.msra.mxu0 0.0
  %2320 = vmatprep.subr.mxu0 0.0
  %2321 = vmatpush1.msra.mxu0 0.0
  %2322 = vmatprep.subr.mxu0 0.0
  %2323 = vmatpush1.msra.mxu0 0.0
  %2324 = vmatprep.subr.mxu0 0.0
  %2325 = vmatpush1.msra.mxu0 0.0
  %2326 = vmatprep.subr.mxu0 0.0
  %2327 = vmatpush1.msra.mxu0 0.0
  %2328 = vmatprep.subr.mxu0 0.0
  %2329 = vmatpush1.msra.mxu0 0.0
  %2330 = vmatprep.subr.mxu0 0.0
  %2331 = vmatpush1.msra.mxu0 0.0
  %2332 = vmatprep.subr.mxu0 0.0
  %2333 = vmatpush1.msra.mxu0 0.0
  %2334 = vmatprep.mubr.f32.mxu0 0.0
  %2335 = vmatmul.mubr.f32.gmra.mrb[0].mxu0 %v2259
  %v2336 = vpop.f32.mrb[0].mxu0
  %v2337 = vadd.f32 0.0, %v2336
  %v2338 = vpop.f32.mrb[0].mxu0
  %2339 = vmatprep.mubr.f32.mxu0 0.0
  %2340 = vmatmul.mubr.f32.gmra.mrb[0].mxu0 %v2262
  %v2341 = vpop.f32.mrb[0].mxu0
  %v2342 = vadd.f32 0.0, %v2341
  %v2343 = vpop.f32.mrb[0].mxu0
  %2344 = vmatprep.mubr.f32.mxu0 0.0
  %2345 = vmatmul.mubr.f32.gmra.mrb[0].mxu0 %v2265
  %v2346 = vpop.f32.mrb[0].mxu0
  %v2347 = vadd.f32 0.0, %v2346
  %v2348 = vpop.f32.mrb[0].mxu0
  %2349 = vmatprep.mubr.f32.mxu0 0.0
  %2350 = vmatmul.mubr.f32.gmra.mrb[0].mxu0 %v2268
  %v2351 = vpop.f32.mrb[0].mxu0
  %v2352 = vadd.f32 0.0, %v2351
  %v2353 = vpop.f32.mrb[0].mxu0
  %2354 = vdwg.mxu0
  %s2355 = scalar_lea.vmem %s13, 64
  %v2356 = vld [vmem:[%s2355] sm:$0xff]
  %v2357 = vld [vmem:[%s2355 + $0x8] sm:$0xff]
  %v2358 = vld [vmem:[%s2355 + $0x10] sm:$0xff]
  %v2359 = vld [vmem:[%s2355 + $0x18] sm:$0xff]
  %v2360 = vld [vmem:[%s2355 + $0x20] sm:$0xff]
  %v2361 = vld [vmem:[%s2355 + $0x28] sm:$0xff]
  %v2362 = vld [vmem:[%s2355 + $0x30] sm:$0xff]
  %v2363 = vld [vmem:[%s2355 + $0x38] sm:$0xff]
  %v2365 = vsel %vm243, %v2337, 0
  %v2368 = vsel %vm243, %v2342, 0
  %v2371 = vsel %vm243, %v2347, 0
  %v2374 = vsel %vm243, %v2352, 0
  %2376 = vmatprep.subr.mxu0 0.0
  %2377 = vmatpush1.msra.mxu0 %v2356
  %2378 = vmatprep.subr.mxu0 0.0
  %2379 = vmatpush1.msra.mxu0 %v2357
  %2380 = vmatprep.subr.mxu0 0.0
  %2381 = vmatpush1.msra.mxu0 %v2358
  %2382 = vmatprep.subr.mxu0 0.0
  %2383 = vmatpush1.msra.mxu0 %v2359
  %2384 = vmatprep.subr.mxu0 0.0
  %2385 = vmatpush1.msra.mxu0 %v2360
  %2386 = vmatprep.subr.mxu0 0.0
  %2387 = vmatpush1.msra.mxu0 %v2361
  %2388 = vmatprep.subr.mxu0 0.0
  %2389 = vmatpush1.msra.mxu0 %v2362
  %2390 = vmatprep.subr.mxu0 0.0
  %2391 = vmatpush1.msra.mxu0 %v2363
  %2392 = vmatprep.subr.mxu0 0.0
  %2393 = vmatpush1.msra.mxu0 0.0
  %2394 = vmatprep.subr.mxu0 0.0
  %2395 = vmatpush1.msra.mxu0 0.0
  %2396 = vmatprep.subr.mxu0 0.0
  %2397 = vmatpush1.msra.mxu0 0.0
  %2398 = vmatprep.subr.mxu0 0.0
  %2399 = vmatpush1.msra.mxu0 0.0
  %2400 = vmatprep.subr.mxu0 0.0
  %2401 = vmatpush1.msra.mxu0 0.0
  %2402 = vmatprep.subr.mxu0 0.0
  %2403 = vmatpush1.msra.mxu0 0.0
  %2404 = vmatprep.subr.mxu0 0.0
  %2405 = vmatpush1.msra.mxu0 0.0
  %2406 = vmatprep.subr.mxu0 0.0
  %2407 = vmatpush1.msra.mxu0 0.0
  %2408 = vmatprep.subr.mxu0 0.0
  %2409 = vmatpush1.msra.mxu0 0.0
  %2410 = vmatprep.subr.mxu0 0.0
  %2411 = vmatpush1.msra.mxu0 0.0
  %2412 = vmatprep.subr.mxu0 0.0
  %2413 = vmatpush1.msra.mxu0 0.0
  %2414 = vmatprep.subr.mxu0 0.0
  %2415 = vmatpush1.msra.mxu0 0.0
  %2416 = vmatprep.subr.mxu0 0.0
  %2417 = vmatpush1.msra.mxu0 0.0
  %2418 = vmatprep.subr.mxu0 0.0
  %2419 = vmatpush1.msra.mxu0 0.0
  %2420 = vmatprep.subr.mxu0 0.0
  %2421 = vmatpush1.msra.mxu0 0.0
  %2422 = vmatprep.subr.mxu0 0.0
  %2423 = vmatpush1.msra.mxu0 0.0
  %2424 = vmatprep.subr.mxu0 0.0
  %2425 = vmatpush1.msra.mxu0 0.0
  %2426 = vmatprep.subr.mxu0 0.0
  %2427 = vmatpush1.msra.mxu0 0.0
  %2428 = vmatprep.subr.mxu0 0.0
  %2429 = vmatpush1.msra.mxu0 0.0
  %2430 = vmatprep.subr.mxu0 0.0
  %2431 = vmatpush1.msra.mxu0 0.0
  %2432 = vmatprep.subr.mxu0 0.0
  %2433 = vmatpush1.msra.mxu0 0.0
  %2434 = vmatprep.subr.mxu0 0.0
  %2435 = vmatpush1.msra.mxu0 0.0
  %2436 = vmatprep.subr.mxu0 0.0
  %2437 = vmatpush1.msra.mxu0 0.0
  %2438 = vmatprep.subr.mxu0 0.0
  %2439 = vmatpush1.msra.mxu0 0.0
  %2440 = vmatprep.mubr.f32.mxu0 0.0
  %2441 = vmatmul.mubr.f32.gmra.mrb[0].mxu0 %v2365
  %v2442 = vpop.f32.mrb[0].mxu0
  %v2443 = vadd.f32 0.0, %v2442
  %v2444 = vpop.f32.mrb[0].mxu0
  %2445 = vmatprep.mubr.f32.mxu0 0.0
  %2446 = vmatmul.mubr.f32.gmra.mrb[0].mxu0 %v2368
  %v2447 = vpop.f32.mrb[0].mxu0
  %v2448 = vadd.f32 0.0, %v2447
  %v2449 = vpop.f32.mrb[0].mxu0
  %2450 = vmatprep.mubr.f32.mxu0 0.0
  %2451 = vmatmul.mubr.f32.gmra.mrb[0].mxu0 %v2371
  %v2452 = vpop.f32.mrb[0].mxu0
  %v2453 = vadd.f32 0.0, %v2452
  %v2454 = vpop.f32.mrb[0].mxu0
  %2455 = vmatprep.mubr.f32.mxu0 0.0
  %2456 = vmatmul.mubr.f32.gmra.mrb[0].mxu0 %v2374
  %v2457 = vpop.f32.mrb[0].mxu0
  %v2458 = vadd.f32 0.0, %v2457
  %v2459 = vpop.f32.mrb[0].mxu0
  %2460 = vdwg.mxu0
  %v2461 = vadd.f32 %v2249, %v2443
  %v2462 = vadd.f32 %v2250, %v2448
  %v2463 = vadd.f32 %v2251, %v2453
  %v2464 = vadd.f32 %v2252, %v2458
  %s2465 = scalar_lea.vmem %s10, 64
  %v2466 = vld [vmem:[%s2465] sm:$0xff]
  %v2467 = vld [vmem:[%s2465 + $0x8] sm:$0xff]
  %v2468 = vld [vmem:[%s2465 + $0x10] sm:$0xff]
  %v2469 = vld [vmem:[%s2465 + $0x18] sm:$0xff]
  %v2471 = vsel %vm1632, %v2466, 0
  %v2474 = vsel %vm1632, %v2467, 0
  %v2477 = vsel %vm1632, %v2468, 0
  %v2480 = vsel %vm1632, %v2469, 0
  %2482 = vmatprep.subr.mxu0 0.0
  %2483 = vmatpush1.msra.mxu0 %v1624
  %2484 = vmatprep.subr.mxu0 0.0
  %2485 = vmatpush1.msra.mxu0 %v1625
  %2486 = vmatprep.subr.mxu0 0.0
  %2487 = vmatpush1.msra.mxu0 %v1626
  %2488 = vmatprep.subr.mxu0 0.0
  %2489 = vmatpush1.msra.mxu0 %v1627
  %2490 = vmatprep.subr.mxu0 0.0
  %2491 = vmatpush1.msra.mxu0 0.0
  %2492 = vmatprep.subr.mxu0 0.0
  %2493 = vmatpush1.msra.mxu0 0.0
  %2494 = vmatprep.subr.mxu0 0.0
  %2495 = vmatpush1.msra.mxu0 0.0
  %2496 = vmatprep.subr.mxu0 0.0
  %2497 = vmatpush1.msra.mxu0 0.0
  %2498 = vmatprep.subr.mxu0 0.0
  %2499 = vmatpush1.msra.mxu0 0.0
  %2500 = vmatprep.subr.mxu0 0.0
  %2501 = vmatpush1.msra.mxu0 0.0
  %2502 = vmatprep.subr.mxu0 0.0
  %2503 = vmatpush1.msra.mxu0 0.0
  %2504 = vmatprep.subr.mxu0 0.0
  %2505 = vmatpush1.msra.mxu0 0.0
  %2506 = vmatprep.subr.mxu0 0.0
  %2507 = vmatpush1.msra.mxu0 0.0
  %2508 = vmatprep.subr.mxu0 0.0
  %2509 = vmatpush1.msra.mxu0 0.0
  %2510 = vmatprep.subr.mxu0 0.0
  %2511 = vmatpush1.msra.mxu0 0.0
  %2512 = vmatprep.subr.mxu0 0.0
  %2513 = vmatpush1.msra.mxu0 0.0
  %2514 = vmatprep.subr.mxu0 0.0
  %2515 = vmatpush1.msra.mxu0 0.0
  %2516 = vmatprep.subr.mxu0 0.0
  %2517 = vmatpush1.msra.mxu0 0.0
  %2518 = vmatprep.subr.mxu0 0.0
  %2519 = vmatpush1.msra.mxu0 0.0
  %2520 = vmatprep.subr.mxu0 0.0
  %2521 = vmatpush1.msra.mxu0 0.0
  %2522 = vmatprep.subr.mxu0 0.0
  %2523 = vmatpush1.msra.mxu0 0.0
  %2524 = vmatprep.subr.mxu0 0.0
  %2525 = vmatpush1.msra.mxu0 0.0
  %2526 = vmatprep.subr.mxu0 0.0
  %2527 = vmatpush1.msra.mxu0 0.0
  %2528 = vmatprep.subr.mxu0 0.0
  %2529 = vmatpush1.msra.mxu0 0.0
  %2530 = vmatprep.subr.mxu0 0.0
  %2531 = vmatpush1.msra.mxu0 0.0
  %2532 = vmatprep.subr.mxu0 0.0
  %2533 = vmatpush1.msra.mxu0 0.0
  %2534 = vmatprep.subr.mxu0 0.0
  %2535 = vmatpush1.msra.mxu0 0.0
  %2536 = vmatprep.subr.mxu0 0.0
  %2537 = vmatpush1.msra.mxu0 0.0
  %2538 = vmatprep.subr.mxu0 0.0
  %2539 = vmatpush1.msra.mxu0 0.0
  %2540 = vmatprep.subr.mxu0 0.0
  %2541 = vmatpush1.msra.mxu0 0.0
  %2542 = vmatprep.subr.mxu0 0.0
  %2543 = vmatpush1.msra.mxu0 0.0
  %2544 = vmatprep.subr.mxu0 0.0
  %2545 = vmatpush1.msra.mxu0 0.0
  %2546 = vmatprep.mubr.f32.mxu0 0.0
  %2547 = vmatmul.mubr.f32.gmra.mrb[0].mxu0 %v2471
  %v2548 = vpop.f32.mrb[0].mxu0
  %v2549 = vadd.f32 0.0, %v2548
  %v2550 = vpop.f32.mrb[0].mxu0
  %2551 = vmatprep.mubr.f32.mxu0 0.0
  %2552 = vmatmul.mubr.f32.gmra.mrb[0].mxu0 %v2474
  %v2553 = vpop.f32.mrb[0].mxu0
  %v2554 = vadd.f32 0.0, %v2553
  %v2555 = vpop.f32.mrb[0].mxu0
  %2556 = vmatprep.mubr.f32.mxu0 0.0
  %2557 = vmatmul.mubr.f32.gmra.mrb[0].mxu0 %v2477
  %v2558 = vpop.f32.mrb[0].mxu0
  %v2559 = vadd.f32 0.0, %v2558
  %v2560 = vpop.f32.mrb[0].mxu0
  %2561 = vmatprep.mubr.f32.mxu0 0.0
  %2562 = vmatmul.mubr.f32.gmra.mrb[0].mxu0 %v2480
  %v2563 = vpop.f32.mrb[0].mxu0
  %v2564 = vadd.f32 0.0, %v2563
  %v2565 = vpop.f32.mrb[0].mxu0
  %2566 = vdwg.mxu0
  %s2567 = scalar_lea.vmem %s11, 128
  %v2568 = vld [vmem:[%s2567] sm:$0xff]
  %v2569 = vld [vmem:[%s2567 + $0x8] sm:$0xff]
  %v2570 = vld [vmem:[%s2567 + $0x10] sm:$0xff]
  %v2571 = vld [vmem:[%s2567 + $0x18] sm:$0xff]
  %v2572 = vld [vmem:[%s2567 + $0x20] sm:$0xff]
  %v2573 = vld [vmem:[%s2567 + $0x28] sm:$0xff]
  %v2574 = vld [vmem:[%s2567 + $0x30] sm:$0xff]
  %v2575 = vld [vmem:[%s2567 + $0x38] sm:$0xff]
  %v2577 = vsel %vm243, %v2549, 0
  %v2580 = vsel %vm243, %v2554, 0
  %v2583 = vsel %vm243, %v2559, 0
  %v2586 = vsel %vm243, %v2564, 0
  %2588 = vmatprep.subr.mxu0 0.0
  %2589 = vmatpush1.msra.mxu0 %v2568
  %2590 = vmatprep.subr.mxu0 0.0
  %2591 = vmatpush1.msra.mxu0 %v2569
  %2592 = vmatprep.subr.mxu0 0.0
  %2593 = vmatpush1.msra.mxu0 %v2570
  %2594 = vmatprep.subr.mxu0 0.0
  %2595 = vmatpush1.msra.mxu0 %v2571
  %2596 = vmatprep.subr.mxu0 0.0
  %2597 = vmatpush1.msra.mxu0 %v2572
  %2598 = vmatprep.subr.mxu0 0.0
  %2599 = vmatpush1.msra.mxu0 %v2573
  %2600 = vmatprep.subr.mxu0 0.0
  %2601 = vmatpush1.msra.mxu0 %v2574
  %2602 = vmatprep.subr.mxu0 0.0
  %2603 = vmatpush1.msra.mxu0 %v2575
  %2604 = vmatprep.subr.mxu0 0.0
  %2605 = vmatpush1.msra.mxu0 0.0
  %2606 = vmatprep.subr.mxu0 0.0
  %2607 = vmatpush1.msra.mxu0 0.0
  %2608 = vmatprep.subr.mxu0 0.0
  %2609 = vmatpush1.msra.mxu0 0.0
  %2610 = vmatprep.subr.mxu0 0.0
  %2611 = vmatpush1.msra.mxu0 0.0
  %2612 = vmatprep.subr.mxu0 0.0
  %2613 = vmatpush1.msra.mxu0 0.0
  %2614 = vmatprep.subr.mxu0 0.0
  %2615 = vmatpush1.msra.mxu0 0.0
  %2616 = vmatprep.subr.mxu0 0.0
  %2617 = vmatpush1.msra.mxu0 0.0
  %2618 = vmatprep.subr.mxu0 0.0
  %2619 = vmatpush1.msra.mxu0 0.0
  %2620 = vmatprep.subr.mxu0 0.0
  %2621 = vmatpush1.msra.mxu0 0.0
  %2622 = vmatprep.subr.mxu0 0.0
  %2623 = vmatpush1.msra.mxu0 0.0
  %2624 = vmatprep.subr.mxu0 0.0
  %2625 = vmatpush1.msra.mxu0 0.0
  %2626 = vmatprep.subr.mxu0 0.0
  %2627 = vmatpush1.msra.mxu0 0.0
  %2628 = vmatprep.subr.mxu0 0.0
  %2629 = vmatpush1.msra.mxu0 0.0
  %2630 = vmatprep.subr.mxu0 0.0
  %2631 = vmatpush1.msra.mxu0 0.0
  %2632 = vmatprep.subr.mxu0 0.0
  %2633 = vmatpush1.msra.mxu0 0.0
  %2634 = vmatprep.subr.mxu0 0.0
  %2635 = vmatpush1.msra.mxu0 0.0
  %2636 = vmatprep.subr.mxu0 0.0
  %2637 = vmatpush1.msra.mxu0 0.0
  %2638 = vmatprep.subr.mxu0 0.0
  %2639 = vmatpush1.msra.mxu0 0.0
  %2640 = vmatprep.subr.mxu0 0.0
  %2641 = vmatpush1.msra.mxu0 0.0
  %2642 = vmatprep.subr.mxu0 0.0
  %2643 = vmatpush1.msra.mxu0 0.0
  %2644 = vmatprep.subr.mxu0 0.0
  %2645 = vmatpush1.msra.mxu0 0.0
  %2646 = vmatprep.subr.mxu0 0.0
  %2647 = vmatpush1.msra.mxu0 0.0
  %2648 = vmatprep.subr.mxu0 0.0
  %2649 = vmatpush1.msra.mxu0 0.0
  %2650 = vmatprep.subr.mxu0 0.0
  %2651 = vmatpush1.msra.mxu0 0.0
  %2652 = vmatprep.mubr.f32.mxu0 0.0
  %2653 = vmatmul.mubr.f32.gmra.mrb[0].mxu0 %v2577
  %v2654 = vpop.f32.mrb[0].mxu0
  %v2655 = vadd.f32 0.0, %v2654
  %v2656 = vpop.f32.mrb[0].mxu0
  %2657 = vmatprep.mubr.f32.mxu0 0.0
  %2658 = vmatmul.mubr.f32.gmra.mrb[0].mxu0 %v2580
  %v2659 = vpop.f32.mrb[0].mxu0
  %v2660 = vadd.f32 0.0, %v2659
  %v2661 = vpop.f32.mrb[0].mxu0
  %2662 = vmatprep.mubr.f32.mxu0 0.0
  %2663 = vmatmul.mubr.f32.gmra.mrb[0].mxu0 %v2583
  %v2664 = vpop.f32.mrb[0].mxu0
  %v2665 = vadd.f32 0.0, %v2664
  %v2666 = vpop.f32.mrb[0].mxu0
  %2667 = vmatprep.mubr.f32.mxu0 0.0
  %2668 = vmatmul.mubr.f32.gmra.mrb[0].mxu0 %v2586
  %v2669 = vpop.f32.mrb[0].mxu0
  %v2670 = vadd.f32 0.0, %v2669
  %v2671 = vpop.f32.mrb[0].mxu0
  %2672 = vdwg.mxu0
  %v2673 = vadd.f32 %v2461, %v2655
  %v2674 = vadd.f32 %v2462, %v2660
  %v2675 = vadd.f32 %v2463, %v2665
  %v2676 = vadd.f32 %v2464, %v2670
  %s2677 = scalar_lea.vmem %s12, 64
  %v2678 = vld [vmem:[%s2677] sm:$0xff]
  %v2679 = vld [vmem:[%s2677 + $0x8] sm:$0xff]
  %v2680 = vld [vmem:[%s2677 + $0x10] sm:$0xff]
  %v2681 = vld [vmem:[%s2677 + $0x18] sm:$0xff]
  %v2683 = vsel %vm61, %v2678, 0
  %v2686 = vsel %vm61, %v2679, 0
  %v2689 = vsel %vm61, %v2680, 0
  %v2692 = vsel %vm61, %v2681, 0
  %2694 = vmatprep.subr.mxu0 0.0
  %2695 = vmatpush1.msra.mxu0 %v1622
  %2696 = vmatprep.subr.mxu0 0.0
  %2697 = vmatpush1.msra.mxu0 %v1623
  %2698 = vmatprep.subr.mxu0 0.0
  %2699 = vmatpush1.msra.mxu0 0.0
  %2700 = vmatprep.subr.mxu0 0.0
  %2701 = vmatpush1.msra.mxu0 0.0
  %2702 = vmatprep.subr.mxu0 0.0
  %2703 = vmatpush1.msra.mxu0 0.0
  %2704 = vmatprep.subr.mxu0 0.0
  %2705 = vmatpush1.msra.mxu0 0.0
  %2706 = vmatprep.subr.mxu0 0.0
  %2707 = vmatpush1.msra.mxu0 0.0
  %2708 = vmatprep.subr.mxu0 0.0
  %2709 = vmatpush1.msra.mxu0 0.0
  %2710 = vmatprep.subr.mxu0 0.0
  %2711 = vmatpush1.msra.mxu0 0.0
  %2712 = vmatprep.subr.mxu0 0.0
  %2713 = vmatpush1.msra.mxu0 0.0
  %2714 = vmatprep.subr.mxu0 0.0
  %2715 = vmatpush1.msra.mxu0 0.0
  %2716 = vmatprep.subr.mxu0 0.0
  %2717 = vmatpush1.msra.mxu0 0.0
  %2718 = vmatprep.subr.mxu0 0.0
  %2719 = vmatpush1.msra.mxu0 0.0
  %2720 = vmatprep.subr.mxu0 0.0
  %2721 = vmatpush1.msra.mxu0 0.0
  %2722 = vmatprep.subr.mxu0 0.0
  %2723 = vmatpush1.msra.mxu0 0.0
  %2724 = vmatprep.subr.mxu0 0.0
  %2725 = vmatpush1.msra.mxu0 0.0
  %2726 = vmatprep.subr.mxu0 0.0
  %2727 = vmatpush1.msra.mxu0 0.0
  %2728 = vmatprep.subr.mxu0 0.0
  %2729 = vmatpush1.msra.mxu0 0.0
  %2730 = vmatprep.subr.mxu0 0.0
  %2731 = vmatpush1.msra.mxu0 0.0
  %2732 = vmatprep.subr.mxu0 0.0
  %2733 = vmatpush1.msra.mxu0 0.0
  %2734 = vmatprep.subr.mxu0 0.0
  %2735 = vmatpush1.msra.mxu0 0.0
  %2736 = vmatprep.subr.mxu0 0.0
  %2737 = vmatpush1.msra.mxu0 0.0
  %2738 = vmatprep.subr.mxu0 0.0
  %2739 = vmatpush1.msra.mxu0 0.0
  %2740 = vmatprep.subr.mxu0 0.0
  %2741 = vmatpush1.msra.mxu0 0.0
  %2742 = vmatprep.subr.mxu0 0.0
  %2743 = vmatpush1.msra.mxu0 0.0
  %2744 = vmatprep.subr.mxu0 0.0
  %2745 = vmatpush1.msra.mxu0 0.0
  %2746 = vmatprep.subr.mxu0 0.0
  %2747 = vmatpush1.msra.mxu0 0.0
  %2748 = vmatprep.subr.mxu0 0.0
  %2749 = vmatpush1.msra.mxu0 0.0
  %2750 = vmatprep.subr.mxu0 0.0
  %2751 = vmatpush1.msra.mxu0 0.0
  %2752 = vmatprep.subr.mxu0 0.0
  %2753 = vmatpush1.msra.mxu0 0.0
  %2754 = vmatprep.subr.mxu0 0.0
  %2755 = vmatpush1.msra.mxu0 0.0
  %2756 = vmatprep.subr.mxu0 0.0
  %2757 = vmatpush1.msra.mxu0 0.0
  %2758 = vmatprep.mubr.f32.mxu0 0.0
  %2759 = vmatmul.mubr.f32.gmra.mrb[0].mxu0 %v2683
  %v2760 = vpop.f32.mrb[0].mxu0
  %v2761 = vadd.f32 0.0, %v2760
  %v2762 = vpop.f32.mrb[0].mxu0
  %2763 = vmatprep.mubr.f32.mxu0 0.0
  %2764 = vmatmul.mubr.f32.gmra.mrb[0].mxu0 %v2686
  %v2765 = vpop.f32.mrb[0].mxu0
  %v2766 = vadd.f32 0.0, %v2765
  %v2767 = vpop.f32.mrb[0].mxu0
  %2768 = vmatprep.mubr.f32.mxu0 0.0
  %2769 = vmatmul.mubr.f32.gmra.mrb[0].mxu0 %v2689
  %v2770 = vpop.f32.mrb[0].mxu0
  %v2771 = vadd.f32 0.0, %v2770
  %v2772 = vpop.f32.mrb[0].mxu0
  %2773 = vmatprep.mubr.f32.mxu0 0.0
  %2774 = vmatmul.mubr.f32.gmra.mrb[0].mxu0 %v2692
  %v2775 = vpop.f32.mrb[0].mxu0
  %v2776 = vadd.f32 0.0, %v2775
  %v2777 = vpop.f32.mrb[0].mxu0
  %2778 = vdwg.mxu0
  %s2779 = scalar_lea.vmem %s13, 128
  %v2780 = vld [vmem:[%s2779] sm:$0xff]
  %v2781 = vld [vmem:[%s2779 + $0x8] sm:$0xff]
  %v2782 = vld [vmem:[%s2779 + $0x10] sm:$0xff]
  %v2783 = vld [vmem:[%s2779 + $0x18] sm:$0xff]
  %v2784 = vld [vmem:[%s2779 + $0x20] sm:$0xff]
  %v2785 = vld [vmem:[%s2779 + $0x28] sm:$0xff]
  %v2786 = vld [vmem:[%s2779 + $0x30] sm:$0xff]
  %v2787 = vld [vmem:[%s2779 + $0x38] sm:$0xff]
  %v2789 = vsel %vm243, %v2761, 0
  %v2792 = vsel %vm243, %v2766, 0
  %v2795 = vsel %vm243, %v2771, 0
  %v2798 = vsel %vm243, %v2776, 0
  %2800 = vmatprep.subr.mxu0 0.0
  %2801 = vmatpush1.msra.mxu0 %v2780
  %2802 = vmatprep.subr.mxu0 0.0
  %2803 = vmatpush1.msra.mxu0 %v2781
  %2804 = vmatprep.subr.mxu0 0.0
  %2805 = vmatpush1.msra.mxu0 %v2782
  %2806 = vmatprep.subr.mxu0 0.0
  %2807 = vmatpush1.msra.mxu0 %v2783
  %2808 = vmatprep.subr.mxu0 0.0
  %2809 = vmatpush1.msra.mxu0 %v2784
  %2810 = vmatprep.subr.mxu0 0.0
  %2811 = vmatpush1.msra.mxu0 %v2785
  %2812 = vmatprep.subr.mxu0 0.0
  %2813 = vmatpush1.msra.mxu0 %v2786
  %2814 = vmatprep.subr.mxu0 0.0
  %2815 = vmatpush1.msra.mxu0 %v2787
  %2816 = vmatprep.subr.mxu0 0.0
  %2817 = vmatpush1.msra.mxu0 0.0
  %2818 = vmatprep.subr.mxu0 0.0
  %2819 = vmatpush1.msra.mxu0 0.0
  %2820 = vmatprep.subr.mxu0 0.0
  %2821 = vmatpush1.msra.mxu0 0.0
  %2822 = vmatprep.subr.mxu0 0.0
  %2823 = vmatpush1.msra.mxu0 0.0
  %2824 = vmatprep.subr.mxu0 0.0
  %2825 = vmatpush1.msra.mxu0 0.0
  %2826 = vmatprep.subr.mxu0 0.0
  %2827 = vmatpush1.msra.mxu0 0.0
  %2828 = vmatprep.subr.mxu0 0.0
  %2829 = vmatpush1.msra.mxu0 0.0
  %2830 = vmatprep.subr.mxu0 0.0
  %2831 = vmatpush1.msra.mxu0 0.0
  %2832 = vmatprep.subr.mxu0 0.0
  %2833 = vmatpush1.msra.mxu0 0.0
  %2834 = vmatprep.subr.mxu0 0.0
  %2835 = vmatpush1.msra.mxu0 0.0
  %2836 = vmatprep.subr.mxu0 0.0
  %2837 = vmatpush1.msra.mxu0 0.0
  %2838 = vmatprep.subr.mxu0 0.0
  %2839 = vmatpush1.msra.mxu0 0.0
  %2840 = vmatprep.subr.mxu0 0.0
  %2841 = vmatpush1.msra.mxu0 0.0
  %2842 = vmatprep.subr.mxu0 0.0
  %2843 = vmatpush1.msra.mxu0 0.0
  %2844 = vmatprep.subr.mxu0 0.0
  %2845 = vmatpush1.msra.mxu0 0.0
  %2846 = vmatprep.subr.mxu0 0.0
  %2847 = vmatpush1.msra.mxu0 0.0
  %2848 = vmatprep.subr.mxu0 0.0
  %2849 = vmatpush1.msra.mxu0 0.0
  %2850 = vmatprep.subr.mxu0 0.0
  %2851 = vmatpush1.msra.mxu0 0.0
  %2852 = vmatprep.subr.mxu0 0.0
  %2853 = vmatpush1.msra.mxu0 0.0
  %2854 = vmatprep.subr.mxu0 0.0
  %2855 = vmatpush1.msra.mxu0 0.0
  %2856 = vmatprep.subr.mxu0 0.0
  %2857 = vmatpush1.msra.mxu0 0.0
  %2858 = vmatprep.subr.mxu0 0.0
  %2859 = vmatpush1.msra.mxu0 0.0
  %2860 = vmatprep.subr.mxu0 0.0
  %2861 = vmatpush1.msra.mxu0 0.0
  %2862 = vmatprep.subr.mxu0 0.0
  %2863 = vmatpush1.msra.mxu0 0.0
  %2864 = vmatprep.mubr.f32.mxu0 0.0
  %2865 = vmatmul.mubr.f32.gmra.mrb[0].mxu0 %v2789
  %v2866 = vpop.f32.mrb[0].mxu0
  %v2867 = vadd.f32 0.0, %v2866
  %v2868 = vpop.f32.mrb[0].mxu0
  %2869 = vmatprep.mubr.f32.mxu0 0.0
  %2870 = vmatmul.mubr.f32.gmra.mrb[0].mxu0 %v2792
  %v2871 = vpop.f32.mrb[0].mxu0
  %v2872 = vadd.f32 0.0, %v2871
  %v2873 = vpop.f32.mrb[0].mxu0
  %2874 = vmatprep.mubr.f32.mxu0 0.0
  %2875 = vmatmul.mubr.f32.gmra.mrb[0].mxu0 %v2795
  %v2876 = vpop.f32.mrb[0].mxu0
  %v2877 = vadd.f32 0.0, %v2876
  %v2878 = vpop.f32.mrb[0].mxu0
  %2879 = vmatprep.mubr.f32.mxu0 0.0
  %2880 = vmatmul.mubr.f32.gmra.mrb[0].mxu0 %v2798
  %v2881 = vpop.f32.mrb[0].mxu0
  %v2882 = vadd.f32 0.0, %v2881
  %v2883 = vpop.f32.mrb[0].mxu0
  %2884 = vdwg.mxu0
  %v2885 = vadd.f32 %v2673, %v2867
  %v2886 = vadd.f32 %v2674, %v2872
  %v2887 = vadd.f32 %v2675, %v2877
  %v2888 = vadd.f32 %v2676, %v2882
  %v2889 = vld [vmem:[%s14] sm:$0x1]
  %v2891 = vlaneseq
  %v2892 = vshrl.u32 %v2891, 7
  %v2893 = vsub.s32 0, %v2892
  %v2894 = vrot.slane %v2889, %v2893
  %v2896 = vadd.f32 %v2885, %v2894
  %v2897 = vadd.f32 %v2886, %v2894
  %v2898 = vadd.f32 %v2887, %v2894
  %v2899 = vadd.f32 %v2888, %v2894
  %2900 = vmatprep.subr.mxu0 0.0
  %2901 = vmatpush1.msra.mxu0 %v2896
  %2902 = vmatprep.subr.mxu0 0.0
  %2903 = vmatpush1.msra.mxu0 %v2897
  %2904 = vmatprep.subr.mxu0 0.0
  %2905 = vmatpush1.msra.mxu0 %v2898
  %2906 = vmatprep.subr.mxu0 0.0
  %2907 = vmatpush1.msra.mxu0 %v2899
  %2908 = vmatprep.subr.mxu0 0.0
  %2909 = vmatpush1.msra.mxu0 0.0
  %2910 = vmatprep.subr.mxu0 0.0
  %2911 = vmatpush1.msra.mxu0 0.0
  %2912 = vmatprep.subr.mxu0 0.0
  %2913 = vmatpush1.msra.mxu0 0.0
  %2914 = vmatprep.subr.mxu0 0.0
  %2915 = vmatpush1.msra.mxu0 0.0
  %2916 = vmatprep.subr.mxu0 0.0
  %2917 = vmatpush1.msra.mxu0 0.0
  %2918 = vmatprep.subr.mxu0 0.0
  %2919 = vmatpush1.msra.mxu0 0.0
  %2920 = vmatprep.subr.mxu0 0.0
  %2921 = vmatpush1.msra.mxu0 0.0
  %2922 = vmatprep.subr.mxu0 0.0
  %2923 = vmatpush1.msra.mxu0 0.0
  %2924 = vmatprep.subr.mxu0 0.0
  %2925 = vmatpush1.msra.mxu0 0.0
  %2926 = vmatprep.subr.mxu0 0.0
  %2927 = vmatpush1.msra.mxu0 0.0
  %2928 = vmatprep.subr.mxu0 0.0
  %2929 = vmatpush1.msra.mxu0 0.0
  %2930 = vmatprep.subr.mxu0 0.0
  %2931 = vmatpush1.msra.mxu0 0.0
  %2932 = vmatprep.subr.mxu0 0.0
  %2933 = vmatpush1.msra.mxu0 0.0
  %2934 = vmatprep.subr.mxu0 0.0
  %2935 = vmatpush1.msra.mxu0 0.0
  %2936 = vmatprep.subr.mxu0 0.0
  %2937 = vmatpush1.msra.mxu0 0.0
  %2938 = vmatprep.subr.mxu0 0.0
  %2939 = vmatpush1.msra.mxu0 0.0
  %2940 = vmatprep.subr.mxu0 0.0
  %2941 = vmatpush1.msra.mxu0 0.0
  %2942 = vmatprep.subr.mxu0 0.0
  %2943 = vmatpush1.msra.mxu0 0.0
  %2944 = vmatprep.subr.mxu0 0.0
  %2945 = vmatpush1.msra.mxu0 0.0
  %2946 = vmatprep.subr.mxu0 0.0
  %2947 = vmatpush1.msra.mxu0 0.0
  %2948 = vmatprep.subr.mxu0 0.0
  %2949 = vmatpush1.msra.mxu0 0.0
  %2950 = vmatprep.subr.mxu0 0.0
  %2951 = vmatpush1.msra.mxu0 0.0
  %2952 = vmatprep.subr.mxu0 0.0
  %2953 = vmatpush1.msra.mxu0 0.0
  %2954 = vmatprep.subr.mxu0 0.0
  %2955 = vmatpush1.msra.mxu0 0.0
  %2956 = vmatprep.subr.mxu0 0.0
  %2957 = vmatpush1.msra.mxu0 0.0
  %2958 = vmatprep.subr.mxu0 0.0
  %2959 = vmatpush1.msra.mxu0 0.0
  %2960 = vmatprep.subr.mxu0 0.0
  %2961 = vmatpush1.msra.mxu0 0.0
  %2962 = vmatprep.subr.mxu0 0.0
  %2963 = vmatpush1.msra.mxu0 0.0
  %2964 = vmatprep.mubr.f32.mxu0 0.0
  %2965 = vmatmul.mubr.f32.gmra.mrb[0].mxu0 %v1634
  %v2966 = vpop.f32.mrb[0].mxu0
  %v2967 = vadd.f32 0.0, %v2966
  %v2968 = vpop.f32.mrb[0].mxu0
  %2969 = vmatprep.mubr.f32.mxu0 0.0
  %2970 = vmatmul.mubr.f32.gmra.mrb[0].mxu0 %v1637
  %v2971 = vpop.f32.mrb[0].mxu0
  %v2972 = vadd.f32 0.0, %v2971
  %v2973 = vpop.f32.mrb[0].mxu0
  %2974 = vmatprep.mubr.f32.mxu0 0.0
  %2975 = vmatmul.mubr.f32.gmra.mrb[0].mxu0 %v1640
  %v2976 = vpop.f32.mrb[0].mxu0
  %v2977 = vadd.f32 0.0, %v2976
  %v2978 = vpop.f32.mrb[0].mxu0
  %2979 = vmatprep.mubr.f32.mxu0 0.0
  %2980 = vmatmul.mubr.f32.gmra.mrb[0].mxu0 %v1643
  %v2981 = vpop.f32.mrb[0].mxu0
  %v2982 = vadd.f32 0.0, %v2981
  %v2983 = vpop.f32.mrb[0].mxu0
  %2984 = vdwg.mxu0
  %v2985 = vld [vmem:[%s15] sm:$0xff]
  %v2986 = vld [vmem:[%s15 + $0x8] sm:$0xff]
  %v2987 = vld [vmem:[%s15 + $0x10] sm:$0xff]
  %v2988 = vld [vmem:[%s15 + $0x18] sm:$0xff]
  %v2989 = vld [vmem:[%s15 + $0x20] sm:$0xff]
  %v2990 = vld [vmem:[%s15 + $0x28] sm:$0xff]
  %v2991 = vld [vmem:[%s15 + $0x30] sm:$0xff]
  %v2992 = vld [vmem:[%s15 + $0x38] sm:$0xff]
  %2993 = vmatprep.subr.mxu0 0.0
  %2994 = vmatpush1.msra.mxu0 %v2896
  %2995 = vmatprep.subr.mxu0 0.0
  %2996 = vmatpush1.msra.mxu0 %v2897
  %2997 = vmatprep.subr.mxu0 0.0
  %2998 = vmatpush1.msra.mxu0 %v2898
  %2999 = vmatprep.subr.mxu0 0.0
  %3000 = vmatpush1.msra.mxu0 %v2899
  %3001 = vmatprep.subr.mxu0 0.0
  %3002 = vmatpush1.msra.mxu0 0.0
  %3003 = vmatprep.subr.mxu0 0.0
  %3004 = vmatpush1.msra.mxu0 0.0
  %3005 = vmatprep.subr.mxu0 0.0
  %3006 = vmatpush1.msra.mxu0 0.0
  %3007 = vmatprep.subr.mxu0 0.0
  %3008 = vmatpush1.msra.mxu0 0.0
  %3009 = vmatprep.subr.mxu0 0.0
  %3010 = vmatpush1.msra.mxu0 0.0
  %3011 = vmatprep.subr.mxu0 0.0
  %3012 = vmatpush1.msra.mxu0 0.0
  %3013 = vmatprep.subr.mxu0 0.0
  %3014 = vmatpush1.msra.mxu0 0.0
  %3015 = vmatprep.subr.mxu0 0.0
  %3016 = vmatpush1.msra.mxu0 0.0
  %3017 = vmatprep.subr.mxu0 0.0
  %3018 = vmatpush1.msra.mxu0 0.0
  %3019 = vmatprep.subr.mxu0 0.0
  %3020 = vmatpush1.msra.mxu0 0.0
  %3021 = vmatprep.subr.mxu0 0.0
  %3022 = vmatpush1.msra.mxu0 0.0
  %3023 = vmatprep.subr.mxu0 0.0
  %3024 = vmatpush1.msra.mxu0 0.0
  %3025 = vmatprep.subr.mxu0 0.0
  %3026 = vmatpush1.msra.mxu0 0.0
  %3027 = vmatprep.subr.mxu0 0.0
  %3028 = vmatpush1.msra.mxu0 0.0
  %3029 = vmatprep.subr.mxu0 0.0
  %3030 = vmatpush1.msra.mxu0 0.0
  %3031 = vmatprep.subr.mxu0 0.0
  %3032 = vmatpush1.msra.mxu0 0.0
  %3033 = vmatprep.subr.mxu0 0.0
  %3034 = vmatpush1.msra.mxu0 0.0
  %3035 = vmatprep.subr.mxu0 0.0
  %3036 = vmatpush1.msra.mxu0 0.0
  %3037 = vmatprep.subr.mxu0 0.0
  %3038 = vmatpush1.msra.mxu0 0.0
  %3039 = vmatprep.subr.mxu0 0.0
  %3040 = vmatpush1.msra.mxu0 0.0
  %3041 = vmatprep.subr.mxu0 0.0
  %3042 = vmatpush1.msra.mxu0 0.0
  %3043 = vmatprep.subr.mxu0 0.0
  %3044 = vmatpush1.msra.mxu0 0.0
  %3045 = vmatprep.subr.mxu0 0.0
  %3046 = vmatpush1.msra.mxu0 0.0
  %3047 = vmatprep.subr.mxu0 0.0
  %3048 = vmatpush1.msra.mxu0 0.0
  %3049 = vmatprep.subr.mxu0 0.0
  %3050 = vmatpush1.msra.mxu0 0.0
  %3051 = vmatprep.subr.mxu0 0.0
  %3052 = vmatpush1.msra.mxu0 0.0
  %3053 = vmatprep.subr.mxu0 0.0
  %3054 = vmatpush1.msra.mxu0 0.0
  %3055 = vmatprep.subr.mxu0 0.0
  %3056 = vmatpush1.msra.mxu0 0.0
  %3057 = vmatprep.mubr.f32.mxu0 0.0
  %3058 = vmatmul.mubr.f32.gmra.mrb[0].mxu0 %v2047
  %v3059 = vpop.f32.mrb[0].mxu0
  %v3060 = vadd.f32 0.0, %v3059
  %v3061 = vpop.f32.mrb[0].mxu0
  %3062 = vmatprep.mubr.f32.mxu0 0.0
  %3063 = vmatmul.mubr.f32.gmra.mrb[0].mxu0 %v2050
  %v3064 = vpop.f32.mrb[0].mxu0
  %v3065 = vadd.f32 0.0, %v3064
  %v3066 = vpop.f32.mrb[0].mxu0
  %3067 = vmatprep.mubr.f32.mxu0 0.0
  %3068 = vmatmul.mubr.f32.gmra.mrb[0].mxu0 %v2053
  %v3069 = vpop.f32.mrb[0].mxu0
  %v3070 = vadd.f32 0.0, %v3069
  %v3071 = vpop.f32.mrb[0].mxu0
  %3072 = vmatprep.mubr.f32.mxu0 0.0
  %3073 = vmatmul.mubr.f32.gmra.mrb[0].mxu0 %v2056
  %v3074 = vpop.f32.mrb[0].mxu0
  %v3075 = vadd.f32 0.0, %v3074
  %v3076 = vpop.f32.mrb[0].mxu0
  %3077 = vdwg.mxu0
  %s3078 = scalar_lea.vmem %s15, 64
  %v3079 = vld [vmem:[%s3078] sm:$0xff]
  %v3080 = vld [vmem:[%s3078 + $0x8] sm:$0xff]
  %v3081 = vld [vmem:[%s3078 + $0x10] sm:$0xff]
  %v3082 = vld [vmem:[%s3078 + $0x18] sm:$0xff]
  %v3083 = vld [vmem:[%s3078 + $0x20] sm:$0xff]
  %v3084 = vld [vmem:[%s3078 + $0x28] sm:$0xff]
  %v3085 = vld [vmem:[%s3078 + $0x30] sm:$0xff]
  %v3086 = vld [vmem:[%s3078 + $0x38] sm:$0xff]
  %v3088 = vsel %vm243, %v3060, 0
  %v3091 = vsel %vm243, %v3065, 0
  %v3094 = vsel %vm243, %v3070, 0
  %v3097 = vsel %vm243, %v3075, 0
  %3099 = vmatprep.subr.mxu0 0.0
  %3100 = vmatpush1.msra.mxu0 %v3079
  %3101 = vmatprep.subr.mxu0 0.0
  %3102 = vmatpush1.msra.mxu0 %v3080
  %3103 = vmatprep.subr.mxu0 0.0
  %3104 = vmatpush1.msra.mxu0 %v3081
  %3105 = vmatprep.subr.mxu0 0.0
  %3106 = vmatpush1.msra.mxu0 %v3082
  %3107 = vmatprep.subr.mxu0 0.0
  %3108 = vmatpush1.msra.mxu0 %v3083
  %3109 = vmatprep.subr.mxu0 0.0
  %3110 = vmatpush1.msra.mxu0 %v3084
  %3111 = vmatprep.subr.mxu0 0.0
  %3112 = vmatpush1.msra.mxu0 %v3085
  %3113 = vmatprep.subr.mxu0 0.0
  %3114 = vmatpush1.msra.mxu0 %v3086
  %3115 = vmatprep.subr.mxu0 0.0
  %3116 = vmatpush1.msra.mxu0 0.0
  %3117 = vmatprep.subr.mxu0 0.0
  %3118 = vmatpush1.msra.mxu0 0.0
  %3119 = vmatprep.subr.mxu0 0.0
  %3120 = vmatpush1.msra.mxu0 0.0
  %3121 = vmatprep.subr.mxu0 0.0
  %3122 = vmatpush1.msra.mxu0 0.0
  %3123 = vmatprep.subr.mxu0 0.0
  %3124 = vmatpush1.msra.mxu0 0.0
  %3125 = vmatprep.subr.mxu0 0.0
  %3126 = vmatpush1.msra.mxu0 0.0
  %3127 = vmatprep.subr.mxu0 0.0
  %3128 = vmatpush1.msra.mxu0 0.0
  %3129 = vmatprep.subr.mxu0 0.0
  %3130 = vmatpush1.msra.mxu0 0.0
  %3131 = vmatprep.subr.mxu0 0.0
  %3132 = vmatpush1.msra.mxu0 0.0
  %3133 = vmatprep.subr.mxu0 0.0
  %3134 = vmatpush1.msra.mxu0 0.0
  %3135 = vmatprep.subr.mxu0 0.0
  %3136 = vmatpush1.msra.mxu0 0.0
  %3137 = vmatprep.subr.mxu0 0.0
  %3138 = vmatpush1.msra.mxu0 0.0
  %3139 = vmatprep.subr.mxu0 0.0
  %3140 = vmatpush1.msra.mxu0 0.0
  %3141 = vmatprep.subr.mxu0 0.0
  %3142 = vmatpush1.msra.mxu0 0.0
  %3143 = vmatprep.subr.mxu0 0.0
  %3144 = vmatpush1.msra.mxu0 0.0
  %3145 = vmatprep.subr.mxu0 0.0
  %3146 = vmatpush1.msra.mxu0 0.0
  %3147 = vmatprep.subr.mxu0 0.0
  %3148 = vmatpush1.msra.mxu0 0.0
  %3149 = vmatprep.subr.mxu0 0.0
  %3150 = vmatpush1.msra.mxu0 0.0
  %3151 = vmatprep.subr.mxu0 0.0
  %3152 = vmatpush1.msra.mxu0 0.0
  %3153 = vmatprep.subr.mxu0 0.0
  %3154 = vmatpush1.msra.mxu0 0.0
  %3155 = vmatprep.subr.mxu0 0.0
  %3156 = vmatpush1.msra.mxu0 0.0
  %3157 = vmatprep.subr.mxu0 0.0
  %3158 = vmatpush1.msra.mxu0 0.0
  %3159 = vmatprep.subr.mxu0 0.0
  %3160 = vmatpush1.msra.mxu0 0.0
  %3161 = vmatprep.subr.mxu0 0.0
  %3162 = vmatpush1.msra.mxu0 0.0
  %3163 = vmatprep.mubr.f32.mxu0 0.0
  %3164 = vmatmul.mubr.f32.gmra.mrb[0].mxu0 %v3088
  %v3165 = vpop.f32.mrb[0].mxu0
  %v3166 = vadd.f32 0.0, %v3165
  %v3167 = vpop.f32.mrb[0].mxu0
  %3168 = vmatprep.mubr.f32.mxu0 0.0
  %3169 = vmatmul.mubr.f32.gmra.mrb[0].mxu0 %v3091
  %v3170 = vpop.f32.mrb[0].mxu0
  %v3171 = vadd.f32 0.0, %v3170
  %v3172 = vpop.f32.mrb[0].mxu0
  %3173 = vmatprep.mubr.f32.mxu0 0.0
  %3174 = vmatmul.mubr.f32.gmra.mrb[0].mxu0 %v3094
  %v3175 = vpop.f32.mrb[0].mxu0
  %v3176 = vadd.f32 0.0, %v3175
  %v3177 = vpop.f32.mrb[0].mxu0
  %3178 = vmatprep.mubr.f32.mxu0 0.0
  %3179 = vmatmul.mubr.f32.gmra.mrb[0].mxu0 %v3097
  %v3180 = vpop.f32.mrb[0].mxu0
  %v3181 = vadd.f32 0.0, %v3180
  %v3182 = vpop.f32.mrb[0].mxu0
  %3183 = vdwg.mxu0
  %v3185 = vsel %vm243, %v2967, 0
  %v3188 = vsel %vm243, %v2972, 0
  %v3191 = vsel %vm243, %v2977, 0
  %v3194 = vsel %vm243, %v2982, 0
  %3196 = vmatprep.subr.mxu0 0.0
  %3197 = vmatpush1.msra.mxu0 %v2985
  %3198 = vmatprep.subr.mxu0 0.0
  %3199 = vmatpush1.msra.mxu0 %v2986
  %3200 = vmatprep.subr.mxu0 0.0
  %3201 = vmatpush1.msra.mxu0 %v2987
  %3202 = vmatprep.subr.mxu0 0.0
  %3203 = vmatpush1.msra.mxu0 %v2988
  %3204 = vmatprep.subr.mxu0 0.0
  %3205 = vmatpush1.msra.mxu0 %v2989
  %3206 = vmatprep.subr.mxu0 0.0
  %3207 = vmatpush1.msra.mxu0 %v2990
  %3208 = vmatprep.subr.mxu0 0.0
  %3209 = vmatpush1.msra.mxu0 %v2991
  %3210 = vmatprep.subr.mxu0 0.0
  %3211 = vmatpush1.msra.mxu0 %v2992
  %3212 = vmatprep.subr.mxu0 0.0
  %3213 = vmatpush1.msra.mxu0 0.0
  %3214 = vmatprep.subr.mxu0 0.0
  %3215 = vmatpush1.msra.mxu0 0.0
  %3216 = vmatprep.subr.mxu0 0.0
  %3217 = vmatpush1.msra.mxu0 0.0
  %3218 = vmatprep.subr.mxu0 0.0
  %3219 = vmatpush1.msra.mxu0 0.0
  %3220 = vmatprep.subr.mxu0 0.0
  %3221 = vmatpush1.msra.mxu0 0.0
  %3222 = vmatprep.subr.mxu0 0.0
  %3223 = vmatpush1.msra.mxu0 0.0
  %3224 = vmatprep.subr.mxu0 0.0
  %3225 = vmatpush1.msra.mxu0 0.0
  %3226 = vmatprep.subr.mxu0 0.0
  %3227 = vmatpush1.msra.mxu0 0.0
  %3228 = vmatprep.subr.mxu0 0.0
  %3229 = vmatpush1.msra.mxu0 0.0
  %3230 = vmatprep.subr.mxu0 0.0
  %3231 = vmatpush1.msra.mxu0 0.0
  %3232 = vmatprep.subr.mxu0 0.0
  %3233 = vmatpush1.msra.mxu0 0.0
  %3234 = vmatprep.subr.mxu0 0.0
  %3235 = vmatpush1.msra.mxu0 0.0
  %3236 = vmatprep.subr.mxu0 0.0
  %3237 = vmatpush1.msra.mxu0 0.0
  %3238 = vmatprep.subr.mxu0 0.0
  %3239 = vmatpush1.msra.mxu0 0.0
  %3240 = vmatprep.subr.mxu0 0.0
  %3241 = vmatpush1.msra.mxu0 0.0
  %3242 = vmatprep.subr.mxu0 0.0
  %3243 = vmatpush1.msra.mxu0 0.0
  %3244 = vmatprep.subr.mxu0 0.0
  %3245 = vmatpush1.msra.mxu0 0.0
  %3246 = vmatprep.subr.mxu0 0.0
  %3247 = vmatpush1.msra.mxu0 0.0
  %3248 = vmatprep.subr.mxu0 0.0
  %3249 = vmatpush1.msra.mxu0 0.0
  %3250 = vmatprep.subr.mxu0 0.0
  %3251 = vmatpush1.msra.mxu0 0.0
  %3252 = vmatprep.subr.mxu0 0.0
  %3253 = vmatpush1.msra.mxu0 0.0
  %3254 = vmatprep.subr.mxu0 0.0
  %3255 = vmatpush1.msra.mxu0 0.0
  %3256 = vmatprep.subr.mxu0 0.0
  %3257 = vmatpush1.msra.mxu0 0.0
  %3258 = vmatprep.subr.mxu0 0.0
  %3259 = vmatpush1.msra.mxu0 0.0
  %3260 = vmatprep.mubr.f32.mxu0 0.0
  %3261 = vmatmul.mubr.f32.gmra.mrb[0].mxu0 %v3185
  %v3262 = vpop.f32.mrb[0].mxu0
  %v3263 = vadd.f32 %v3166, %v3262
  %v3264 = vpop.f32.mrb[0].mxu0
  %3265 = vmatprep.mubr.f32.mxu0 0.0
  %3266 = vmatmul.mubr.f32.gmra.mrb[0].mxu0 %v3188
  %v3267 = vpop.f32.mrb[0].mxu0
  %v3268 = vadd.f32 %v3171, %v3267
  %v3269 = vpop.f32.mrb[0].mxu0
  %3270 = vmatprep.mubr.f32.mxu0 0.0
  %3271 = vmatmul.mubr.f32.gmra.mrb[0].mxu0 %v3191
  %v3272 = vpop.f32.mrb[0].mxu0
  %v3273 = vadd.f32 %v3176, %v3272
  %v3274 = vpop.f32.mrb[0].mxu0
  %3275 = vmatprep.mubr.f32.mxu0 0.0
  %3276 = vmatmul.mubr.f32.gmra.mrb[0].mxu0 %v3194
  %v3277 = vpop.f32.mrb[0].mxu0
  %v3278 = vadd.f32 %v3181, %v3277
  %v3279 = vpop.f32.mrb[0].mxu0
  %3280 = vdwg.mxu0
  %3281 = vmatprep.subr.mxu0 0.0
  %3282 = vmatpush1.msra.mxu0 %v2896
  %3283 = vmatprep.subr.mxu0 0.0
  %3284 = vmatpush1.msra.mxu0 %v2897
  %3285 = vmatprep.subr.mxu0 0.0
  %3286 = vmatpush1.msra.mxu0 %v2898
  %3287 = vmatprep.subr.mxu0 0.0
  %3288 = vmatpush1.msra.mxu0 %v2899
  %3289 = vmatprep.subr.mxu0 0.0
  %3290 = vmatpush1.msra.mxu0 0.0
  %3291 = vmatprep.subr.mxu0 0.0
  %3292 = vmatpush1.msra.mxu0 0.0
  %3293 = vmatprep.subr.mxu0 0.0
  %3294 = vmatpush1.msra.mxu0 0.0
  %3295 = vmatprep.subr.mxu0 0.0
  %3296 = vmatpush1.msra.mxu0 0.0
  %3297 = vmatprep.subr.mxu0 0.0
  %3298 = vmatpush1.msra.mxu0 0.0
  %3299 = vmatprep.subr.mxu0 0.0
  %3300 = vmatpush1.msra.mxu0 0.0
  %3301 = vmatprep.subr.mxu0 0.0
  %3302 = vmatpush1.msra.mxu0 0.0
  %3303 = vmatprep.subr.mxu0 0.0
  %3304 = vmatpush1.msra.mxu0 0.0
  %3305 = vmatprep.subr.mxu0 0.0
  %3306 = vmatpush1.msra.mxu0 0.0
  %3307 = vmatprep.subr.mxu0 0.0
  %3308 = vmatpush1.msra.mxu0 0.0
  %3309 = vmatprep.subr.mxu0 0.0
  %3310 = vmatpush1.msra.mxu0 0.0
  %3311 = vmatprep.subr.mxu0 0.0
  %3312 = vmatpush1.msra.mxu0 0.0
  %3313 = vmatprep.subr.mxu0 0.0
  %3314 = vmatpush1.msra.mxu0 0.0
  %3315 = vmatprep.subr.mxu0 0.0
  %3316 = vmatpush1.msra.mxu0 0.0
  %3317 = vmatprep.subr.mxu0 0.0
  %3318 = vmatpush1.msra.mxu0 0.0
  %3319 = vmatprep.subr.mxu0 0.0
  %3320 = vmatpush1.msra.mxu0 0.0
  %3321 = vmatprep.subr.mxu0 0.0
  %3322 = vmatpush1.msra.mxu0 0.0
  %3323 = vmatprep.subr.mxu0 0.0
  %3324 = vmatpush1.msra.mxu0 0.0
  %3325 = vmatprep.subr.mxu0 0.0
  %3326 = vmatpush1.msra.mxu0 0.0
  %3327 = vmatprep.subr.mxu0 0.0
  %3328 = vmatpush1.msra.mxu0 0.0
  %3329 = vmatprep.subr.mxu0 0.0
  %3330 = vmatpush1.msra.mxu0 0.0
  %3331 = vmatprep.subr.mxu0 0.0
  %3332 = vmatpush1.msra.mxu0 0.0
  %3333 = vmatprep.subr.mxu0 0.0
  %3334 = vmatpush1.msra.mxu0 0.0
  %3335 = vmatprep.subr.mxu0 0.0
  %3336 = vmatpush1.msra.mxu0 0.0
  %3337 = vmatprep.subr.mxu0 0.0
  %3338 = vmatpush1.msra.mxu0 0.0
  %3339 = vmatprep.subr.mxu0 0.0
  %3340 = vmatpush1.msra.mxu0 0.0
  %3341 = vmatprep.subr.mxu0 0.0
  %3342 = vmatpush1.msra.mxu0 0.0
  %3343 = vmatprep.subr.mxu0 0.0
  %3344 = vmatpush1.msra.mxu0 0.0
  %3345 = vmatprep.mubr.f32.mxu0 0.0
  %3346 = vmatmul.mubr.f32.gmra.mrb[0].mxu0 %v2471
  %v3347 = vpop.f32.mrb[0].mxu0
  %v3348 = vadd.f32 0.0, %v3347
  %v3349 = vpop.f32.mrb[0].mxu0
  %3350 = vmatprep.mubr.f32.mxu0 0.0
  %3351 = vmatmul.mubr.f32.gmra.mrb[0].mxu0 %v2474
  %v3352 = vpop.f32.mrb[0].mxu0
  %v3353 = vadd.f32 0.0, %v3352
  %v3354 = vpop.f32.mrb[0].mxu0
  %3355 = vmatprep.mubr.f32.mxu0 0.0
  %3356 = vmatmul.mubr.f32.gmra.mrb[0].mxu0 %v2477
  %v3357 = vpop.f32.mrb[0].mxu0
  %v3358 = vadd.f32 0.0, %v3357
  %v3359 = vpop.f32.mrb[0].mxu0
  %3360 = vmatprep.mubr.f32.mxu0 0.0
  %3361 = vmatmul.mubr.f32.gmra.mrb[0].mxu0 %v2480
  %v3362 = vpop.f32.mrb[0].mxu0
  %v3363 = vadd.f32 0.0, %v3362
  %v3364 = vpop.f32.mrb[0].mxu0
  %3365 = vdwg.mxu0
  %s3366 = scalar_lea.vmem %s15, 128
  %v3367 = vld [vmem:[%s3366] sm:$0xff]
  %v3368 = vld [vmem:[%s3366 + $0x8] sm:$0xff]
  %v3369 = vld [vmem:[%s3366 + $0x10] sm:$0xff]
  %v3370 = vld [vmem:[%s3366 + $0x18] sm:$0xff]
  %v3371 = vld [vmem:[%s3366 + $0x20] sm:$0xff]
  %v3372 = vld [vmem:[%s3366 + $0x28] sm:$0xff]
  %v3373 = vld [vmem:[%s3366 + $0x30] sm:$0xff]
  %v3374 = vld [vmem:[%s3366 + $0x38] sm:$0xff]
  %v3376 = vsel %vm243, %v3348, 0
  %v3379 = vsel %vm243, %v3353, 0
  %v3382 = vsel %vm243, %v3358, 0
  %v3385 = vsel %vm243, %v3363, 0
  %3387 = vmatprep.subr.mxu0 0.0
  %3388 = vmatpush1.msra.mxu0 %v3367
  %3389 = vmatprep.subr.mxu0 0.0
  %3390 = vmatpush1.msra.mxu0 %v3368
  %3391 = vmatprep.subr.mxu0 0.0
  %3392 = vmatpush1.msra.mxu0 %v3369
  %3393 = vmatprep.subr.mxu0 0.0
  %3394 = vmatpush1.msra.mxu0 %v3370
  %3395 = vmatprep.subr.mxu0 0.0
  %3396 = vmatpush1.msra.mxu0 %v3371
  %3397 = vmatprep.subr.mxu0 0.0
  %3398 = vmatpush1.msra.mxu0 %v3372
  %3399 = vmatprep.subr.mxu0 0.0
  %3400 = vmatpush1.msra.mxu0 %v3373
  %3401 = vmatprep.subr.mxu0 0.0
  %3402 = vmatpush1.msra.mxu0 %v3374
  %3403 = vmatprep.subr.mxu0 0.0
  %3404 = vmatpush1.msra.mxu0 0.0
  %3405 = vmatprep.subr.mxu0 0.0
  %3406 = vmatpush1.msra.mxu0 0.0
  %3407 = vmatprep.subr.mxu0 0.0
  %3408 = vmatpush1.msra.mxu0 0.0
  %3409 = vmatprep.subr.mxu0 0.0
  %3410 = vmatpush1.msra.mxu0 0.0
  %3411 = vmatprep.subr.mxu0 0.0
  %3412 = vmatpush1.msra.mxu0 0.0
  %3413 = vmatprep.subr.mxu0 0.0
  %3414 = vmatpush1.msra.mxu0 0.0
  %3415 = vmatprep.subr.mxu0 0.0
  %3416 = vmatpush1.msra.mxu0 0.0
  %3417 = vmatprep.subr.mxu0 0.0
  %3418 = vmatpush1.msra.mxu0 0.0
  %3419 = vmatprep.subr.mxu0 0.0
  %3420 = vmatpush1.msra.mxu0 0.0
  %3421 = vmatprep.subr.mxu0 0.0
  %3422 = vmatpush1.msra.mxu0 0.0
  %3423 = vmatprep.subr.mxu0 0.0
  %3424 = vmatpush1.msra.mxu0 0.0
  %3425 = vmatprep.subr.mxu0 0.0
  %3426 = vmatpush1.msra.mxu0 0.0
  %3427 = vmatprep.subr.mxu0 0.0
  %3428 = vmatpush1.msra.mxu0 0.0
  %3429 = vmatprep.subr.mxu0 0.0
  %3430 = vmatpush1.msra.mxu0 0.0
  %3431 = vmatprep.subr.mxu0 0.0
  %3432 = vmatpush1.msra.mxu0 0.0
  %3433 = vmatprep.subr.mxu0 0.0
  %3434 = vmatpush1.msra.mxu0 0.0
  %3435 = vmatprep.subr.mxu0 0.0
  %3436 = vmatpush1.msra.mxu0 0.0
  %3437 = vmatprep.subr.mxu0 0.0
  %3438 = vmatpush1.msra.mxu0 0.0
  %3439 = vmatprep.subr.mxu0 0.0
  %3440 = vmatpush1.msra.mxu0 0.0
  %3441 = vmatprep.subr.mxu0 0.0
  %3442 = vmatpush1.msra.mxu0 0.0
  %3443 = vmatprep.subr.mxu0 0.0
  %3444 = vmatpush1.msra.mxu0 0.0
  %3445 = vmatprep.subr.mxu0 0.0
  %3446 = vmatpush1.msra.mxu0 0.0
  %3447 = vmatprep.subr.mxu0 0.0
  %3448 = vmatpush1.msra.mxu0 0.0
  %3449 = vmatprep.subr.mxu0 0.0
  %3450 = vmatpush1.msra.mxu0 0.0
  %3451 = vmatprep.mubr.f32.mxu0 0.0
  %3452 = vmatmul.mubr.f32.gmra.mrb[0].mxu0 %v3376
  %v3453 = vpop.f32.mrb[0].mxu0
  %v3454 = vadd.f32 0.0, %v3453
  %v3455 = vpop.f32.mrb[0].mxu0
  %3456 = vmatprep.mubr.f32.mxu0 0.0
  %3457 = vmatmul.mubr.f32.gmra.mrb[0].mxu0 %v3379
  %v3458 = vpop.f32.mrb[0].mxu0
  %v3459 = vadd.f32 0.0, %v3458
  %v3460 = vpop.f32.mrb[0].mxu0
  %3461 = vmatprep.mubr.f32.mxu0 0.0
  %3462 = vmatmul.mubr.f32.gmra.mrb[0].mxu0 %v3382
  %v3463 = vpop.f32.mrb[0].mxu0
  %v3464 = vadd.f32 0.0, %v3463
  %v3465 = vpop.f32.mrb[0].mxu0
  %3466 = vmatprep.mubr.f32.mxu0 0.0
  %3467 = vmatmul.mubr.f32.gmra.mrb[0].mxu0 %v3385
  %v3468 = vpop.f32.mrb[0].mxu0
  %v3469 = vadd.f32 0.0, %v3468
  %v3470 = vpop.f32.mrb[0].mxu0
  %3471 = vdwg.mxu0
  %v3472 = vadd.f32 %v3263, %v3454
  %v3473 = vadd.f32 %v3268, %v3459
  %v3474 = vadd.f32 %v3273, %v3464
  %v3475 = vadd.f32 %v3278, %v3469
  %v3476 = vld [vmem:[%s16] sm:$0x1]
  %v3478 = vlaneseq
  %v3479 = vshrl.u32 %v3478, 7
  %v3480 = vsub.s32 0, %v3479
  %v3481 = vrot.slane %v3476, %v3480
  %v3483 = vadd.f32 %v3472, %v3481
  %v3484 = vadd.f32 %v3473, %v3481
  %v3485 = vadd.f32 %v3474, %v3481
  %v3486 = vadd.f32 %v3475, %v3481
  %3487 = vst.msk [vmem:[%s17] sm:$0xff] %vm243, %v3483
  %3488 = vst.msk [vmem:[%s17 + $0x8] sm:$0xff] %vm243, %v3484
  %3489 = vst.msk [vmem:[%s17 + $0x10] sm:$0xff] %vm243, %v3485
  %3490 = vst.msk [vmem:[%s17 + $0x18] sm:$0xff] %vm243, %v3486
  // Predicated region
  $region70: #{multiscale_decoder_forward.1} parent=0 // pred_check
    _
  $region71: #{multiscale_decoder_forward.1} parent=0 // pred_check_branch
    %3492 = sbr.rel (0) target = $region73
  $region72: #{multiscale_decoder_forward.1} parent=0 // pred_region
    _
  $region73: #{multiscale_decoder_forward.1} parent=0 // pred_fallthru
    _
  // Predicated region
  $region74: #{multiscale_decoder_forward.1} parent=0 // pred_check
    _
  $region75: #{multiscale_decoder_forward.1} parent=0 // pred_check_branch
    %3494 = sbr.rel (0) target = $region77
  $region76: #{multiscale_decoder_forward.1} parent=0 // pred_region
    _
  $region77: #{multiscale_decoder_forward.1} parent=0 // pred_fallthru
    _

</llo_original>
